<compile_context>
chip_gen: v7x
topology: tpu7x:2x2x1
jax: 0.10.0
libtpu: 0.0.40
codegen_flags: <defaults>
</compile_context>

<pallas_src>
import jax
import jax.numpy as jnp
from jax.experimental import pallas as pl
from jax.experimental.pallas import tpu as pltpu


def policy_gradient_kernel(x_ref, w1_ref, b1_ref, w2_ref, b2_ref, o_ref, acc_ref):
    k = pl.program_id(1)

    @pl.when(k == 0)
    def _():
        acc_ref[...] = jnp.zeros_like(acc_ref)

    # Partial hidden-layer matmul for this K tile:
    # (tb, tk) bf16 @ (tk, H) bf16 -> f32 accumulation on the MXU.
    acc_ref[...] += jnp.dot(x_ref[...], w1_ref[...],
                            preferred_element_type=jnp.float32)

    @pl.when(k == pl.num_programs(1) - 1)
    def _():
        # Bias + ReLU on the finished f32 accumulator.
        h = jnp.maximum(acc_ref[...] + b1_ref[...], 0.0)
        # Output layer: (tb, H) @ (H, 3) -> (tb, 3), f32.
        logits = jnp.dot(h, w2_ref[...], preferred_element_type=jnp.float32)
        logits = logits + b2_ref[...]
        # Numerically-stable softmax over the last axis.
        m = jnp.max(logits, axis=-1, keepdims=True)
        e = jnp.exp(logits - m)
        denom = jnp.sum(e, axis=-1, keepdims=True)
        o_ref[...] = (e / denom).astype(o_ref.dtype)


def policy_gradient_forward(x, w1, b1, w2, b2, *, tb=128, tk=3200):
    """x: (B, K) bf16; w1: (K, H) bf16; b1: (1, H) f32; w2: (H, 3) f32; b2: (1, 3) f32."""
    B, K = x.shape
    H = w1.shape[1]
    OUT = w2.shape[1]
    tb = min(tb, B)
    tk = min(tk, K)
    assert B % tb == 0 and K % tk == 0, "tile sizes must divide (B, K)"

    grid = (B // tb, K // tk)
    return pl.pallas_call(
        policy_gradient_kernel,
        out_shape=jax.ShapeDtypeStruct((B, OUT), jnp.float32),
        grid_spec=pltpu.PrefetchScalarGridSpec(
            num_scalar_prefetch=0,
            grid=grid,
            in_specs=[
                pl.BlockSpec((tb, tk), lambda i, k: (i, k)),   # x tile
                pl.BlockSpec((tk, H), lambda i, k: (k, 0)),    # W1 tile
                pl.BlockSpec((1, H), lambda i, k: (0, 0)),     # b1 (resident)
                pl.BlockSpec((H, OUT), lambda i, k: (0, 0)),   # W2 (resident)
                pl.BlockSpec((1, OUT), lambda i, k: (0, 0)),   # b2 (resident)
            ],
            out_specs=pl.BlockSpec((tb, OUT), lambda i, k: (i, 0)),
            scratch_shapes=[pltpu.VMEM((tb, H), jnp.float32)],  # f32 hidden acc
        ),
        compiler_params=pltpu.CompilerParams(
            dimension_semantics=("parallel", "arbitrary")),
    )(x, w1, b1, w2, b2)


def init_params(key, in_dim, hidden_dim=200, out_dim=3):
    """Matches PyTorch init: weight ~ N(0, sqrt(2/in_features)), bias = 0.

    PyTorch weight shape is (out, in); we store the transpose (in, out).
    W1 is stored in bf16 (dominant HBM transfer); the small W2/biases stay f32.
    """
    k1, k2 = jax.random.split(key)
    w1 = (jax.random.normal(k1, (in_dim, hidden_dim), jnp.float32)
          * jnp.sqrt(2.0 / in_dim)).astype(jnp.bfloat16)
    b1 = jnp.zeros((1, hidden_dim), jnp.float32)
    w2 = (jax.random.normal(k2, (hidden_dim, out_dim), jnp.float32)
          * jnp.sqrt(2.0 / hidden_dim))
    b2 = jnp.zeros((1, out_dim), jnp.float32)
    return w1, b1, w2, b2


if __name__ == "__main__":
    # Shapes consistent with the module: in_dim=6400 (80*80 flattened Pong
    # frame), hidden=200, out=3. Batch raised to 256 so weight DMA is
    # amortized and (on v7x) the two B-blocks shard across both TensorCores.
    B, IN_DIM, HID, OUT = 256, 80 * 80, 200, 3

    key = jax.random.PRNGKey(0)
    kx, kp = jax.random.split(key)
    x = jax.random.normal(kx, (B, IN_DIM), jnp.float32).astype(jnp.bfloat16)
    w1, b1, w2, b2 = init_params(kp, IN_DIM, HID, OUT)

    out = policy_gradient_forward(x, w1, b1, w2, b2)
    out = jax.block_until_ready(out)

    # Pure-JAX reference (same math, bf16 inputs widened to f32).
    x_f32 = x.astype(jnp.float32)
    w1_f32 = w1.astype(jnp.float32)
    h_ref = jnp.maximum(x_f32 @ w1_f32 + b1, 0.0)
    logits_ref = h_ref @ w2 + b2
    ref = jax.nn.softmax(logits_ref, axis=-1)

    assert out.shape == (B, OUT)
    assert jnp.allclose(out, ref, atol=1e-2, rtol=1e-2)
    assert jnp.allclose(jnp.sum(out, axis=-1), 1.0, atol=1e-5)

    print("KERNEL_OK")
</pallas_src>

<mosaic_0001>
module attributes {stable_mosaic.version = 11 : i64} {
  func.func @policy_gradient_kernel(%arg0: i32, %arg1: i32, %arg2: memref<128x3200xbf16, #tpu.memory_space<vmem>>, %arg3: memref<3200x200xbf16, #tpu.memory_space<vmem>>, %arg4: memref<1x200xf32, #tpu.memory_space<vmem>>, %arg5: memref<200x3xf32, #tpu.memory_space<vmem>>, %arg6: memref<1x3xf32, #tpu.memory_space<vmem>>, %arg7: memref<128x3xf32, #tpu.memory_space<vmem>>, %arg8: memref<128x200xf32, #tpu.memory_space<vmem>>) attributes {dimension_semantics = [#tpu.dimension_semantics<parallel>, #tpu.dimension_semantics<arbitrary>], iteration_bounds = array<i64: 2, 2>, scalar_prefetch = 0 : i64, scratch_operands = 1 : i64, tpu.core_type = #tpu.core_type<tc>, window_params = [{transform_indices = @transform_0, window_bounds = array<i64: 128, 3200>}, {transform_indices = @transform_1, window_bounds = array<i64: 3200, 200>}, {pipeline_mode = #tpu.pipeline_mode<synchronous>, transform_indices = @transform_2, window_bounds = array<i64: 1, 200>}, {pipeline_mode = #tpu.pipeline_mode<synchronous>, transform_indices = @transform_3, window_bounds = array<i64: 200, 3>}, {pipeline_mode = #tpu.pipeline_mode<synchronous>, transform_indices = @transform_4, window_bounds = array<i64: 1, 3>}, {transform_indices = @transform_5, window_bounds = array<i64: 128, 3>}]} {
    %c0_i32 = arith.constant 0 : i32
    %0 = arith.cmpi eq, %arg1, %c0_i32 : i32
    %1 = arith.extui %0 : i1 to i32
    %c0_i32_0 = arith.constant 0 : i32
    %2 = arith.cmpi ne, %1, %c0_i32_0 : i32
    scf.if %2 {
      %cst_9 = arith.constant 0.000000e+00 : f32
      %12 = vector.broadcast %cst_9 : f32 to vector<128x200xf32>
      %c0_10 = arith.constant 0 : index
      %c0_11 = arith.constant 0 : index
      %13 = vector.load %arg8[%c0_10, %c0_11] : memref<128x200xf32, #tpu.memory_space<vmem>>, vector<128x200xf32>
      tpu.vector_store %arg8[%c0_10, %c0_11], %12 {strides = array<i32>} : memref<128x200xf32, #tpu.memory_space<vmem>>, vector<128x200xf32>,
    } else {
    }
    %c0 = arith.constant 0 : index
    %c0_1 = arith.constant 0 : index
    %3 = vector.load %arg8[%c0, %c0_1] : memref<128x200xf32, #tpu.memory_space<vmem>>, vector<128x200xf32>
    %c0_2 = arith.constant 0 : index
    %c0_3 = arith.constant 0 : index
    %4 = vector.load %arg2[%c0_2, %c0_3] : memref<128x3200xbf16, #tpu.memory_space<vmem>>, vector<128x3200xbf16>
    %c0_4 = arith.constant 0 : index
    %c0_5 = arith.constant 0 : index
    %5 = vector.load %arg3[%c0_4, %c0_5] : memref<3200x200xbf16, #tpu.memory_space<vmem>>, vector<3200x200xbf16>
    %cst = arith.constant dense<0.000000e+00> : vector<128x200xf32>
    %6 = tpu.matmul %4, %5, %cst {dimension_numbers = #tpu.dot_dimension_numbers<[1], [0], [0], [1], [0, 0, 1, 1], [], []>} : vector<128x3200xbf16>, vector<3200x200xbf16>, vector<128x200xf32> -> vector<128x200xf32>
    %7 = arith.addf %3, %6 : vector<128x200xf32>
    %c0_6 = arith.constant 0 : index
    %c0_7 = arith.constant 0 : index
    %8 = vector.load %arg8[%c0_6, %c0_7] : memref<128x200xf32, #tpu.memory_space<vmem>>, vector<128x200xf32>
    tpu.vector_store %arg8[%c0_6, %c0_7], %7 {strides = array<i32>} : memref<128x200xf32, #tpu.memory_space<vmem>>, vector<128x200xf32>,
    %c1_i32 = arith.constant 1 : i32
    %9 = arith.cmpi eq, %arg1, %c1_i32 : i32
    %10 = arith.extui %9 : i1 to i32
    %c0_i32_8 = arith.constant 0 : i32
    %11 = arith.cmpi ne, %10, %c0_i32_8 : i32
    scf.if %11 {
      %c0_9 = arith.constant 0 : index
      %c0_10 = arith.constant 0 : index
      %12 = vector.load %arg8[%c0_9, %c0_10] : memref<128x200xf32, #tpu.memory_space<vmem>>, vector<128x200xf32>
      %c0_11 = arith.constant 0 : index
      %c0_12 = arith.constant 0 : index
      %13 = vector.load %arg4[%c0_11, %c0_12] : memref<1x200xf32, #tpu.memory_space<vmem>>, vector<1x200xf32>
      %14 = vector.broadcast %13 : vector<1x200xf32> to vector<128x200xf32>
      %15 = arith.addf %12, %14 : vector<128x200xf32>
      %cst_13 = arith.constant 0.000000e+00 : f32
      %16 = vector.broadcast %cst_13 : f32 to vector<128x200xf32>
      %17 = arith.maximumf %15, %16 : vector<128x200xf32>
      %c0_14 = arith.constant 0 : index
      %c0_15 = arith.constant 0 : index
      %18 = vector.load %arg5[%c0_14, %c0_15] : memref<200x3xf32, #tpu.memory_space<vmem>>, vector<200x3xf32>
      %cst_16 = arith.constant dense<0.000000e+00> : vector<128x3xf32>
      %19 = tpu.matmul %17, %18, %cst_16 {dimension_numbers = #tpu.dot_dimension_numbers<[1], [0], [0], [1], [0, 0, 1, 1], [], []>} : vector<128x200xf32>, vector<200x3xf32>, vector<128x3xf32> -> vector<128x3xf32>
      %c0_17 = arith.constant 0 : index
      %c0_18 = arith.constant 0 : index
      %20 = vector.load %arg6[%c0_17, %c0_18] : memref<1x3xf32, #tpu.memory_space<vmem>>, vector<1x3xf32>
      %21 = vector.broadcast %20 : vector<1x3xf32> to vector<128x3xf32>
      %22 = arith.addf %19, %21 : vector<128x3xf32>
      %cst_19 = arith.constant dense<0xFF800000> : vector<128xf32>
      %23 = vector.multi_reduction <maximumf>, %22, %cst_19 [1] : vector<128x3xf32> to vector<128xf32>
      %24 = vector.shape_cast %23 : vector<128xf32> to vector<128x1xf32>
      %25 = vector.broadcast %24 : vector<128x1xf32> to vector<128x3xf32>
      %26 = arith.subf %22, %25 : vector<128x3xf32>
      %27 = math.exp %26 : vector<128x3xf32>
      %cst_20 = arith.constant dense<0.000000e+00> : vector<128xf32>
      %28 = vector.multi_reduction <add>, %27, %cst_20 [1] : vector<128x3xf32> to vector<128xf32>
      %29 = vector.shape_cast %28 : vector<128xf32> to vector<128x1xf32>
      %30 = vector.broadcast %29 : vector<128x1xf32> to vector<128x3xf32>
      %31 = arith.divf %27, %30 : vector<128x3xf32>
      %c0_21 = arith.constant 0 : index
      %c0_22 = arith.constant 0 : index
      %32 = vector.load %arg7[%c0_21, %c0_22] : memref<128x3xf32, #tpu.memory_space<vmem>>, vector<128x3xf32>
      tpu.vector_store %arg7[%c0_21, %c0_22], %31 {strides = array<i32>} : memref<128x3xf32, #tpu.memory_space<vmem>>, vector<128x3xf32>,
    } else {
    }
    return
  }
  func.func @transform_0(%arg0: i32, %arg1: i32) -> (i32, i32) {
    %c0_i32 = arith.constant 0 : i32
    return %arg0, %arg1 : i32, i32
  }
  func.func @transform_1(%arg0: i32, %arg1: i32) -> (i32, i32) {
    %c0_i32 = arith.constant 0 : i32
    %c0_i32_0 = arith.constant 0 : i32
    return %arg1, %c0_i32 : i32, i32
  }
  func.func @transform_2(%arg0: i32, %arg1: i32) -> (i32, i32) {
    %c0_i32 = arith.constant 0 : i32
    %c0_i32_0 = arith.constant 0 : i32
    %c0_i32_1 = arith.constant 0 : i32
    return %c0_i32, %c0_i32_0 : i32, i32
  }
  func.func @transform_3(%arg0: i32, %arg1: i32) -> (i32, i32) {
    %c0_i32 = arith.constant 0 : i32
    %c0_i32_0 = arith.constant 0 : i32
    %c0_i32_1 = arith.constant 0 : i32
    return %c0_i32, %c0_i32_0 : i32, i32
  }
  func.func @transform_4(%arg0: i32, %arg1: i32) -> (i32, i32) {
    %c0_i32 = arith.constant 0 : i32
    %c0_i32_0 = arith.constant 0 : i32
    %c0_i32_1 = arith.constant 0 : i32
    return %c0_i32, %c0_i32_0 : i32, i32
  }
  func.func @transform_5(%arg0: i32, %arg1: i32) -> (i32, i32) {
    %c0_i32 = arith.constant 0 : i32
    %c0_i32_0 = arith.constant 0 : i32
    return %arg0, %c0_i32 : i32, i32
  }
}

</mosaic_0001>

<llo_original>
// kernel: tpu_custom_call.1
$region0: #{tpu_custom_call.1}
  #allocation0 [shape = 'u32[]', space=smem, size = 0x4, offset = 0x4, fixed_abs, tag = 'smem constant byte address 0x4 - core index']
  #allocation1 [shape = 'u32[144,128]{1,0:T(1,128)}', space=vmem, size = 0x12000, scoped, tag = 'internal scratch']
  #allocation2 [shape = 'f32[128,200]{1,0:T(8,128)}', space=vmem, size = 0x20000, scoped, tag = 'scratch operand']
  %s0 = inlined_call_operand.vmem [shape: bf16[256,6400], index: 0, kind: input, shape index: {}]
  %s1 = inlined_call_operand.vmem [shape: bf16[6400,200], index: 1, kind: input, shape index: {}]
  %s2 = inlined_call_operand.vmem [shape: f32[1,200], index: 2, kind: input, shape index: {}]
  %s3 = inlined_call_operand.vmem [shape: f32[200,3], index: 3, kind: input, shape index: {}]
  %s4 = inlined_call_operand.vmem [shape: f32[1,3], index: 4, kind: input, shape index: {}]
  %s5 = inlined_call_operand.vmem [shape: f32[256,3], index: 5, kind: output, shape index: {}]
  %s6 = sld [smem:[#allocation0]]
  $region87: #{tpu_custom_call.1} parent=0
    _
  %s8 = ssub.s32 1, %s6
  %s9 = scalar_select 0, %s8, %s6
  $region1: #{tpu_custom_call.1} parent=0
    #allocation3 [shape = 'u8[1638400]{0}', space=vmem, size = 0x190000, scoped, tag = 'input window, operand 0']
    loop: start=0, step=1, limit=6
    $region2: #{tpu_custom_call.1} parent=1 // loop_pre_header
      _
    $region3: #{tpu_custom_call.1} parent=1 // loop_header
      %s11 = sphi 0, %s15
      %p12 = scmp.ge.s32.totalorder %s11, 6
      %s18 = sphi 0, %s30
      %s19 = sphi 0, %s26
      %s20 = sphi 0, %s18
      %s21 = sphi 0, %s19
      %s22 = sphi 0, %s20
      %s23 = sphi 0, %s21
      %s35 = sphi 0, %s37
      %s38 = sphi 0, %s35
      %s39 = sphi 0, %s38
      %s55 = sphi 0, %s39
      %s61 = sphi 0, %s63
      %s64 = sphi 0, %s61
      %s65 = sphi 0, %s64
      %s81 = sphi 0, %s65
      %s85 = sphi 0, %s85
      %s87 = sphi 0, %s85
      %s88 = sphi 0, %s87
      %s102 = sphi 0, %s88
      %s106 = sphi 0, %s106
      %s108 = sphi 0, %s106
      %s109 = sphi 0, %s108
      %s123 = sphi 0, %s109
      %s127 = sphi 0, %s127
      %s129 = sphi 0, %s127
      %s130 = sphi 0, %s129
      %s144 = sphi 0, %s130
      %s150 = sphi 0, %s152
      %s153 = sphi 0, %s150
      %s154 = sphi 0, %s153
      %s170 = sphi 0, %s154
    $region4: #{tpu_custom_call.1} parent=1 // loop_header_branch
      %14 = sbr.rel (%p12) target = $region8
    $region5: #{tpu_custom_call.1} parent=1 // loop_body
      %s16 = ssub.s32 %s11, 1
      %s17 = ssub.s32 %s11, 2
      %s24 = sadd.s32 1, %s19
      %p25 = scmp.ge.s32.totalorder %s24, 2
      %s26 = scalar_select %p25, 0, %s24
      %s27 = sadd.s32 1, %s18
      %s28 = scalar_select %p25, %s27, %s18
      %p29 = scmp.ge.s32.totalorder %s28, 2
      %s30 = scalar_select %p29, 0, %s28
      %s31 = ssub.s32 %s18, %s30
      %s32 = ssub.s32 %s19, %s26
      %s33 = sor.u32 %s31, %s32
      %p34 = scmp.eq.s32.totalorder %s33, 0
      %s36 = sadd.s32 %s35, 1
      %s37 = scalar_select %p34, %s35, %s36
      %p40 = pneg %p34
      %p41 = scmp.eq.s32.totalorder %s11, 3
      %p42 = por %p40, %p41
      %p43 = scmp.ne.s32.totalorder %s35, %s38
      %p44 = scmp.eq.s32.totalorder %s11, 0
      %p45 = por %p43, %p44
      %p46 = scmp.ne.s32.totalorder %s35, %s38
      %p47 = scmp.eq.s32.totalorder %s16, 3
      %p48 = por %p46, %p47
      %p49 = scmp.ne.s32.totalorder %s38, %s39
      %p50 = scmp.eq.s32.totalorder %s16, 0
      %p51 = por %p49, %p50
      %p52 = scmp.ne.s32.totalorder %s38, %s39
      %p53 = scmp.eq.s32.totalorder %s17, 3
      %p54 = por %p52, %p53
      %p56 = scmp.ne.s32.totalorder %s39, %s55
      %p57 = scmp.eq.s32.totalorder %s17, 0
      %p58 = por %p56, %p57
      %s59 = ssub.s32 %s19, %s26
      %p60 = scmp.eq.s32.totalorder %s59, 0
      %s62 = sadd.s32 %s61, 1
      %s63 = scalar_select %p60, %s61, %s62
      %p66 = pneg %p60
      %p67 = scmp.eq.s32.totalorder %s11, 3
      %p68 = por %p66, %p67
      %p69 = scmp.ne.s32.totalorder %s61, %s64
      %p70 = scmp.eq.s32.totalorder %s11, 0
      %p71 = por %p69, %p70
      %p72 = scmp.ne.s32.totalorder %s61, %s64
      %p73 = scmp.eq.s32.totalorder %s16, 3
      %p74 = por %p72, %p73
      %p75 = scmp.ne.s32.totalorder %s64, %s65
      %p76 = scmp.eq.s32.totalorder %s16, 0
      %p77 = por %p75, %p76
      %p78 = scmp.ne.s32.totalorder %s64, %s65
      %p79 = scmp.eq.s32.totalorder %s17, 3
      %p80 = por %p78, %p79
      %p82 = scmp.ne.s32.totalorder %s65, %s81
      %p83 = scmp.eq.s32.totalorder %s17, 0
      %p84 = por %p82, %p83
      %s86 = sadd.s32 %s85, 1
      %p89 = scmp.eq.s32.totalorder %s11, 3
      %p90 = scmp.ne.s32.totalorder %s85, %s87
      %p91 = scmp.eq.s32.totalorder %s11, 0
      %p92 = por %p90, %p91
      %p93 = scmp.ne.s32.totalorder %s85, %s87
      %p94 = scmp.eq.s32.totalorder %s16, 3
      %p95 = por %p93, %p94
      %p96 = scmp.ne.s32.totalorder %s87, %s88
      %p97 = scmp.eq.s32.totalorder %s16, 0
      %p98 = por %p96, %p97
      %p99 = scmp.ne.s32.totalorder %s87, %s88
      %p100 = scmp.eq.s32.totalorder %s17, 3
      %p101 = por %p99, %p100
      %p103 = scmp.ne.s32.totalorder %s88, %s102
      %p104 = scmp.eq.s32.totalorder %s17, 0
      %p105 = por %p103, %p104
      %s107 = sadd.s32 %s106, 1
      %p110 = scmp.eq.s32.totalorder %s11, 3
      %p111 = scmp.ne.s32.totalorder %s106, %s108
      %p112 = scmp.eq.s32.totalorder %s11, 0
      %p113 = por %p111, %p112
      %p114 = scmp.ne.s32.totalorder %s106, %s108
      %p115 = scmp.eq.s32.totalorder %s16, 3
      %p116 = por %p114, %p115
      %p117 = scmp.ne.s32.totalorder %s108, %s109
      %p118 = scmp.eq.s32.totalorder %s16, 0
      %p119 = por %p117, %p118
      %p120 = scmp.ne.s32.totalorder %s108, %s109
      %p121 = scmp.eq.s32.totalorder %s17, 3
      %p122 = por %p120, %p121
      %p124 = scmp.ne.s32.totalorder %s109, %s123
      %p125 = scmp.eq.s32.totalorder %s17, 0
      %p126 = por %p124, %p125
      %s128 = sadd.s32 %s127, 1
      %p131 = scmp.eq.s32.totalorder %s11, 3
      %p132 = scmp.ne.s32.totalorder %s127, %s129
      %p133 = scmp.eq.s32.totalorder %s11, 0
      %p134 = por %p132, %p133
      %p135 = scmp.ne.s32.totalorder %s127, %s129
      %p136 = scmp.eq.s32.totalorder %s16, 3
      %p137 = por %p135, %p136
      %p138 = scmp.ne.s32.totalorder %s129, %s130
      %p139 = scmp.eq.s32.totalorder %s16, 0
      %p140 = por %p138, %p139
      %p141 = scmp.ne.s32.totalorder %s129, %s130
      %p142 = scmp.eq.s32.totalorder %s17, 3
      %p143 = por %p141, %p142
      %p145 = scmp.ne.s32.totalorder %s130, %s144
      %p146 = scmp.eq.s32.totalorder %s17, 0
      %p147 = por %p145, %p146
      %s148 = ssub.s32 %s18, %s30
      %p149 = scmp.eq.s32.totalorder %s148, 0
      %s151 = sadd.s32 %s150, 1
      %s152 = scalar_select %p149, %s150, %s151
      %p155 = pneg %p149
      %p156 = scmp.eq.s32.totalorder %s11, 3
      %p157 = por %p155, %p156
      %p158 = scmp.ne.s32.totalorder %s150, %s153
      %p159 = scmp.eq.s32.totalorder %s11, 0
      %p160 = por %p158, %p159
      %p161 = scmp.ne.s32.totalorder %s150, %s153
      %p162 = scmp.eq.s32.totalorder %s16, 3
      %p163 = por %p161, %p162
      %p164 = scmp.ne.s32.totalorder %s153, %s154
      %p165 = scmp.eq.s32.totalorder %s16, 0
      %p166 = por %p164, %p165
      %p167 = scmp.ne.s32.totalorder %s153, %s154
      %p168 = scmp.eq.s32.totalorder %s17, 3
      %p169 = por %p167, %p168
      %p171 = scmp.ne.s32.totalorder %s154, %s170
      %p172 = scmp.eq.s32.totalorder %s17, 0
      %p173 = por %p171, %p172
      %p174 = scmp.le.s32.totalorder 1, %s11
      %p175 = scmp.lt.s32.totalorder %s11, 5
      %p176 = pnand %p174, %p175
      %p177 = pneg %p176
      // Predicated region
      $region9: #{tpu_custom_call.1} parent=5 // pred_check
        _
      $region10: #{tpu_custom_call.1} parent=5 // pred_check_branch
        %179 = sbr.rel (%p176) target = $region12
      $region11: #{tpu_custom_call.1} parent=5 // pred_region
        %s180 = ssub.s32 %s11, 1
        // Predicated region
        $region13: #{tpu_custom_call.1} parent=11 // pred_check
          %p181 = pneg %p98
        $region14: #{tpu_custom_call.1} parent=11 // pred_check_branch
          %183 = sbr.rel (%p181) target = $region16
        $region15: #{tpu_custom_call.1} parent=11 // pred_region
          _
        $region16: #{tpu_custom_call.1} parent=11 // pred_fallthru
          _
        // Predicated region
        $region17: #{tpu_custom_call.1} parent=11 // pred_check
          %p184 = pneg %p119
        $region18: #{tpu_custom_call.1} parent=11 // pred_check_branch
          %186 = sbr.rel (%p184) target = $region20
        $region19: #{tpu_custom_call.1} parent=11 // pred_region
          _
        $region20: #{tpu_custom_call.1} parent=11 // pred_fallthru
          _
        // Predicated region
        $region21: #{tpu_custom_call.1} parent=11 // pred_check
          %p187 = pneg %p140
        $region22: #{tpu_custom_call.1} parent=11 // pred_check_branch
          %189 = sbr.rel (%p187) target = $region24
        $region23: #{tpu_custom_call.1} parent=11 // pred_region
          _
        $region24: #{tpu_custom_call.1} parent=11 // pred_fallthru
          _
      $region12: #{tpu_custom_call.1} parent=5 // pred_fallthru
        _
      %p190 = scmp.lt.s32.totalorder %s11, 4
      // Predicated region
      $region25: #{tpu_custom_call.1} parent=5 // pred_check
        %p191 = pneg %p190
      $region26: #{tpu_custom_call.1} parent=5 // pred_check_branch
        %193 = sbr.rel (%p191) target = $region28
      $region27: #{tpu_custom_call.1} parent=5 // pred_region
        // Predicated region
        $region29: #{tpu_custom_call.1} parent=27 // pred_check
          %p194 = pneg %p45
        $region30: #{tpu_custom_call.1} parent=27 // pred_check_branch
          %196 = sbr.rel (%p194) target = $region32
        $region31: #{tpu_custom_call.1} parent=27 // pred_region
          %s197 = sand.u32 %s35, 1
          %s198 = sand.u32 %s35, 1
          %s199 = smul.addr %s198, 1600
          %s200 = scalar_lea.vmem [#allocation3], %s199
          %s201 = smul.u32 16, %s18
          %s202 = smul.u32 25, %s19
          %s203 = smul.addr %s201, 50
          %s204 = sadd.s32 %s202, %s203
          %s205 = smul.addr %s204, 4
          %s206 = scalar_lea.vmem %s0, %s205
          // Predicated region
          $region33: #{tpu_custom_call.1} parent=31 // pred_check
            _
          $region34: #{tpu_custom_call.1} parent=31 // pred_check_branch
            %208 = sbr.rel (0) target = $region36
          $region35: #{tpu_custom_call.1} parent=31 // pred_region
            // Predicated region
            $region37: #{tpu_custom_call.1} parent=35 // pred_check
              _
            $region38: #{tpu_custom_call.1} parent=35 // pred_check_branch
              %210 = sbr.rel (0) target = $region40
            $region39: #{tpu_custom_call.1} parent=35 // pred_region
              %s211 = scalar_lea.vmem %s206, 96
              %s212 = scalar_lea.vmem %s200, 96 [#allocation3]
              loop: start=0, step=1, limit=1
              $region41: #{tpu_custom_call.1} parent=39 // loop_pre_header
                _
              $region42: #{tpu_custom_call.1} parent=39 // loop_header
                %s214 = sphi 0, %s218
                %p215 = scmp.ge.s32.totalorder %s214, 1
                %s219 = sphi %s206, %s206
                %s220 = sphi %s200, %s200
              $region43: #{tpu_custom_call.1} parent=39 // loop_header_branch
                %217 = sbr.rel (%p215) target = $region47
              $region44: #{tpu_custom_call.1} parent=39 // loop_body
                %v221 = vld [vmem:[%s219] sm:$0xff]
                %222 = vst [vmem:[%s220] sm:$0xff] %v221
                %v223 = vld [vmem:[%s219 + $0x8] sm:$0xff]
                %224 = vst [vmem:[%s220 + $0x8] sm:$0xff] %v223
                %v225 = vld [vmem:[%s219 + $0x10] sm:$0xff]
                %226 = vst [vmem:[%s220 + $0x10] sm:$0xff] %v225
                %v227 = vld [vmem:[%s219 + $0x18] sm:$0xff]
                %228 = vst [vmem:[%s220 + $0x18] sm:$0xff] %v227
                %v229 = vld [vmem:[%s219 + $0x20] sm:$0xff]
                %230 = vst [vmem:[%s220 + $0x20] sm:$0xff] %v229
                %v231 = vld [vmem:[%s219 + $0x28] sm:$0xff]
                %232 = vst [vmem:[%s220 + $0x28] sm:$0xff] %v231
                %v233 = vld [vmem:[%s219 + $0x30] sm:$0xff]
                %234 = vst [vmem:[%s220 + $0x30] sm:$0xff] %v233
                %v235 = vld [vmem:[%s219 + $0x38] sm:$0xff]
                %236 = vst [vmem:[%s220 + $0x38] sm:$0xff] %v235
                %v237 = vld [vmem:[%s219 + $0x40] sm:$0xff]
                %238 = vst [vmem:[%s220 + $0x40] sm:$0xff] %v237
                %v239 = vld [vmem:[%s219 + $0x48] sm:$0xff]
                %240 = vst [vmem:[%s220 + $0x48] sm:$0xff] %v239
                %v241 = vld [vmem:[%s219 + $0x50] sm:$0xff]
                %242 = vst [vmem:[%s220 + $0x50] sm:$0xff] %v241
                %v243 = vld [vmem:[%s219 + $0x58] sm:$0xff]
                %244 = vst [vmem:[%s220 + $0x58] sm:$0xff] %v243
                %v245 = vld [vmem:[%s219 + $0xc8] sm:$0xff]
                %246 = vst [vmem:[%s220 + $0x64] sm:$0xff] %v245
                %v247 = vld [vmem:[%s219 + $0xd0] sm:$0xff]
                %248 = vst [vmem:[%s220 + $0x6c] sm:$0xff] %v247
                %v249 = vld [vmem:[%s219 + $0xd8] sm:$0xff]
                %250 = vst [vmem:[%s220 + $0x74] sm:$0xff] %v249
                %v251 = vld [vmem:[%s219 + $0xe0] sm:$0xff]
                %252 = vst [vmem:[%s220 + $0x7c] sm:$0xff] %v251
                %v253 = vld [vmem:[%s219 + $0xe8] sm:$0xff]
                %254 = vst [vmem:[%s220 + $0x84] sm:$0xff] %v253
                %v255 = vld [vmem:[%s219 + $0xf0] sm:$0xff]
                %256 = vst [vmem:[%s220 + $0x8c] sm:$0xff] %v255
                %v257 = vld [vmem:[%s219 + $0xf8] sm:$0xff]
                %258 = vst [vmem:[%s220 + $0x94] sm:$0xff] %v257
                %v259 = vld [vmem:[%s219 + $0x100] sm:$0xff]
                %260 = vst [vmem:[%s220 + $0x9c] sm:$0xff] %v259
                %v261 = vld [vmem:[%s219 + $0x108] sm:$0xff]
                %262 = vst [vmem:[%s220 + $0xa4] sm:$0xff] %v261
                %v263 = vld [vmem:[%s219 + $0x110] sm:$0xff]
                %264 = vst [vmem:[%s220 + $0xac] sm:$0xff] %v263
                %v265 = vld [vmem:[%s219 + $0x118] sm:$0xff]
                %266 = vst [vmem:[%s220 + $0xb4] sm:$0xff] %v265
                %v267 = vld [vmem:[%s219 + $0x120] sm:$0xff]
                %268 = vst [vmem:[%s220 + $0xbc] sm:$0xff] %v267
                %v269 = vld [vmem:[%s219 + $0x190] sm:$0xff]
                %270 = vst [vmem:[%s220 + $0xc8] sm:$0xff] %v269
                %v271 = vld [vmem:[%s219 + $0x198] sm:$0xff]
                %272 = vst [vmem:[%s220 + $0xd0] sm:$0xff] %v271
                %v273 = vld [vmem:[%s219 + $0x1a0] sm:$0xff]
                %274 = vst [vmem:[%s220 + $0xd8] sm:$0xff] %v273
                %v275 = vld [vmem:[%s219 + $0x1a8] sm:$0xff]
                %276 = vst [vmem:[%s220 + $0xe0] sm:$0xff] %v275
                %v277 = vld [vmem:[%s219 + $0x1b0] sm:$0xff]
                %278 = vst [vmem:[%s220 + $0xe8] sm:$0xff] %v277
                %v279 = vld [vmem:[%s219 + $0x1b8] sm:$0xff]
                %280 = vst [vmem:[%s220 + $0xf0] sm:$0xff] %v279
                %v281 = vld [vmem:[%s219 + $0x1c0] sm:$0xff]
                %282 = vst [vmem:[%s220 + $0xf8] sm:$0xff] %v281
                %v283 = vld [vmem:[%s219 + $0x1c8] sm:$0xff]
                %284 = vst [vmem:[%s220 + $0x100] sm:$0xff] %v283
                %v285 = vld [vmem:[%s219 + $0x1d0] sm:$0xff]
                %286 = vst [vmem:[%s220 + $0x108] sm:$0xff] %v285
                %v287 = vld [vmem:[%s219 + $0x1d8] sm:$0xff]
                %288 = vst [vmem:[%s220 + $0x110] sm:$0xff] %v287
                %v289 = vld [vmem:[%s219 + $0x1e0] sm:$0xff]
                %290 = vst [vmem:[%s220 + $0x118] sm:$0xff] %v289
                %v291 = vld [vmem:[%s219 + $0x1e8] sm:$0xff]
                %292 = vst [vmem:[%s220 + $0x120] sm:$0xff] %v291
                %v293 = vld [vmem:[%s219 + $0x258] sm:$0xff]
                %294 = vst [vmem:[%s220 + $0x12c] sm:$0xff] %v293
                %v295 = vld [vmem:[%s219 + $0x260] sm:$0xff]
                %296 = vst [vmem:[%s220 + $0x134] sm:$0xff] %v295
                %v297 = vld [vmem:[%s219 + $0x268] sm:$0xff]
                %298 = vst [vmem:[%s220 + $0x13c] sm:$0xff] %v297
                %v299 = vld [vmem:[%s219 + $0x270] sm:$0xff]
                %300 = vst [vmem:[%s220 + $0x144] sm:$0xff] %v299
                %v301 = vld [vmem:[%s219 + $0x278] sm:$0xff]
                %302 = vst [vmem:[%s220 + $0x14c] sm:$0xff] %v301
                %v303 = vld [vmem:[%s219 + $0x280] sm:$0xff]
                %304 = vst [vmem:[%s220 + $0x154] sm:$0xff] %v303
                %v305 = vld [vmem:[%s219 + $0x288] sm:$0xff]
                %306 = vst [vmem:[%s220 + $0x15c] sm:$0xff] %v305
                %v307 = vld [vmem:[%s219 + $0x290] sm:$0xff]
                %308 = vst [vmem:[%s220 + $0x164] sm:$0xff] %v307
                %v309 = vld [vmem:[%s219 + $0x298] sm:$0xff]
                %310 = vst [vmem:[%s220 + $0x16c] sm:$0xff] %v309
                %v311 = vld [vmem:[%s219 + $0x2a0] sm:$0xff]
                %312 = vst [vmem:[%s220 + $0x174] sm:$0xff] %v311
                %v313 = vld [vmem:[%s219 + $0x2a8] sm:$0xff]
                %314 = vst [vmem:[%s220 + $0x17c] sm:$0xff] %v313
                %v315 = vld [vmem:[%s219 + $0x2b0] sm:$0xff]
                %316 = vst [vmem:[%s220 + $0x184] sm:$0xff] %v315
                %v317 = vld [vmem:[%s219 + $0x320] sm:$0xff]
                %318 = vst [vmem:[%s220 + $0x190] sm:$0xff] %v317
                %v319 = vld [vmem:[%s219 + $0x328] sm:$0xff]
                %320 = vst [vmem:[%s220 + $0x198] sm:$0xff] %v319
                %v321 = vld [vmem:[%s219 + $0x330] sm:$0xff]
                %322 = vst [vmem:[%s220 + $0x1a0] sm:$0xff] %v321
                %v323 = vld [vmem:[%s219 + $0x338] sm:$0xff]
                %324 = vst [vmem:[%s220 + $0x1a8] sm:$0xff] %v323
                %v325 = vld [vmem:[%s219 + $0x340] sm:$0xff]
                %326 = vst [vmem:[%s220 + $0x1b0] sm:$0xff] %v325
                %v327 = vld [vmem:[%s219 + $0x348] sm:$0xff]
                %328 = vst [vmem:[%s220 + $0x1b8] sm:$0xff] %v327
                %v329 = vld [vmem:[%s219 + $0x350] sm:$0xff]
                %330 = vst [vmem:[%s220 + $0x1c0] sm:$0xff] %v329
                %v331 = vld [vmem:[%s219 + $0x358] sm:$0xff]
                %332 = vst [vmem:[%s220 + $0x1c8] sm:$0xff] %v331
                %v333 = vld [vmem:[%s219 + $0x360] sm:$0xff]
                %334 = vst [vmem:[%s220 + $0x1d0] sm:$0xff] %v333
                %v335 = vld [vmem:[%s219 + $0x368] sm:$0xff]
                %336 = vst [vmem:[%s220 + $0x1d8] sm:$0xff] %v335
                %v337 = vld [vmem:[%s219 + $0x370] sm:$0xff]
                %338 = vst [vmem:[%s220 + $0x1e0] sm:$0xff] %v337
                %v339 = vld [vmem:[%s219 + $0x378] sm:$0xff]
                %340 = vst [vmem:[%s220 + $0x1e8] sm:$0xff] %v339
                %v341 = vld [vmem:[%s219 + $0x3e8] sm:$0xff]
                %342 = vst [vmem:[%s220 + $0x1f4] sm:$0xff] %v341
                %v343 = vld [vmem:[%s219 + $0x3f0] sm:$0xff]
                %344 = vst [vmem:[%s220 + $0x1fc] sm:$0xff] %v343
                %v345 = vld [vmem:[%s219 + $0x3f8] sm:$0xff]
                %346 = vst [vmem:[%s220 + $0x204] sm:$0xff] %v345
                %v347 = vld [vmem:[%s219 + $0x400] sm:$0xff]
                %348 = vst [vmem:[%s220 + $0x20c] sm:$0xff] %v347
                %v349 = vld [vmem:[%s219 + $0x408] sm:$0xff]
                %350 = vst [vmem:[%s220 + $0x214] sm:$0xff] %v349
                %v351 = vld [vmem:[%s219 + $0x410] sm:$0xff]
                %352 = vst [vmem:[%s220 + $0x21c] sm:$0xff] %v351
                %v353 = vld [vmem:[%s219 + $0x418] sm:$0xff]
                %354 = vst [vmem:[%s220 + $0x224] sm:$0xff] %v353
                %v355 = vld [vmem:[%s219 + $0x420] sm:$0xff]
                %356 = vst [vmem:[%s220 + $0x22c] sm:$0xff] %v355
                %v357 = vld [vmem:[%s219 + $0x428] sm:$0xff]
                %358 = vst [vmem:[%s220 + $0x234] sm:$0xff] %v357
                %v359 = vld [vmem:[%s219 + $0x430] sm:$0xff]
                %360 = vst [vmem:[%s220 + $0x23c] sm:$0xff] %v359
                %v361 = vld [vmem:[%s219 + $0x438] sm:$0xff]
                %362 = vst [vmem:[%s220 + $0x244] sm:$0xff] %v361
                %v363 = vld [vmem:[%s219 + $0x440] sm:$0xff]
                %364 = vst [vmem:[%s220 + $0x24c] sm:$0xff] %v363
                %v365 = vld [vmem:[%s219 + $0x4b0] sm:$0xff]
                %366 = vst [vmem:[%s220 + $0x258] sm:$0xff] %v365
                %v367 = vld [vmem:[%s219 + $0x4b8] sm:$0xff]
                %368 = vst [vmem:[%s220 + $0x260] sm:$0xff] %v367
                %v369 = vld [vmem:[%s219 + $0x4c0] sm:$0xff]
                %370 = vst [vmem:[%s220 + $0x268] sm:$0xff] %v369
                %v371 = vld [vmem:[%s219 + $0x4c8] sm:$0xff]
                %372 = vst [vmem:[%s220 + $0x270] sm:$0xff] %v371
                %v373 = vld [vmem:[%s219 + $0x4d0] sm:$0xff]
                %374 = vst [vmem:[%s220 + $0x278] sm:$0xff] %v373
                %v375 = vld [vmem:[%s219 + $0x4d8] sm:$0xff]
                %376 = vst [vmem:[%s220 + $0x280] sm:$0xff] %v375
                %v377 = vld [vmem:[%s219 + $0x4e0] sm:$0xff]
                %378 = vst [vmem:[%s220 + $0x288] sm:$0xff] %v377
                %v379 = vld [vmem:[%s219 + $0x4e8] sm:$0xff]
                %380 = vst [vmem:[%s220 + $0x290] sm:$0xff] %v379
                %v381 = vld [vmem:[%s219 + $0x4f0] sm:$0xff]
                %382 = vst [vmem:[%s220 + $0x298] sm:$0xff] %v381
                %v383 = vld [vmem:[%s219 + $0x4f8] sm:$0xff]
                %384 = vst [vmem:[%s220 + $0x2a0] sm:$0xff] %v383
                %v385 = vld [vmem:[%s219 + $0x500] sm:$0xff]
                %386 = vst [vmem:[%s220 + $0x2a8] sm:$0xff] %v385
                %v387 = vld [vmem:[%s219 + $0x508] sm:$0xff]
                %388 = vst [vmem:[%s220 + $0x2b0] sm:$0xff] %v387
                %v389 = vld [vmem:[%s219 + $0x578] sm:$0xff]
                %390 = vst [vmem:[%s220 + $0x2bc] sm:$0xff] %v389
                %v391 = vld [vmem:[%s219 + $0x580] sm:$0xff]
                %392 = vst [vmem:[%s220 + $0x2c4] sm:$0xff] %v391
                %v393 = vld [vmem:[%s219 + $0x588] sm:$0xff]
                %394 = vst [vmem:[%s220 + $0x2cc] sm:$0xff] %v393
                %v395 = vld [vmem:[%s219 + $0x590] sm:$0xff]
                %396 = vst [vmem:[%s220 + $0x2d4] sm:$0xff] %v395
                %v397 = vld [vmem:[%s219 + $0x598] sm:$0xff]
                %398 = vst [vmem:[%s220 + $0x2dc] sm:$0xff] %v397
                %v399 = vld [vmem:[%s219 + $0x5a0] sm:$0xff]
                %400 = vst [vmem:[%s220 + $0x2e4] sm:$0xff] %v399
                %v401 = vld [vmem:[%s219 + $0x5a8] sm:$0xff]
                %402 = vst [vmem:[%s220 + $0x2ec] sm:$0xff] %v401
                %v403 = vld [vmem:[%s219 + $0x5b0] sm:$0xff]
                %404 = vst [vmem:[%s220 + $0x2f4] sm:$0xff] %v403
                %v405 = vld [vmem:[%s219 + $0x5b8] sm:$0xff]
                %406 = vst [vmem:[%s220 + $0x2fc] sm:$0xff] %v405
                %v407 = vld [vmem:[%s219 + $0x5c0] sm:$0xff]
                %408 = vst [vmem:[%s220 + $0x304] sm:$0xff] %v407
                %v409 = vld [vmem:[%s219 + $0x5c8] sm:$0xff]
                %410 = vst [vmem:[%s220 + $0x30c] sm:$0xff] %v409
                %v411 = vld [vmem:[%s219 + $0x5d0] sm:$0xff]
                %412 = vst [vmem:[%s220 + $0x314] sm:$0xff] %v411
                %v413 = vld [vmem:[%s219 + $0x640] sm:$0xff]
                %414 = vst [vmem:[%s220 + $0x320] sm:$0xff] %v413
                %v415 = vld [vmem:[%s219 + $0x648] sm:$0xff]
                %416 = vst [vmem:[%s220 + $0x328] sm:$0xff] %v415
                %v417 = vld [vmem:[%s219 + $0x650] sm:$0xff]
                %418 = vst [vmem:[%s220 + $0x330] sm:$0xff] %v417
                %v419 = vld [vmem:[%s219 + $0x658] sm:$0xff]
                %420 = vst [vmem:[%s220 + $0x338] sm:$0xff] %v419
                %v421 = vld [vmem:[%s219 + $0x660] sm:$0xff]
                %422 = vst [vmem:[%s220 + $0x340] sm:$0xff] %v421
                %v423 = vld [vmem:[%s219 + $0x668] sm:$0xff]
                %424 = vst [vmem:[%s220 + $0x348] sm:$0xff] %v423
                %v425 = vld [vmem:[%s219 + $0x670] sm:$0xff]
                %426 = vst [vmem:[%s220 + $0x350] sm:$0xff] %v425
                %v427 = vld [vmem:[%s219 + $0x678] sm:$0xff]
                %428 = vst [vmem:[%s220 + $0x358] sm:$0xff] %v427
                %v429 = vld [vmem:[%s219 + $0x680] sm:$0xff]
                %430 = vst [vmem:[%s220 + $0x360] sm:$0xff] %v429
                %v431 = vld [vmem:[%s219 + $0x688] sm:$0xff]
                %432 = vst [vmem:[%s220 + $0x368] sm:$0xff] %v431
                %v433 = vld [vmem:[%s219 + $0x690] sm:$0xff]
                %434 = vst [vmem:[%s220 + $0x370] sm:$0xff] %v433
                %v435 = vld [vmem:[%s219 + $0x698] sm:$0xff]
                %436 = vst [vmem:[%s220 + $0x378] sm:$0xff] %v435
                %v437 = vld [vmem:[%s219 + $0x708] sm:$0xff]
                %438 = vst [vmem:[%s220 + $0x384] sm:$0xff] %v437
                %v439 = vld [vmem:[%s219 + $0x710] sm:$0xff]
                %440 = vst [vmem:[%s220 + $0x38c] sm:$0xff] %v439
                %v441 = vld [vmem:[%s219 + $0x718] sm:$0xff]
                %442 = vst [vmem:[%s220 + $0x394] sm:$0xff] %v441
                %v443 = vld [vmem:[%s219 + $0x720] sm:$0xff]
                %444 = vst [vmem:[%s220 + $0x39c] sm:$0xff] %v443
                %v445 = vld [vmem:[%s219 + $0x728] sm:$0xff]
                %446 = vst [vmem:[%s220 + $0x3a4] sm:$0xff] %v445
                %v447 = vld [vmem:[%s219 + $0x730] sm:$0xff]
                %448 = vst [vmem:[%s220 + $0x3ac] sm:$0xff] %v447
                %v449 = vld [vmem:[%s219 + $0x738] sm:$0xff]
                %450 = vst [vmem:[%s220 + $0x3b4] sm:$0xff] %v449
                %v451 = vld [vmem:[%s219 + $0x740] sm:$0xff]
                %452 = vst [vmem:[%s220 + $0x3bc] sm:$0xff] %v451
                %v453 = vld [vmem:[%s219 + $0x748] sm:$0xff]
                %454 = vst [vmem:[%s220 + $0x3c4] sm:$0xff] %v453
                %v455 = vld [vmem:[%s219 + $0x750] sm:$0xff]
                %456 = vst [vmem:[%s220 + $0x3cc] sm:$0xff] %v455
                %v457 = vld [vmem:[%s219 + $0x758] sm:$0xff]
                %458 = vst [vmem:[%s220 + $0x3d4] sm:$0xff] %v457
                %v459 = vld [vmem:[%s219 + $0x760] sm:$0xff]
                %460 = vst [vmem:[%s220 + $0x3dc] sm:$0xff] %v459
                %v461 = vld [vmem:[%s219 + $0x7d0] sm:$0xff]
                %462 = vst [vmem:[%s220 + $0x3e8] sm:$0xff] %v461
                %v463 = vld [vmem:[%s219 + $0x7d8] sm:$0xff]
                %464 = vst [vmem:[%s220 + $0x3f0] sm:$0xff] %v463
                %v465 = vld [vmem:[%s219 + $0x7e0] sm:$0xff]
                %466 = vst [vmem:[%s220 + $0x3f8] sm:$0xff] %v465
                %v467 = vld [vmem:[%s219 + $0x7e8] sm:$0xff]
                %468 = vst [vmem:[%s220 + $0x400] sm:$0xff] %v467
                %v469 = vld [vmem:[%s219 + $0x7f0] sm:$0xff]
                %470 = vst [vmem:[%s220 + $0x408] sm:$0xff] %v469
                %v471 = vld [vmem:[%s219 + $0x7f8] sm:$0xff]
                %472 = vst [vmem:[%s220 + $0x410] sm:$0xff] %v471
                %v473 = vld [vmem:[%s219 + $0x800] sm:$0xff]
                %474 = vst [vmem:[%s220 + $0x418] sm:$0xff] %v473
                %v475 = vld [vmem:[%s219 + $0x808] sm:$0xff]
                %476 = vst [vmem:[%s220 + $0x420] sm:$0xff] %v475
                %v477 = vld [vmem:[%s219 + $0x810] sm:$0xff]
                %478 = vst [vmem:[%s220 + $0x428] sm:$0xff] %v477
                %v479 = vld [vmem:[%s219 + $0x818] sm:$0xff]
                %480 = vst [vmem:[%s220 + $0x430] sm:$0xff] %v479
                %v481 = vld [vmem:[%s219 + $0x820] sm:$0xff]
                %482 = vst [vmem:[%s220 + $0x438] sm:$0xff] %v481
                %v483 = vld [vmem:[%s219 + $0x828] sm:$0xff]
                %484 = vst [vmem:[%s220 + $0x440] sm:$0xff] %v483
                %v485 = vld [vmem:[%s219 + $0x898] sm:$0xff]
                %486 = vst [vmem:[%s220 + $0x44c] sm:$0xff] %v485
                %v487 = vld [vmem:[%s219 + $0x8a0] sm:$0xff]
                %488 = vst [vmem:[%s220 + $0x454] sm:$0xff] %v487
                %v489 = vld [vmem:[%s219 + $0x8a8] sm:$0xff]
                %490 = vst [vmem:[%s220 + $0x45c] sm:$0xff] %v489
                %v491 = vld [vmem:[%s219 + $0x8b0] sm:$0xff]
                %492 = vst [vmem:[%s220 + $0x464] sm:$0xff] %v491
                %v493 = vld [vmem:[%s219 + $0x8b8] sm:$0xff]
                %494 = vst [vmem:[%s220 + $0x46c] sm:$0xff] %v493
                %v495 = vld [vmem:[%s219 + $0x8c0] sm:$0xff]
                %496 = vst [vmem:[%s220 + $0x474] sm:$0xff] %v495
                %v497 = vld [vmem:[%s219 + $0x8c8] sm:$0xff]
                %498 = vst [vmem:[%s220 + $0x47c] sm:$0xff] %v497
                %v499 = vld [vmem:[%s219 + $0x8d0] sm:$0xff]
                %500 = vst [vmem:[%s220 + $0x484] sm:$0xff] %v499
                %v501 = vld [vmem:[%s219 + $0x8d8] sm:$0xff]
                %502 = vst [vmem:[%s220 + $0x48c] sm:$0xff] %v501
                %v503 = vld [vmem:[%s219 + $0x8e0] sm:$0xff]
                %504 = vst [vmem:[%s220 + $0x494] sm:$0xff] %v503
                %v505 = vld [vmem:[%s219 + $0x8e8] sm:$0xff]
                %506 = vst [vmem:[%s220 + $0x49c] sm:$0xff] %v505
                %v507 = vld [vmem:[%s219 + $0x8f0] sm:$0xff]
                %508 = vst [vmem:[%s220 + $0x4a4] sm:$0xff] %v507
                %v509 = vld [vmem:[%s219 + $0x960] sm:$0xff]
                %510 = vst [vmem:[%s220 + $0x4b0] sm:$0xff] %v509
                %v511 = vld [vmem:[%s219 + $0x968] sm:$0xff]
                %512 = vst [vmem:[%s220 + $0x4b8] sm:$0xff] %v511
                %v513 = vld [vmem:[%s219 + $0x970] sm:$0xff]
                %514 = vst [vmem:[%s220 + $0x4c0] sm:$0xff] %v513
                %v515 = vld [vmem:[%s219 + $0x978] sm:$0xff]
                %516 = vst [vmem:[%s220 + $0x4c8] sm:$0xff] %v515
                %v517 = vld [vmem:[%s219 + $0x980] sm:$0xff]
                %518 = vst [vmem:[%s220 + $0x4d0] sm:$0xff] %v517
                %v519 = vld [vmem:[%s219 + $0x988] sm:$0xff]
                %520 = vst [vmem:[%s220 + $0x4d8] sm:$0xff] %v519
                %v521 = vld [vmem:[%s219 + $0x990] sm:$0xff]
                %522 = vst [vmem:[%s220 + $0x4e0] sm:$0xff] %v521
                %v523 = vld [vmem:[%s219 + $0x998] sm:$0xff]
                %524 = vst [vmem:[%s220 + $0x4e8] sm:$0xff] %v523
                %v525 = vld [vmem:[%s219 + $0x9a0] sm:$0xff]
                %526 = vst [vmem:[%s220 + $0x4f0] sm:$0xff] %v525
                %v527 = vld [vmem:[%s219 + $0x9a8] sm:$0xff]
                %528 = vst [vmem:[%s220 + $0x4f8] sm:$0xff] %v527
                %v529 = vld [vmem:[%s219 + $0x9b0] sm:$0xff]
                %530 = vst [vmem:[%s220 + $0x500] sm:$0xff] %v529
                %v531 = vld [vmem:[%s219 + $0x9b8] sm:$0xff]
                %532 = vst [vmem:[%s220 + $0x508] sm:$0xff] %v531
                %v533 = vld [vmem:[%s219 + $0xa28] sm:$0xff]
                %534 = vst [vmem:[%s220 + $0x514] sm:$0xff] %v533
                %v535 = vld [vmem:[%s219 + $0xa30] sm:$0xff]
                %536 = vst [vmem:[%s220 + $0x51c] sm:$0xff] %v535
                %v537 = vld [vmem:[%s219 + $0xa38] sm:$0xff]
                %538 = vst [vmem:[%s220 + $0x524] sm:$0xff] %v537
                %v539 = vld [vmem:[%s219 + $0xa40] sm:$0xff]
                %540 = vst [vmem:[%s220 + $0x52c] sm:$0xff] %v539
                %v541 = vld [vmem:[%s219 + $0xa48] sm:$0xff]
                %542 = vst [vmem:[%s220 + $0x534] sm:$0xff] %v541
                %v543 = vld [vmem:[%s219 + $0xa50] sm:$0xff]
                %544 = vst [vmem:[%s220 + $0x53c] sm:$0xff] %v543
                %v545 = vld [vmem:[%s219 + $0xa58] sm:$0xff]
                %546 = vst [vmem:[%s220 + $0x544] sm:$0xff] %v545
                %v547 = vld [vmem:[%s219 + $0xa60] sm:$0xff]
                %548 = vst [vmem:[%s220 + $0x54c] sm:$0xff] %v547
                %v549 = vld [vmem:[%s219 + $0xa68] sm:$0xff]
                %550 = vst [vmem:[%s220 + $0x554] sm:$0xff] %v549
                %v551 = vld [vmem:[%s219 + $0xa70] sm:$0xff]
                %552 = vst [vmem:[%s220 + $0x55c] sm:$0xff] %v551
                %v553 = vld [vmem:[%s219 + $0xa78] sm:$0xff]
                %554 = vst [vmem:[%s220 + $0x564] sm:$0xff] %v553
                %v555 = vld [vmem:[%s219 + $0xa80] sm:$0xff]
                %556 = vst [vmem:[%s220 + $0x56c] sm:$0xff] %v555
                %v557 = vld [vmem:[%s219 + $0xaf0] sm:$0xff]
                %558 = vst [vmem:[%s220 + $0x578] sm:$0xff] %v557
                %v559 = vld [vmem:[%s219 + $0xaf8] sm:$0xff]
                %560 = vst [vmem:[%s220 + $0x580] sm:$0xff] %v559
                %v561 = vld [vmem:[%s219 + $0xb00] sm:$0xff]
                %562 = vst [vmem:[%s220 + $0x588] sm:$0xff] %v561
                %v563 = vld [vmem:[%s219 + $0xb08] sm:$0xff]
                %564 = vst [vmem:[%s220 + $0x590] sm:$0xff] %v563
                %v565 = vld [vmem:[%s219 + $0xb10] sm:$0xff]
                %566 = vst [vmem:[%s220 + $0x598] sm:$0xff] %v565
                %v567 = vld [vmem:[%s219 + $0xb18] sm:$0xff]
                %568 = vst [vmem:[%s220 + $0x5a0] sm:$0xff] %v567
                %v569 = vld [vmem:[%s219 + $0xb20] sm:$0xff]
                %570 = vst [vmem:[%s220 + $0x5a8] sm:$0xff] %v569
                %v571 = vld [vmem:[%s219 + $0xb28] sm:$0xff]
                %572 = vst [vmem:[%s220 + $0x5b0] sm:$0xff] %v571
                %v573 = vld [vmem:[%s219 + $0xb30] sm:$0xff]
                %574 = vst [vmem:[%s220 + $0x5b8] sm:$0xff] %v573
                %v575 = vld [vmem:[%s219 + $0xb38] sm:$0xff]
                %576 = vst [vmem:[%s220 + $0x5c0] sm:$0xff] %v575
                %v577 = vld [vmem:[%s219 + $0xb40] sm:$0xff]
                %578 = vst [vmem:[%s220 + $0x5c8] sm:$0xff] %v577
                %v579 = vld [vmem:[%s219 + $0xb48] sm:$0xff]
                %580 = vst [vmem:[%s220 + $0x5d0] sm:$0xff] %v579
                %v581 = vld [vmem:[%s219 + $0xbb8] sm:$0xff]
                %582 = vst [vmem:[%s220 + $0x5dc] sm:$0xff] %v581
                %v583 = vld [vmem:[%s219 + $0xbc0] sm:$0xff]
                %584 = vst [vmem:[%s220 + $0x5e4] sm:$0xff] %v583
                %v585 = vld [vmem:[%s219 + $0xbc8] sm:$0xff]
                %586 = vst [vmem:[%s220 + $0x5ec] sm:$0xff] %v585
                %v587 = vld [vmem:[%s219 + $0xbd0] sm:$0xff]
                %588 = vst [vmem:[%s220 + $0x5f4] sm:$0xff] %v587
                %v589 = vld [vmem:[%s219 + $0xbd8] sm:$0xff]
                %590 = vst [vmem:[%s220 + $0x5fc] sm:$0xff] %v589
                %v591 = vld [vmem:[%s219 + $0xbe0] sm:$0xff]
                %592 = vst [vmem:[%s220 + $0x604] sm:$0xff] %v591
                %v593 = vld [vmem:[%s219 + $0xbe8] sm:$0xff]
                %594 = vst [vmem:[%s220 + $0x60c] sm:$0xff] %v593
                %v595 = vld [vmem:[%s219 + $0xbf0] sm:$0xff]
                %596 = vst [vmem:[%s220 + $0x614] sm:$0xff] %v595
                %v597 = vld [vmem:[%s219 + $0xbf8] sm:$0xff]
                %598 = vst [vmem:[%s220 + $0x61c] sm:$0xff] %v597
                %v599 = vld [vmem:[%s219 + $0xc00] sm:$0xff]
                %600 = vst [vmem:[%s220 + $0x624] sm:$0xff] %v599
                %v601 = vld [vmem:[%s219 + $0xc08] sm:$0xff]
                %602 = vst [vmem:[%s220 + $0x62c] sm:$0xff] %v601
                %v603 = vld [vmem:[%s219 + $0xc10] sm:$0xff]
                %604 = vst [vmem:[%s220 + $0x634] sm:$0xff] %v603
              $region45: #{tpu_custom_call.1} parent=39 // loop_footer
                %s218 = sadd.s32 1, %s214
              $region46: #{tpu_custom_call.1} parent=39 // loop_footer_branch
                %213 = sbr.rel target = $region42
              $region47: #{tpu_custom_call.1} parent=39 // loop_exit
                _
              loop: start=0, step=1, limit=1
              $region48: #{tpu_custom_call.1} parent=39 // loop_pre_header
                _
              $region49: #{tpu_custom_call.1} parent=39 // loop_header
                %s607 = sphi 0, %s611
                %p608 = scmp.ge.s32.totalorder %s607, 1
                %s612 = sphi %s211, %s211
                %s613 = sphi %s212, %s212
              $region50: #{tpu_custom_call.1} parent=39 // loop_header_branch
                %610 = sbr.rel (%p608) target = $region54
              $region51: #{tpu_custom_call.1} parent=39 // loop_body
                %v614 = vld [vmem:[%s612] sm:$0xf]
                %615 = vst [vmem:[%s613] sm:$0xf] %v614
                %v616 = vld [vmem:[%s612 + $0xc8] sm:$0xf]
                %617 = vst [vmem:[%s613 + $0x64] sm:$0xf] %v616
                %v618 = vld [vmem:[%s612 + $0x190] sm:$0xf]
                %619 = vst [vmem:[%s613 + $0xc8] sm:$0xf] %v618
                %v620 = vld [vmem:[%s612 + $0x258] sm:$0xf]
                %621 = vst [vmem:[%s613 + $0x12c] sm:$0xf] %v620
                %v622 = vld [vmem:[%s612 + $0x320] sm:$0xf]
                %623 = vst [vmem:[%s613 + $0x190] sm:$0xf] %v622
                %v624 = vld [vmem:[%s612 + $0x3e8] sm:$0xf]
                %625 = vst [vmem:[%s613 + $0x1f4] sm:$0xf] %v624
                %v626 = vld [vmem:[%s612 + $0x4b0] sm:$0xf]
                %627 = vst [vmem:[%s613 + $0x258] sm:$0xf] %v626
                %v628 = vld [vmem:[%s612 + $0x578] sm:$0xf]
                %629 = vst [vmem:[%s613 + $0x2bc] sm:$0xf] %v628
                %v630 = vld [vmem:[%s612 + $0x640] sm:$0xf]
                %631 = vst [vmem:[%s613 + $0x320] sm:$0xf] %v630
                %v632 = vld [vmem:[%s612 + $0x708] sm:$0xf]
                %633 = vst [vmem:[%s613 + $0x384] sm:$0xf] %v632
                %v634 = vld [vmem:[%s612 + $0x7d0] sm:$0xf]
                %635 = vst [vmem:[%s613 + $0x3e8] sm:$0xf] %v634
                %v636 = vld [vmem:[%s612 + $0x898] sm:$0xf]
                %637 = vst [vmem:[%s613 + $0x44c] sm:$0xf] %v636
                %v638 = vld [vmem:[%s612 + $0x960] sm:$0xf]
                %639 = vst [vmem:[%s613 + $0x4b0] sm:$0xf] %v638
                %v640 = vld [vmem:[%s612 + $0xa28] sm:$0xf]
                %641 = vst [vmem:[%s613 + $0x514] sm:$0xf] %v640
                %v642 = vld [vmem:[%s612 + $0xaf0] sm:$0xf]
                %643 = vst [vmem:[%s613 + $0x578] sm:$0xf] %v642
                %v644 = vld [vmem:[%s612 + $0xbb8] sm:$0xf]
                %645 = vst [vmem:[%s613 + $0x5dc] sm:$0xf] %v644
              $region52: #{tpu_custom_call.1} parent=39 // loop_footer
                %s611 = sadd.s32 1, %s607
              $region53: #{tpu_custom_call.1} parent=39 // loop_footer_branch
                %606 = sbr.rel target = $region49
              $region54: #{tpu_custom_call.1} parent=39 // loop_exit
                _
            $region40: #{tpu_custom_call.1} parent=35 // pred_fallthru
              _
          $region36: #{tpu_custom_call.1} parent=31 // pred_fallthru
            _
          %646 = vnop
        $region32: #{tpu_custom_call.1} parent=27 // pred_fallthru
          _
        // Predicated region
        $region55: #{tpu_custom_call.1} parent=27 // pred_check
          %p647 = pneg %p71
        $region56: #{tpu_custom_call.1} parent=27 // pred_check_branch
          %649 = sbr.rel (%p647) target = $region58
        $region57: #{tpu_custom_call.1} parent=27 // pred_region
          %s650 = smul.u32 400, %s19
          %p651 = scmp.lt.s32.totalorder %s650, 799
          %s652 = scalar_select %p651, %s650, 799
          %s653 = smul.addr %s652, 2
          %s654 = smul.addr %s653, 4
          %s655 = scalar_lea.vmem %s1, %s654
          %s656 = smul.u32 400, %s19
        $region58: #{tpu_custom_call.1} parent=27 // pred_fallthru
          _
      $region28: #{tpu_custom_call.1} parent=5 // pred_fallthru
        _
      %p657 = scmp.le.s32.totalorder 1, %s11
      %p658 = scmp.lt.s32.totalorder %s11, 5
      %p659 = pnand %p657, %p658
      %p660 = pneg %p659
      // Predicated region
      $region59: #{tpu_custom_call.1} parent=5 // pred_check
        _
      $region60: #{tpu_custom_call.1} parent=5 // pred_check_branch
        %662 = sbr.rel (%p659) target = $region62
      $region61: #{tpu_custom_call.1} parent=5 // pred_region
        %s663 = ssub.s32 %s11, 1
        %s664 = sand.u32 %s38, 1
        %s665 = sand.u32 %s38, 1
        %s666 = smul.addr %s665, 1600
        %s667 = scalar_lea.vmem [#allocation3], %s666
        // Predicated region
        $region63: #{tpu_custom_call.1} parent=61 // pred_check
          %p668 = pneg %p51
        $region64: #{tpu_custom_call.1} parent=61 // pred_check_branch
          %670 = sbr.rel (%p668) target = $region66
        $region65: #{tpu_custom_call.1} parent=61 // pred_region
          _
        $region66: #{tpu_custom_call.1} parent=61 // pred_fallthru
          _
        %s671 = sand.u32 %s38, 1
        %s672 = sand.u32 %s38, 1
        %s673 = smul.addr %s672, 1600
        %s674 = scalar_lea.vmem [#allocation3], %s673
        %p675 = pneg %p51
        %p676 = pneg %p48
        %s677 = smul.u32 400, %s21
        %p678 = scmp.lt.s32.totalorder %s677, 799
        %s679 = scalar_select %p678, %s677, 799
        %s680 = smul.addr %s679, 2
        %s681 = smul.addr %s680, 4
        %s682 = scalar_lea.vmem %s1, %s681
        %p683 = pneg %p77
        %p684 = pneg %p74
        %p685 = pneg %p98
        %p686 = pneg %p95
        %p687 = pneg %p119
        %p688 = pneg %p116
        %p689 = pneg %p140
        %p690 = pneg %p137
        %p691 = pneg %p166
        %p692 = pneg %p163
        %s693 = smul.u32 16, %s20
        %p694 = scmp.lt.s32.totalorder %s693, 31
        %s695 = scalar_select %p694, %s693, 31
        %s696 = smul.addr %s695, 8
        %s697 = scalar_lea.vmem %s5, %s696
        %s698 = smul.u32 16, %s20
        %s699 = smul.u32 25, %s21
        %s700 = smul.u32 400, %s21
        %p701 = scmp.lt.s32.totalorder %s700, 799
        %s702 = scalar_select %p701, %s700, 799
        %s703 = smul.addr %s702, 2
        %s704 = smul.addr %s703, 4
        %s705 = scalar_lea.vmem %s1, %s704
        %s706 = smul.u32 400, %s21
        %s707 = smul.u32 16, %s20
        %p708 = scmp.lt.s32.totalorder %s707, 31
        %s709 = scalar_select %p708, %s707, 31
        %s710 = smul.addr %s709, 8
        %s711 = scalar_lea.vmem %s5, %s710
        %s712 = smul.u32 16, %s20
        %p714 = scmp.eq.s32.totalorder %s21, 0
        // Predicated region
        $region67: #{tpu_custom_call.1} parent=61 // pred_check
          %p715 = pneg %p714
        $region68: #{tpu_custom_call.1} parent=61 // pred_check_branch
          %717 = sbr.rel (%p715) target = $region70
        $region69: #{tpu_custom_call.1} parent=61 // pred_region
          %718 = vst [vmem:[#allocation2] sm:$0xff] 0.0
          %vm719 = vcmask 588800
          %720 = vst.msk [vmem:[#allocation2 + $0x8] sm:$0xff] %vm719, 0.0
          %721 = vst [vmem:[#allocation2 + $0x10] sm:$0xff] 0.0
          %722 = vst.msk [vmem:[#allocation2 + $0x18] sm:$0xff] %vm719, 0.0
          %723 = vst [vmem:[#allocation2 + $0x20] sm:$0xff] 0.0
          %724 = vst.msk [vmem:[#allocation2 + $0x28] sm:$0xff] %vm719, 0.0
          %725 = vst [vmem:[#allocation2 + $0x30] sm:$0xff] 0.0
          %726 = vst.msk [vmem:[#allocation2 + $0x38] sm:$0xff] %vm719, 0.0
          %727 = vst [vmem:[#allocation2 + $0x40] sm:$0xff] 0.0
          %728 = vst.msk [vmem:[#allocation2 + $0x48] sm:$0xff] %vm719, 0.0
          %729 = vst [vmem:[#allocation2 + $0x50] sm:$0xff] 0.0
          %730 = vst.msk [vmem:[#allocation2 + $0x58] sm:$0xff] %vm719, 0.0
          %731 = vst [vmem:[#allocation2 + $0x60] sm:$0xff] 0.0
          %732 = vst.msk [vmem:[#allocation2 + $0x68] sm:$0xff] %vm719, 0.0
          %733 = vst [vmem:[#allocation2 + $0x70] sm:$0xff] 0.0
          %734 = vst.msk [vmem:[#allocation2 + $0x78] sm:$0xff] %vm719, 0.0
          %735 = vst [vmem:[#allocation2 + $0x80] sm:$0xff] 0.0
          %736 = vst.msk [vmem:[#allocation2 + $0x88] sm:$0xff] %vm719, 0.0
          %737 = vst [vmem:[#allocation2 + $0x90] sm:$0xff] 0.0
          %738 = vst.msk [vmem:[#allocation2 + $0x98] sm:$0xff] %vm719, 0.0
          %739 = vst [vmem:[#allocation2 + $0xa0] sm:$0xff] 0.0
          %740 = vst.msk [vmem:[#allocation2 + $0xa8] sm:$0xff] %vm719, 0.0
          %741 = vst [vmem:[#allocation2 + $0xb0] sm:$0xff] 0.0
          %742 = vst.msk [vmem:[#allocation2 + $0xb8] sm:$0xff] %vm719, 0.0
          %743 = vst [vmem:[#allocation2 + $0xc0] sm:$0xff] 0.0
          %744 = vst.msk [vmem:[#allocation2 + $0xc8] sm:$0xff] %vm719, 0.0
          %745 = vst [vmem:[#allocation2 + $0xd0] sm:$0xff] 0.0
          %746 = vst.msk [vmem:[#allocation2 + $0xd8] sm:$0xff] %vm719, 0.0
          %747 = vst [vmem:[#allocation2 + $0xe0] sm:$0xff] 0.0
          %748 = vst.msk [vmem:[#allocation2 + $0xe8] sm:$0xff] %vm719, 0.0
          %749 = vst [vmem:[#allocation2 + $0xf0] sm:$0xff] 0.0
          %750 = vst.msk [vmem:[#allocation2 + $0xf8] sm:$0xff] %vm719, 0.0
        $region70: #{tpu_custom_call.1} parent=61 // pred_fallthru
          _
        %v751 = vld [vmem:[#allocation2] sm:$0xff]
        %v752 = vld [vmem:[#allocation2 + $0x8] sm:$0xff]
        %v753 = vld [vmem:[#allocation2 + $0x10] sm:$0xff]
        %v754 = vld [vmem:[#allocation2 + $0x18] sm:$0xff]
        %v755 = vld [vmem:[#allocation2 + $0x20] sm:$0xff]
        %v756 = vld [vmem:[#allocation2 + $0x28] sm:$0xff]
        %v757 = vld [vmem:[#allocation2 + $0x30] sm:$0xff]
        %v758 = vld [vmem:[#allocation2 + $0x38] sm:$0xff]
        %v759 = vld [vmem:[#allocation2 + $0x40] sm:$0xff]
        %v760 = vld [vmem:[#allocation2 + $0x48] sm:$0xff]
        %v761 = vld [vmem:[#allocation2 + $0x50] sm:$0xff]
        %v762 = vld [vmem:[#allocation2 + $0x58] sm:$0xff]
        %v763 = vld [vmem:[#allocation2 + $0x60] sm:$0xff]
        %v764 = vld [vmem:[#allocation2 + $0x68] sm:$0xff]
        %v765 = vld [vmem:[#allocation2 + $0x70] sm:$0xff]
        %v766 = vld [vmem:[#allocation2 + $0x78] sm:$0xff]
        %v767 = vld [vmem:[#allocation2 + $0x80] sm:$0xff]
        %v768 = vld [vmem:[#allocation2 + $0x88] sm:$0xff]
        %v769 = vld [vmem:[#allocation2 + $0x90] sm:$0xff]
        %v770 = vld [vmem:[#allocation2 + $0x98] sm:$0xff]
        %v771 = vld [vmem:[#allocation2 + $0xa0] sm:$0xff]
        %v772 = vld [vmem:[#allocation2 + $0xa8] sm:$0xff]
        %v773 = vld [vmem:[#allocation2 + $0xb0] sm:$0xff]
        %v774 = vld [vmem:[#allocation2 + $0xb8] sm:$0xff]
        %v775 = vld [vmem:[#allocation2 + $0xc0] sm:$0xff]
        %v776 = vld [vmem:[#allocation2 + $0xc8] sm:$0xff]
        %v777 = vld [vmem:[#allocation2 + $0xd0] sm:$0xff]
        %v778 = vld [vmem:[#allocation2 + $0xd8] sm:$0xff]
        %v779 = vld [vmem:[#allocation2 + $0xe0] sm:$0xff]
        %v780 = vld [vmem:[#allocation2 + $0xe8] sm:$0xff]
        %v781 = vld [vmem:[#allocation2 + $0xf0] sm:$0xff]
        %v782 = vld [vmem:[#allocation2 + $0xf8] sm:$0xff]
        %v783 = vld [vmem:[%s667] sm:$0xff]
        %v784 = vld [vmem:[%s667 + $0x8] sm:$0xff]
        %v785 = vld [vmem:[%s667 + $0x10] sm:$0xff]
        %v786 = vld [vmem:[%s667 + $0x18] sm:$0xff]
        %v787 = vld [vmem:[%s667 + $0x20] sm:$0xff]
        %v788 = vld [vmem:[%s667 + $0x28] sm:$0xff]
        %v789 = vld [vmem:[%s667 + $0x30] sm:$0xff]
        %v790 = vld [vmem:[%s667 + $0x38] sm:$0xff]
        %v791 = vld [vmem:[%s667 + $0x40] sm:$0xff]
        %v792 = vld [vmem:[%s667 + $0x48] sm:$0xff]
        %v793 = vld [vmem:[%s667 + $0x50] sm:$0xff]
        %v794 = vld [vmem:[%s667 + $0x58] sm:$0xff]
        %v795 = vld [vmem:[%s667 + $0x60] sm:$0xf]
        %v796 = vld [vmem:[%s667 + $0x64] sm:$0xff]
        %v797 = vld [vmem:[%s667 + $0x6c] sm:$0xff]
        %v798 = vld [vmem:[%s667 + $0x74] sm:$0xff]
        %v799 = vld [vmem:[%s667 + $0x7c] sm:$0xff]
        %v800 = vld [vmem:[%s667 + $0x84] sm:$0xff]
        %v801 = vld [vmem:[%s667 + $0x8c] sm:$0xff]
        %v802 = vld [vmem:[%s667 + $0x94] sm:$0xff]
        %v803 = vld [vmem:[%s667 + $0x9c] sm:$0xff]
        %v804 = vld [vmem:[%s667 + $0xa4] sm:$0xff]
        %v805 = vld [vmem:[%s667 + $0xac] sm:$0xff]
        %v806 = vld [vmem:[%s667 + $0xb4] sm:$0xff]
        %v807 = vld [vmem:[%s667 + $0xbc] sm:$0xff]
        %v808 = vld [vmem:[%s667 + $0xc4] sm:$0xf]
        %v809 = vld [vmem:[%s667 + $0xc8] sm:$0xff]
        %v810 = vld [vmem:[%s667 + $0xd0] sm:$0xff]
        %v811 = vld [vmem:[%s667 + $0xd8] sm:$0xff]
        %v812 = vld [vmem:[%s667 + $0xe0] sm:$0xff]
        %v813 = vld [vmem:[%s667 + $0xe8] sm:$0xff]
        %v814 = vld [vmem:[%s667 + $0xf0] sm:$0xff]
        %v815 = vld [vmem:[%s667 + $0xf8] sm:$0xff]
        %v816 = vld [vmem:[%s667 + $0x100] sm:$0xff]
        %v817 = vld [vmem:[%s667 + $0x108] sm:$0xff]
        %v818 = vld [vmem:[%s667 + $0x110] sm:$0xff]
        %v819 = vld [vmem:[%s667 + $0x118] sm:$0xff]
        %v820 = vld [vmem:[%s667 + $0x120] sm:$0xff]
        %v821 = vld [vmem:[%s667 + $0x128] sm:$0xf]
        %v822 = vld [vmem:[%s667 + $0x12c] sm:$0xff]
        %v823 = vld [vmem:[%s667 + $0x134] sm:$0xff]
        %v824 = vld [vmem:[%s667 + $0x13c] sm:$0xff]
        %v825 = vld [vmem:[%s667 + $0x144] sm:$0xff]
        %v826 = vld [vmem:[%s667 + $0x14c] sm:$0xff]
        %v827 = vld [vmem:[%s667 + $0x154] sm:$0xff]
        %v828 = vld [vmem:[%s667 + $0x15c] sm:$0xff]
        %v829 = vld [vmem:[%s667 + $0x164] sm:$0xff]
        %v830 = vld [vmem:[%s667 + $0x16c] sm:$0xff]
        %v831 = vld [vmem:[%s667 + $0x174] sm:$0xff]
        %v832 = vld [vmem:[%s667 + $0x17c] sm:$0xff]
        %v833 = vld [vmem:[%s667 + $0x184] sm:$0xff]
        %v834 = vld [vmem:[%s667 + $0x18c] sm:$0xf]
        %v835 = vld [vmem:[%s667 + $0x190] sm:$0xff]
        %v836 = vld [vmem:[%s667 + $0x198] sm:$0xff]
        %v837 = vld [vmem:[%s667 + $0x1a0] sm:$0xff]
        %v838 = vld [vmem:[%s667 + $0x1a8] sm:$0xff]
        %v839 = vld [vmem:[%s667 + $0x1b0] sm:$0xff]
        %v840 = vld [vmem:[%s667 + $0x1b8] sm:$0xff]
        %v841 = vld [vmem:[%s667 + $0x1c0] sm:$0xff]
        %v842 = vld [vmem:[%s667 + $0x1c8] sm:$0xff]
        %v843 = vld [vmem:[%s667 + $0x1d0] sm:$0xff]
        %v844 = vld [vmem:[%s667 + $0x1d8] sm:$0xff]
        %v845 = vld [vmem:[%s667 + $0x1e0] sm:$0xff]
        %v846 = vld [vmem:[%s667 + $0x1e8] sm:$0xff]
        %v847 = vld [vmem:[%s667 + $0x1f0] sm:$0xf]
        %v848 = vld [vmem:[%s667 + $0x1f4] sm:$0xff]
        %v849 = vld [vmem:[%s667 + $0x1fc] sm:$0xff]
        %v850 = vld [vmem:[%s667 + $0x204] sm:$0xff]
        %v851 = vld [vmem:[%s667 + $0x20c] sm:$0xff]
        %v852 = vld [vmem:[%s667 + $0x214] sm:$0xff]
        %v853 = vld [vmem:[%s667 + $0x21c] sm:$0xff]
        %v854 = vld [vmem:[%s667 + $0x224] sm:$0xff]
        %v855 = vld [vmem:[%s667 + $0x22c] sm:$0xff]
        %v856 = vld [vmem:[%s667 + $0x234] sm:$0xff]
        %v857 = vld [vmem:[%s667 + $0x23c] sm:$0xff]
        %v858 = vld [vmem:[%s667 + $0x244] sm:$0xff]
        %v859 = vld [vmem:[%s667 + $0x24c] sm:$0xff]
        %v860 = vld [vmem:[%s667 + $0x254] sm:$0xf]
        %v861 = vld [vmem:[%s667 + $0x258] sm:$0xff]
        %v862 = vld [vmem:[%s667 + $0x260] sm:$0xff]
        %v863 = vld [vmem:[%s667 + $0x268] sm:$0xff]
        %v864 = vld [vmem:[%s667 + $0x270] sm:$0xff]
        %v865 = vld [vmem:[%s667 + $0x278] sm:$0xff]
        %v866 = vld [vmem:[%s667 + $0x280] sm:$0xff]
        %v867 = vld [vmem:[%s667 + $0x288] sm:$0xff]
        %v868 = vld [vmem:[%s667 + $0x290] sm:$0xff]
        %v869 = vld [vmem:[%s667 + $0x298] sm:$0xff]
        %v870 = vld [vmem:[%s667 + $0x2a0] sm:$0xff]
        %v871 = vld [vmem:[%s667 + $0x2a8] sm:$0xff]
        %v872 = vld [vmem:[%s667 + $0x2b0] sm:$0xff]
        %v873 = vld [vmem:[%s667 + $0x2b8] sm:$0xf]
        %v874 = vld [vmem:[%s667 + $0x2bc] sm:$0xff]
        %v875 = vld [vmem:[%s667 + $0x2c4] sm:$0xff]
        %v876 = vld [vmem:[%s667 + $0x2cc] sm:$0xff]
        %v877 = vld [vmem:[%s667 + $0x2d4] sm:$0xff]
        %v878 = vld [vmem:[%s667 + $0x2dc] sm:$0xff]
        %v879 = vld [vmem:[%s667 + $0x2e4] sm:$0xff]
        %v880 = vld [vmem:[%s667 + $0x2ec] sm:$0xff]
        %v881 = vld [vmem:[%s667 + $0x2f4] sm:$0xff]
        %v882 = vld [vmem:[%s667 + $0x2fc] sm:$0xff]
        %v883 = vld [vmem:[%s667 + $0x304] sm:$0xff]
        %v884 = vld [vmem:[%s667 + $0x30c] sm:$0xff]
        %v885 = vld [vmem:[%s667 + $0x314] sm:$0xff]
        %v886 = vld [vmem:[%s667 + $0x31c] sm:$0xf]
        %v887 = vld [vmem:[%s667 + $0x320] sm:$0xff]
        %v888 = vld [vmem:[%s667 + $0x328] sm:$0xff]
        %v889 = vld [vmem:[%s667 + $0x330] sm:$0xff]
        %v890 = vld [vmem:[%s667 + $0x338] sm:$0xff]
        %v891 = vld [vmem:[%s667 + $0x340] sm:$0xff]
        %v892 = vld [vmem:[%s667 + $0x348] sm:$0xff]
        %v893 = vld [vmem:[%s667 + $0x350] sm:$0xff]
        %v894 = vld [vmem:[%s667 + $0x358] sm:$0xff]
        %v895 = vld [vmem:[%s667 + $0x360] sm:$0xff]
        %v896 = vld [vmem:[%s667 + $0x368] sm:$0xff]
        %v897 = vld [vmem:[%s667 + $0x370] sm:$0xff]
        %v898 = vld [vmem:[%s667 + $0x378] sm:$0xff]
        %v899 = vld [vmem:[%s667 + $0x380] sm:$0xf]
        %v900 = vld [vmem:[%s667 + $0x384] sm:$0xff]
        %v901 = vld [vmem:[%s667 + $0x38c] sm:$0xff]
        %v902 = vld [vmem:[%s667 + $0x394] sm:$0xff]
        %v903 = vld [vmem:[%s667 + $0x39c] sm:$0xff]
        %v904 = vld [vmem:[%s667 + $0x3a4] sm:$0xff]
        %v905 = vld [vmem:[%s667 + $0x3ac] sm:$0xff]
        %v906 = vld [vmem:[%s667 + $0x3b4] sm:$0xff]
        %v907 = vld [vmem:[%s667 + $0x3bc] sm:$0xff]
        %v908 = vld [vmem:[%s667 + $0x3c4] sm:$0xff]
        %v909 = vld [vmem:[%s667 + $0x3cc] sm:$0xff]
        %v910 = vld [vmem:[%s667 + $0x3d4] sm:$0xff]
        %v911 = vld [vmem:[%s667 + $0x3dc] sm:$0xff]
        %v912 = vld [vmem:[%s667 + $0x3e4] sm:$0xf]
        %v913 = vld [vmem:[%s667 + $0x3e8] sm:$0xff]
        %v914 = vld [vmem:[%s667 + $0x3f0] sm:$0xff]
        %v915 = vld [vmem:[%s667 + $0x3f8] sm:$0xff]
        %v916 = vld [vmem:[%s667 + $0x400] sm:$0xff]
        %v917 = vld [vmem:[%s667 + $0x408] sm:$0xff]
        %v918 = vld [vmem:[%s667 + $0x410] sm:$0xff]
        %v919 = vld [vmem:[%s667 + $0x418] sm:$0xff]
        %v920 = vld [vmem:[%s667 + $0x420] sm:$0xff]
        %v921 = vld [vmem:[%s667 + $0x428] sm:$0xff]
        %v922 = vld [vmem:[%s667 + $0x430] sm:$0xff]
        %v923 = vld [vmem:[%s667 + $0x438] sm:$0xff]
        %v924 = vld [vmem:[%s667 + $0x440] sm:$0xff]
        %v925 = vld [vmem:[%s667 + $0x448] sm:$0xf]
        %v926 = vld [vmem:[%s667 + $0x44c] sm:$0xff]
        %v927 = vld [vmem:[%s667 + $0x454] sm:$0xff]
        %v928 = vld [vmem:[%s667 + $0x45c] sm:$0xff]
        %v929 = vld [vmem:[%s667 + $0x464] sm:$0xff]
        %v930 = vld [vmem:[%s667 + $0x46c] sm:$0xff]
        %v931 = vld [vmem:[%s667 + $0x474] sm:$0xff]
        %v932 = vld [vmem:[%s667 + $0x47c] sm:$0xff]
        %v933 = vld [vmem:[%s667 + $0x484] sm:$0xff]
        %v934 = vld [vmem:[%s667 + $0x48c] sm:$0xff]
        %v935 = vld [vmem:[%s667 + $0x494] sm:$0xff]
        %v936 = vld [vmem:[%s667 + $0x49c] sm:$0xff]
        %v937 = vld [vmem:[%s667 + $0x4a4] sm:$0xff]
        %v938 = vld [vmem:[%s667 + $0x4ac] sm:$0xf]
        %v939 = vld [vmem:[%s667 + $0x4b0] sm:$0xff]
        %v940 = vld [vmem:[%s667 + $0x4b8] sm:$0xff]
        %v941 = vld [vmem:[%s667 + $0x4c0] sm:$0xff]
        %v942 = vld [vmem:[%s667 + $0x4c8] sm:$0xff]
        %v943 = vld [vmem:[%s667 + $0x4d0] sm:$0xff]
        %v944 = vld [vmem:[%s667 + $0x4d8] sm:$0xff]
        %v945 = vld [vmem:[%s667 + $0x4e0] sm:$0xff]
        %v946 = vld [vmem:[%s667 + $0x4e8] sm:$0xff]
        %v947 = vld [vmem:[%s667 + $0x4f0] sm:$0xff]
        %v948 = vld [vmem:[%s667 + $0x4f8] sm:$0xff]
        %v949 = vld [vmem:[%s667 + $0x500] sm:$0xff]
        %v950 = vld [vmem:[%s667 + $0x508] sm:$0xff]
        %v951 = vld [vmem:[%s667 + $0x510] sm:$0xf]
        %v952 = vld [vmem:[%s667 + $0x514] sm:$0xff]
        %v953 = vld [vmem:[%s667 + $0x51c] sm:$0xff]
        %v954 = vld [vmem:[%s667 + $0x524] sm:$0xff]
        %v955 = vld [vmem:[%s667 + $0x52c] sm:$0xff]
        %v956 = vld [vmem:[%s667 + $0x534] sm:$0xff]
        %v957 = vld [vmem:[%s667 + $0x53c] sm:$0xff]
        %v958 = vld [vmem:[%s667 + $0x544] sm:$0xff]
        %v959 = vld [vmem:[%s667 + $0x54c] sm:$0xff]
        %v960 = vld [vmem:[%s667 + $0x554] sm:$0xff]
        %v961 = vld [vmem:[%s667 + $0x55c] sm:$0xff]
        %v962 = vld [vmem:[%s667 + $0x564] sm:$0xff]
        %v963 = vld [vmem:[%s667 + $0x56c] sm:$0xff]
        %v964 = vld [vmem:[%s667 + $0x574] sm:$0xf]
        %v965 = vld [vmem:[%s667 + $0x578] sm:$0xff]
        %v966 = vld [vmem:[%s667 + $0x580] sm:$0xff]
        %v967 = vld [vmem:[%s667 + $0x588] sm:$0xff]
        %v968 = vld [vmem:[%s667 + $0x590] sm:$0xff]
        %v969 = vld [vmem:[%s667 + $0x598] sm:$0xff]
        %v970 = vld [vmem:[%s667 + $0x5a0] sm:$0xff]
        %v971 = vld [vmem:[%s667 + $0x5a8] sm:$0xff]
        %v972 = vld [vmem:[%s667 + $0x5b0] sm:$0xff]
        %v973 = vld [vmem:[%s667 + $0x5b8] sm:$0xff]
        %v974 = vld [vmem:[%s667 + $0x5c0] sm:$0xff]
        %v975 = vld [vmem:[%s667 + $0x5c8] sm:$0xff]
        %v976 = vld [vmem:[%s667 + $0x5d0] sm:$0xff]
        %v977 = vld [vmem:[%s667 + $0x5d8] sm:$0xf]
        %v978 = vld [vmem:[%s667 + $0x5dc] sm:$0xff]
        %v979 = vld [vmem:[%s667 + $0x5e4] sm:$0xff]
        %v980 = vld [vmem:[%s667 + $0x5ec] sm:$0xff]
        %v981 = vld [vmem:[%s667 + $0x5f4] sm:$0xff]
        %v982 = vld [vmem:[%s667 + $0x5fc] sm:$0xff]
        %v983 = vld [vmem:[%s667 + $0x604] sm:$0xff]
        %v984 = vld [vmem:[%s667 + $0x60c] sm:$0xff]
        %v985 = vld [vmem:[%s667 + $0x614] sm:$0xff]
        %v986 = vld [vmem:[%s667 + $0x61c] sm:$0xff]
        %v987 = vld [vmem:[%s667 + $0x624] sm:$0xff]
        %v988 = vld [vmem:[%s667 + $0x62c] sm:$0xff]
        %v989 = vld [vmem:[%s667 + $0x634] sm:$0xff]
        %v990 = vld [vmem:[%s667 + $0x63c] sm:$0xf]
        %v991 = vld [vmem:[%s705] sm:$0xff]
        %v992 = vld [vmem:[%s705 + $0x8] sm:$0xff]
        %v993 = vld [vmem:[%s705 + $0x10] sm:$0xff]
        %v994 = vld [vmem:[%s705 + $0x18] sm:$0xff]
        %v995 = vld [vmem:[%s705 + $0x20] sm:$0xff]
        %v996 = vld [vmem:[%s705 + $0x28] sm:$0xff]
        %v997 = vld [vmem:[%s705 + $0x30] sm:$0xff]
        %v998 = vld [vmem:[%s705 + $0x38] sm:$0xff]
        %v999 = vld [vmem:[%s705 + $0x40] sm:$0xff]
        %v1000 = vld [vmem:[%s705 + $0x48] sm:$0xff]
        %v1001 = vld [vmem:[%s705 + $0x50] sm:$0xff]
        %v1002 = vld [vmem:[%s705 + $0x58] sm:$0xff]
        %v1003 = vld [vmem:[%s705 + $0x60] sm:$0xff]
        %v1004 = vld [vmem:[%s705 + $0x68] sm:$0xff]
        %v1005 = vld [vmem:[%s705 + $0x70] sm:$0xff]
        %v1006 = vld [vmem:[%s705 + $0x78] sm:$0xff]
        %v1007 = vld [vmem:[%s705 + $0x80] sm:$0xff]
        %v1008 = vld [vmem:[%s705 + $0x88] sm:$0xff]
        %v1009 = vld [vmem:[%s705 + $0x90] sm:$0xff]
        %v1010 = vld [vmem:[%s705 + $0x98] sm:$0xff]
        %v1011 = vld [vmem:[%s705 + $0xa0] sm:$0xff]
        %v1012 = vld [vmem:[%s705 + $0xa8] sm:$0xff]
        %v1013 = vld [vmem:[%s705 + $0xb0] sm:$0xff]
        %v1014 = vld [vmem:[%s705 + $0xb8] sm:$0xff]
        %v1015 = vld [vmem:[%s705 + $0xc0] sm:$0xff]
        %v1016 = vld [vmem:[%s705 + $0xc8] sm:$0xff]
        %v1017 = vld [vmem:[%s705 + $0xd0] sm:$0xff]
        %v1018 = vld [vmem:[%s705 + $0xd8] sm:$0xff]
        %v1019 = vld [vmem:[%s705 + $0xe0] sm:$0xff]
        %v1020 = vld [vmem:[%s705 + $0xe8] sm:$0xff]
        %v1021 = vld [vmem:[%s705 + $0xf0] sm:$0xff]
        %v1022 = vld [vmem:[%s705 + $0xf8] sm:$0xff]
        %v1023 = vld [vmem:[%s705 + $0x100] sm:$0xff]
        %v1024 = vld [vmem:[%s705 + $0x108] sm:$0xff]
        %v1025 = vld [vmem:[%s705 + $0x110] sm:$0xff]
        %v1026 = vld [vmem:[%s705 + $0x118] sm:$0xff]
        %v1027 = vld [vmem:[%s705 + $0x120] sm:$0xff]
        %v1028 = vld [vmem:[%s705 + $0x128] sm:$0xff]
        %v1029 = vld [vmem:[%s705 + $0x130] sm:$0xff]
        %v1030 = vld [vmem:[%s705 + $0x138] sm:$0xff]
        %v1031 = vld [vmem:[%s705 + $0x140] sm:$0xff]
        %v1032 = vld [vmem:[%s705 + $0x148] sm:$0xff]
        %v1033 = vld [vmem:[%s705 + $0x150] sm:$0xff]
        %v1034 = vld [vmem:[%s705 + $0x158] sm:$0xff]
        %v1035 = vld [vmem:[%s705 + $0x160] sm:$0xff]
        %v1036 = vld [vmem:[%s705 + $0x168] sm:$0xff]
        %v1037 = vld [vmem:[%s705 + $0x170] sm:$0xff]
        %v1038 = vld [vmem:[%s705 + $0x178] sm:$0xff]
        %v1039 = vld [vmem:[%s705 + $0x180] sm:$0xff]
        %v1040 = vld [vmem:[%s705 + $0x188] sm:$0xff]
        %v1041 = vld [vmem:[%s705 + $0x190] sm:$0xff]
        %v1042 = vld [vmem:[%s705 + $0x198] sm:$0xff]
        %v1043 = vld [vmem:[%s705 + $0x1a0] sm:$0xff]
        %v1044 = vld [vmem:[%s705 + $0x1a8] sm:$0xff]
        %v1045 = vld [vmem:[%s705 + $0x1b0] sm:$0xff]
        %v1046 = vld [vmem:[%s705 + $0x1b8] sm:$0xff]
        %v1047 = vld [vmem:[%s705 + $0x1c0] sm:$0xff]
        %v1048 = vld [vmem:[%s705 + $0x1c8] sm:$0xff]
        %v1049 = vld [vmem:[%s705 + $0x1d0] sm:$0xff]
        %v1050 = vld [vmem:[%s705 + $0x1d8] sm:$0xff]
        %v1051 = vld [vmem:[%s705 + $0x1e0] sm:$0xff]
        %v1052 = vld [vmem:[%s705 + $0x1e8] sm:$0xff]
        %v1053 = vld [vmem:[%s705 + $0x1f0] sm:$0xff]
        %v1054 = vld [vmem:[%s705 + $0x1f8] sm:$0xff]
        %v1055 = vld [vmem:[%s705 + $0x200] sm:$0xff]
        %v1056 = vld [vmem:[%s705 + $0x208] sm:$0xff]
        %v1057 = vld [vmem:[%s705 + $0x210] sm:$0xff]
        %v1058 = vld [vmem:[%s705 + $0x218] sm:$0xff]
        %v1059 = vld [vmem:[%s705 + $0x220] sm:$0xff]
        %v1060 = vld [vmem:[%s705 + $0x228] sm:$0xff]
        %v1061 = vld [vmem:[%s705 + $0x230] sm:$0xff]
        %v1062 = vld [vmem:[%s705 + $0x238] sm:$0xff]
        %v1063 = vld [vmem:[%s705 + $0x240] sm:$0xff]
        %v1064 = vld [vmem:[%s705 + $0x248] sm:$0xff]
        %v1065 = vld [vmem:[%s705 + $0x250] sm:$0xff]
        %v1066 = vld [vmem:[%s705 + $0x258] sm:$0xff]
        %v1067 = vld [vmem:[%s705 + $0x260] sm:$0xff]
        %v1068 = vld [vmem:[%s705 + $0x268] sm:$0xff]
        %v1069 = vld [vmem:[%s705 + $0x270] sm:$0xff]
        %v1070 = vld [vmem:[%s705 + $0x278] sm:$0xff]
        %v1071 = vld [vmem:[%s705 + $0x280] sm:$0xff]
        %v1072 = vld [vmem:[%s705 + $0x288] sm:$0xff]
        %v1073 = vld [vmem:[%s705 + $0x290] sm:$0xff]
        %v1074 = vld [vmem:[%s705 + $0x298] sm:$0xff]
        %v1075 = vld [vmem:[%s705 + $0x2a0] sm:$0xff]
        %v1076 = vld [vmem:[%s705 + $0x2a8] sm:$0xff]
        %v1077 = vld [vmem:[%s705 + $0x2b0] sm:$0xff]
        %v1078 = vld [vmem:[%s705 + $0x2b8] sm:$0xff]
        %v1079 = vld [vmem:[%s705 + $0x2c0] sm:$0xff]
        %v1080 = vld [vmem:[%s705 + $0x2c8] sm:$0xff]
        %v1081 = vld [vmem:[%s705 + $0x2d0] sm:$0xff]
        %v1082 = vld [vmem:[%s705 + $0x2d8] sm:$0xff]
        %v1083 = vld [vmem:[%s705 + $0x2e0] sm:$0xff]
        %v1084 = vld [vmem:[%s705 + $0x2e8] sm:$0xff]
        %v1085 = vld [vmem:[%s705 + $0x2f0] sm:$0xff]
        %v1086 = vld [vmem:[%s705 + $0x2f8] sm:$0xff]
        %v1087 = vld [vmem:[%s705 + $0x300] sm:$0xff]
        %v1088 = vld [vmem:[%s705 + $0x308] sm:$0xff]
        %v1089 = vld [vmem:[%s705 + $0x310] sm:$0xff]
        %v1090 = vld [vmem:[%s705 + $0x318] sm:$0xff]
        %v1091 = vld [vmem:[%s705 + $0x320] sm:$0xff]
        %v1092 = vld [vmem:[%s705 + $0x328] sm:$0xff]
        %v1093 = vld [vmem:[%s705 + $0x330] sm:$0xff]
        %v1094 = vld [vmem:[%s705 + $0x338] sm:$0xff]
        %v1095 = vld [vmem:[%s705 + $0x340] sm:$0xff]
        %v1096 = vld [vmem:[%s705 + $0x348] sm:$0xff]
        %v1097 = vld [vmem:[%s705 + $0x350] sm:$0xff]
        %v1098 = vld [vmem:[%s705 + $0x358] sm:$0xff]
        %v1099 = vld [vmem:[%s705 + $0x360] sm:$0xff]
        %v1100 = vld [vmem:[%s705 + $0x368] sm:$0xff]
        %v1101 = vld [vmem:[%s705 + $0x370] sm:$0xff]
        %v1102 = vld [vmem:[%s705 + $0x378] sm:$0xff]
        %v1103 = vld [vmem:[%s705 + $0x380] sm:$0xff]
        %v1104 = vld [vmem:[%s705 + $0x388] sm:$0xff]
        %v1105 = vld [vmem:[%s705 + $0x390] sm:$0xff]
        %v1106 = vld [vmem:[%s705 + $0x398] sm:$0xff]
        %v1107 = vld [vmem:[%s705 + $0x3a0] sm:$0xff]
        %v1108 = vld [vmem:[%s705 + $0x3a8] sm:$0xff]
        %v1109 = vld [vmem:[%s705 + $0x3b0] sm:$0xff]
        %v1110 = vld [vmem:[%s705 + $0x3b8] sm:$0xff]
        %v1111 = vld [vmem:[%s705 + $0x3c0] sm:$0xff]
        %v1112 = vld [vmem:[%s705 + $0x3c8] sm:$0xff]
        %v1113 = vld [vmem:[%s705 + $0x3d0] sm:$0xff]
        %v1114 = vld [vmem:[%s705 + $0x3d8] sm:$0xff]
        %v1115 = vld [vmem:[%s705 + $0x3e0] sm:$0xff]
        %v1116 = vld [vmem:[%s705 + $0x3e8] sm:$0xff]
        %v1117 = vld [vmem:[%s705 + $0x3f0] sm:$0xff]
        %v1118 = vld [vmem:[%s705 + $0x3f8] sm:$0xff]
        %v1119 = vld [vmem:[%s705 + $0x400] sm:$0xff]
        %v1120 = vld [vmem:[%s705 + $0x408] sm:$0xff]
        %v1121 = vld [vmem:[%s705 + $0x410] sm:$0xff]
        %v1122 = vld [vmem:[%s705 + $0x418] sm:$0xff]
        %v1123 = vld [vmem:[%s705 + $0x420] sm:$0xff]
        %v1124 = vld [vmem:[%s705 + $0x428] sm:$0xff]
        %v1125 = vld [vmem:[%s705 + $0x430] sm:$0xff]
        %v1126 = vld [vmem:[%s705 + $0x438] sm:$0xff]
        %v1127 = vld [vmem:[%s705 + $0x440] sm:$0xff]
        %v1128 = vld [vmem:[%s705 + $0x448] sm:$0xff]
        %v1129 = vld [vmem:[%s705 + $0x450] sm:$0xff]
        %v1130 = vld [vmem:[%s705 + $0x458] sm:$0xff]
        %v1131 = vld [vmem:[%s705 + $0x460] sm:$0xff]
        %v1132 = vld [vmem:[%s705 + $0x468] sm:$0xff]
        %v1133 = vld [vmem:[%s705 + $0x470] sm:$0xff]
        %v1134 = vld [vmem:[%s705 + $0x478] sm:$0xff]
        %v1135 = vld [vmem:[%s705 + $0x480] sm:$0xff]
        %v1136 = vld [vmem:[%s705 + $0x488] sm:$0xff]
        %v1137 = vld [vmem:[%s705 + $0x490] sm:$0xff]
        %v1138 = vld [vmem:[%s705 + $0x498] sm:$0xff]
        %v1139 = vld [vmem:[%s705 + $0x4a0] sm:$0xff]
        %v1140 = vld [vmem:[%s705 + $0x4a8] sm:$0xff]
        %v1141 = vld [vmem:[%s705 + $0x4b0] sm:$0xff]
        %v1142 = vld [vmem:[%s705 + $0x4b8] sm:$0xff]
        %v1143 = vld [vmem:[%s705 + $0x4c0] sm:$0xff]
        %v1144 = vld [vmem:[%s705 + $0x4c8] sm:$0xff]
        %v1145 = vld [vmem:[%s705 + $0x4d0] sm:$0xff]
        %v1146 = vld [vmem:[%s705 + $0x4d8] sm:$0xff]
        %v1147 = vld [vmem:[%s705 + $0x4e0] sm:$0xff]
        %v1148 = vld [vmem:[%s705 + $0x4e8] sm:$0xff]
        %v1149 = vld [vmem:[%s705 + $0x4f0] sm:$0xff]
        %v1150 = vld [vmem:[%s705 + $0x4f8] sm:$0xff]
        %v1151 = vld [vmem:[%s705 + $0x500] sm:$0xff]
        %v1152 = vld [vmem:[%s705 + $0x508] sm:$0xff]
        %v1153 = vld [vmem:[%s705 + $0x510] sm:$0xff]
        %v1154 = vld [vmem:[%s705 + $0x518] sm:$0xff]
        %v1155 = vld [vmem:[%s705 + $0x520] sm:$0xff]
        %v1156 = vld [vmem:[%s705 + $0x528] sm:$0xff]
        %v1157 = vld [vmem:[%s705 + $0x530] sm:$0xff]
        %v1158 = vld [vmem:[%s705 + $0x538] sm:$0xff]
        %v1159 = vld [vmem:[%s705 + $0x540] sm:$0xff]
        %v1160 = vld [vmem:[%s705 + $0x548] sm:$0xff]
        %v1161 = vld [vmem:[%s705 + $0x550] sm:$0xff]
        %v1162 = vld [vmem:[%s705 + $0x558] sm:$0xff]
        %v1163 = vld [vmem:[%s705 + $0x560] sm:$0xff]
        %v1164 = vld [vmem:[%s705 + $0x568] sm:$0xff]
        %v1165 = vld [vmem:[%s705 + $0x570] sm:$0xff]
        %v1166 = vld [vmem:[%s705 + $0x578] sm:$0xff]
        %v1167 = vld [vmem:[%s705 + $0x580] sm:$0xff]
        %v1168 = vld [vmem:[%s705 + $0x588] sm:$0xff]
        %v1169 = vld [vmem:[%s705 + $0x590] sm:$0xff]
        %v1170 = vld [vmem:[%s705 + $0x598] sm:$0xff]
        %v1171 = vld [vmem:[%s705 + $0x5a0] sm:$0xff]
        %v1172 = vld [vmem:[%s705 + $0x5a8] sm:$0xff]
        %v1173 = vld [vmem:[%s705 + $0x5b0] sm:$0xff]
        %v1174 = vld [vmem:[%s705 + $0x5b8] sm:$0xff]
        %v1175 = vld [vmem:[%s705 + $0x5c0] sm:$0xff]
        %v1176 = vld [vmem:[%s705 + $0x5c8] sm:$0xff]
        %v1177 = vld [vmem:[%s705 + $0x5d0] sm:$0xff]
        %v1178 = vld [vmem:[%s705 + $0x5d8] sm:$0xff]
        %v1179 = vld [vmem:[%s705 + $0x5e0] sm:$0xff]
        %v1180 = vld [vmem:[%s705 + $0x5e8] sm:$0xff]
        %v1181 = vld [vmem:[%s705 + $0x5f0] sm:$0xff]
        %v1182 = vld [vmem:[%s705 + $0x5f8] sm:$0xff]
        %v1183 = vld [vmem:[%s705 + $0x600] sm:$0xff]
        %v1184 = vld [vmem:[%s705 + $0x608] sm:$0xff]
        %v1185 = vld [vmem:[%s705 + $0x610] sm:$0xff]
        %v1186 = vld [vmem:[%s705 + $0x618] sm:$0xff]
        %v1187 = vld [vmem:[%s705 + $0x620] sm:$0xff]
        %v1188 = vld [vmem:[%s705 + $0x628] sm:$0xff]
        %v1189 = vld [vmem:[%s705 + $0x630] sm:$0xff]
        %v1190 = vld [vmem:[%s705 + $0x638] sm:$0xff]
        %v1191 = vld [vmem:[%s705 + $0x640] sm:$0xff]
        %v1192 = vld [vmem:[%s705 + $0x648] sm:$0xff]
        %v1193 = vld [vmem:[%s705 + $0x650] sm:$0xff]
        %v1194 = vld [vmem:[%s705 + $0x658] sm:$0xff]
        %v1195 = vld [vmem:[%s705 + $0x660] sm:$0xff]
        %v1196 = vld [vmem:[%s705 + $0x668] sm:$0xff]
        %v1197 = vld [vmem:[%s705 + $0x670] sm:$0xff]
        %v1198 = vld [vmem:[%s705 + $0x678] sm:$0xff]
        %v1199 = vld [vmem:[%s705 + $0x680] sm:$0xff]
        %v1200 = vld [vmem:[%s705 + $0x688] sm:$0xff]
        %v1201 = vld [vmem:[%s705 + $0x690] sm:$0xff]
        %v1202 = vld [vmem:[%s705 + $0x698] sm:$0xff]
        %v1203 = vld [vmem:[%s705 + $0x6a0] sm:$0xff]
        %v1204 = vld [vmem:[%s705 + $0x6a8] sm:$0xff]
        %v1205 = vld [vmem:[%s705 + $0x6b0] sm:$0xff]
        %v1206 = vld [vmem:[%s705 + $0x6b8] sm:$0xff]
        %v1207 = vld [vmem:[%s705 + $0x6c0] sm:$0xff]
        %v1208 = vld [vmem:[%s705 + $0x6c8] sm:$0xff]
        %v1209 = vld [vmem:[%s705 + $0x6d0] sm:$0xff]
        %v1210 = vld [vmem:[%s705 + $0x6d8] sm:$0xff]
        %v1211 = vld [vmem:[%s705 + $0x6e0] sm:$0xff]
        %v1212 = vld [vmem:[%s705 + $0x6e8] sm:$0xff]
        %v1213 = vld [vmem:[%s705 + $0x6f0] sm:$0xff]
        %v1214 = vld [vmem:[%s705 + $0x6f8] sm:$0xff]
        %v1215 = vld [vmem:[%s705 + $0x700] sm:$0xff]
        %v1216 = vld [vmem:[%s705 + $0x708] sm:$0xff]
        %v1217 = vld [vmem:[%s705 + $0x710] sm:$0xff]
        %v1218 = vld [vmem:[%s705 + $0x718] sm:$0xff]
        %v1219 = vld [vmem:[%s705 + $0x720] sm:$0xff]
        %v1220 = vld [vmem:[%s705 + $0x728] sm:$0xff]
        %v1221 = vld [vmem:[%s705 + $0x730] sm:$0xff]
        %v1222 = vld [vmem:[%s705 + $0x738] sm:$0xff]
        %v1223 = vld [vmem:[%s705 + $0x740] sm:$0xff]
        %v1224 = vld [vmem:[%s705 + $0x748] sm:$0xff]
        %v1225 = vld [vmem:[%s705 + $0x750] sm:$0xff]
        %v1226 = vld [vmem:[%s705 + $0x758] sm:$0xff]
        %v1227 = vld [vmem:[%s705 + $0x760] sm:$0xff]
        %v1228 = vld [vmem:[%s705 + $0x768] sm:$0xff]
        %v1229 = vld [vmem:[%s705 + $0x770] sm:$0xff]
        %v1230 = vld [vmem:[%s705 + $0x778] sm:$0xff]
        %v1231 = vld [vmem:[%s705 + $0x780] sm:$0xff]
        %v1232 = vld [vmem:[%s705 + $0x788] sm:$0xff]
        %v1233 = vld [vmem:[%s705 + $0x790] sm:$0xff]
        %v1234 = vld [vmem:[%s705 + $0x798] sm:$0xff]
        %v1235 = vld [vmem:[%s705 + $0x7a0] sm:$0xff]
        %v1236 = vld [vmem:[%s705 + $0x7a8] sm:$0xff]
        %v1237 = vld [vmem:[%s705 + $0x7b0] sm:$0xff]
        %v1238 = vld [vmem:[%s705 + $0x7b8] sm:$0xff]
        %v1239 = vld [vmem:[%s705 + $0x7c0] sm:$0xff]
        %v1240 = vld [vmem:[%s705 + $0x7c8] sm:$0xff]
        %v1241 = vld [vmem:[%s705 + $0x7d0] sm:$0xff]
        %v1242 = vld [vmem:[%s705 + $0x7d8] sm:$0xff]
        %v1243 = vld [vmem:[%s705 + $0x7e0] sm:$0xff]
        %v1244 = vld [vmem:[%s705 + $0x7e8] sm:$0xff]
        %v1245 = vld [vmem:[%s705 + $0x7f0] sm:$0xff]
        %v1246 = vld [vmem:[%s705 + $0x7f8] sm:$0xff]
        %v1247 = vld [vmem:[%s705 + $0x800] sm:$0xff]
        %v1248 = vld [vmem:[%s705 + $0x808] sm:$0xff]
        %v1249 = vld [vmem:[%s705 + $0x810] sm:$0xff]
        %v1250 = vld [vmem:[%s705 + $0x818] sm:$0xff]
        %v1251 = vld [vmem:[%s705 + $0x820] sm:$0xff]
        %v1252 = vld [vmem:[%s705 + $0x828] sm:$0xff]
        %v1253 = vld [vmem:[%s705 + $0x830] sm:$0xff]
        %v1254 = vld [vmem:[%s705 + $0x838] sm:$0xff]
        %v1255 = vld [vmem:[%s705 + $0x840] sm:$0xff]
        %v1256 = vld [vmem:[%s705 + $0x848] sm:$0xff]
        %v1257 = vld [vmem:[%s705 + $0x850] sm:$0xff]
        %v1258 = vld [vmem:[%s705 + $0x858] sm:$0xff]
        %v1259 = vld [vmem:[%s705 + $0x860] sm:$0xff]
        %v1260 = vld [vmem:[%s705 + $0x868] sm:$0xff]
        %v1261 = vld [vmem:[%s705 + $0x870] sm:$0xff]
        %v1262 = vld [vmem:[%s705 + $0x878] sm:$0xff]
        %v1263 = vld [vmem:[%s705 + $0x880] sm:$0xff]
        %v1264 = vld [vmem:[%s705 + $0x888] sm:$0xff]
        %v1265 = vld [vmem:[%s705 + $0x890] sm:$0xff]
        %v1266 = vld [vmem:[%s705 + $0x898] sm:$0xff]
        %v1267 = vld [vmem:[%s705 + $0x8a0] sm:$0xff]
        %v1268 = vld [vmem:[%s705 + $0x8a8] sm:$0xff]
        %v1269 = vld [vmem:[%s705 + $0x8b0] sm:$0xff]
        %v1270 = vld [vmem:[%s705 + $0x8b8] sm:$0xff]
        %v1271 = vld [vmem:[%s705 + $0x8c0] sm:$0xff]
        %v1272 = vld [vmem:[%s705 + $0x8c8] sm:$0xff]
        %v1273 = vld [vmem:[%s705 + $0x8d0] sm:$0xff]
        %v1274 = vld [vmem:[%s705 + $0x8d8] sm:$0xff]
        %v1275 = vld [vmem:[%s705 + $0x8e0] sm:$0xff]
        %v1276 = vld [vmem:[%s705 + $0x8e8] sm:$0xff]
        %v1277 = vld [vmem:[%s705 + $0x8f0] sm:$0xff]
        %v1278 = vld [vmem:[%s705 + $0x8f8] sm:$0xff]
        %v1279 = vld [vmem:[%s705 + $0x900] sm:$0xff]
        %v1280 = vld [vmem:[%s705 + $0x908] sm:$0xff]
        %v1281 = vld [vmem:[%s705 + $0x910] sm:$0xff]
        %v1282 = vld [vmem:[%s705 + $0x918] sm:$0xff]
        %v1283 = vld [vmem:[%s705 + $0x920] sm:$0xff]
        %v1284 = vld [vmem:[%s705 + $0x928] sm:$0xff]
        %v1285 = vld [vmem:[%s705 + $0x930] sm:$0xff]
        %v1286 = vld [vmem:[%s705 + $0x938] sm:$0xff]
        %v1287 = vld [vmem:[%s705 + $0x940] sm:$0xff]
        %v1288 = vld [vmem:[%s705 + $0x948] sm:$0xff]
        %v1289 = vld [vmem:[%s705 + $0x950] sm:$0xff]
        %v1290 = vld [vmem:[%s705 + $0x958] sm:$0xff]
        %v1291 = vld [vmem:[%s705 + $0x960] sm:$0xff]
        %v1292 = vld [vmem:[%s705 + $0x968] sm:$0xff]
        %v1293 = vld [vmem:[%s705 + $0x970] sm:$0xff]
        %v1294 = vld [vmem:[%s705 + $0x978] sm:$0xff]
        %v1295 = vld [vmem:[%s705 + $0x980] sm:$0xff]
        %v1296 = vld [vmem:[%s705 + $0x988] sm:$0xff]
        %v1297 = vld [vmem:[%s705 + $0x990] sm:$0xff]
        %v1298 = vld [vmem:[%s705 + $0x998] sm:$0xff]
        %v1299 = vld [vmem:[%s705 + $0x9a0] sm:$0xff]
        %v1300 = vld [vmem:[%s705 + $0x9a8] sm:$0xff]
        %v1301 = vld [vmem:[%s705 + $0x9b0] sm:$0xff]
        %v1302 = vld [vmem:[%s705 + $0x9b8] sm:$0xff]
        %v1303 = vld [vmem:[%s705 + $0x9c0] sm:$0xff]
        %v1304 = vld [vmem:[%s705 + $0x9c8] sm:$0xff]
        %v1305 = vld [vmem:[%s705 + $0x9d0] sm:$0xff]
        %v1306 = vld [vmem:[%s705 + $0x9d8] sm:$0xff]
        %v1307 = vld [vmem:[%s705 + $0x9e0] sm:$0xff]
        %v1308 = vld [vmem:[%s705 + $0x9e8] sm:$0xff]
        %v1309 = vld [vmem:[%s705 + $0x9f0] sm:$0xff]
        %v1310 = vld [vmem:[%s705 + $0x9f8] sm:$0xff]
        %v1311 = vld [vmem:[%s705 + $0xa00] sm:$0xff]
        %v1312 = vld [vmem:[%s705 + $0xa08] sm:$0xff]
        %v1313 = vld [vmem:[%s705 + $0xa10] sm:$0xff]
        %v1314 = vld [vmem:[%s705 + $0xa18] sm:$0xff]
        %v1315 = vld [vmem:[%s705 + $0xa20] sm:$0xff]
        %v1316 = vld [vmem:[%s705 + $0xa28] sm:$0xff]
        %v1317 = vld [vmem:[%s705 + $0xa30] sm:$0xff]
        %v1318 = vld [vmem:[%s705 + $0xa38] sm:$0xff]
        %v1319 = vld [vmem:[%s705 + $0xa40] sm:$0xff]
        %v1320 = vld [vmem:[%s705 + $0xa48] sm:$0xff]
        %v1321 = vld [vmem:[%s705 + $0xa50] sm:$0xff]
        %v1322 = vld [vmem:[%s705 + $0xa58] sm:$0xff]
        %v1323 = vld [vmem:[%s705 + $0xa60] sm:$0xff]
        %v1324 = vld [vmem:[%s705 + $0xa68] sm:$0xff]
        %v1325 = vld [vmem:[%s705 + $0xa70] sm:$0xff]
        %v1326 = vld [vmem:[%s705 + $0xa78] sm:$0xff]
        %v1327 = vld [vmem:[%s705 + $0xa80] sm:$0xff]
        %v1328 = vld [vmem:[%s705 + $0xa88] sm:$0xff]
        %v1329 = vld [vmem:[%s705 + $0xa90] sm:$0xff]
        %v1330 = vld [vmem:[%s705 + $0xa98] sm:$0xff]
        %v1331 = vld [vmem:[%s705 + $0xaa0] sm:$0xff]
        %v1332 = vld [vmem:[%s705 + $0xaa8] sm:$0xff]
        %v1333 = vld [vmem:[%s705 + $0xab0] sm:$0xff]
        %v1334 = vld [vmem:[%s705 + $0xab8] sm:$0xff]
        %v1335 = vld [vmem:[%s705 + $0xac0] sm:$0xff]
        %v1336 = vld [vmem:[%s705 + $0xac8] sm:$0xff]
        %v1337 = vld [vmem:[%s705 + $0xad0] sm:$0xff]
        %v1338 = vld [vmem:[%s705 + $0xad8] sm:$0xff]
        %v1339 = vld [vmem:[%s705 + $0xae0] sm:$0xff]
        %v1340 = vld [vmem:[%s705 + $0xae8] sm:$0xff]
        %v1341 = vld [vmem:[%s705 + $0xaf0] sm:$0xff]
        %v1342 = vld [vmem:[%s705 + $0xaf8] sm:$0xff]
        %v1343 = vld [vmem:[%s705 + $0xb00] sm:$0xff]
        %v1344 = vld [vmem:[%s705 + $0xb08] sm:$0xff]
        %v1345 = vld [vmem:[%s705 + $0xb10] sm:$0xff]
        %v1346 = vld [vmem:[%s705 + $0xb18] sm:$0xff]
        %v1347 = vld [vmem:[%s705 + $0xb20] sm:$0xff]
        %v1348 = vld [vmem:[%s705 + $0xb28] sm:$0xff]
        %v1349 = vld [vmem:[%s705 + $0xb30] sm:$0xff]
        %v1350 = vld [vmem:[%s705 + $0xb38] sm:$0xff]
        %v1351 = vld [vmem:[%s705 + $0xb40] sm:$0xff]
        %v1352 = vld [vmem:[%s705 + $0xb48] sm:$0xff]
        %v1353 = vld [vmem:[%s705 + $0xb50] sm:$0xff]
        %v1354 = vld [vmem:[%s705 + $0xb58] sm:$0xff]
        %v1355 = vld [vmem:[%s705 + $0xb60] sm:$0xff]
        %v1356 = vld [vmem:[%s705 + $0xb68] sm:$0xff]
        %v1357 = vld [vmem:[%s705 + $0xb70] sm:$0xff]
        %v1358 = vld [vmem:[%s705 + $0xb78] sm:$0xff]
        %v1359 = vld [vmem:[%s705 + $0xb80] sm:$0xff]
        %v1360 = vld [vmem:[%s705 + $0xb88] sm:$0xff]
        %v1361 = vld [vmem:[%s705 + $0xb90] sm:$0xff]
        %v1362 = vld [vmem:[%s705 + $0xb98] sm:$0xff]
        %v1363 = vld [vmem:[%s705 + $0xba0] sm:$0xff]
        %v1364 = vld [vmem:[%s705 + $0xba8] sm:$0xff]
        %v1365 = vld [vmem:[%s705 + $0xbb0] sm:$0xff]
        %v1366 = vld [vmem:[%s705 + $0xbb8] sm:$0xff]
        %v1367 = vld [vmem:[%s705 + $0xbc0] sm:$0xff]
        %v1368 = vld [vmem:[%s705 + $0xbc8] sm:$0xff]
        %v1369 = vld [vmem:[%s705 + $0xbd0] sm:$0xff]
        %v1370 = vld [vmem:[%s705 + $0xbd8] sm:$0xff]
        %v1371 = vld [vmem:[%s705 + $0xbe0] sm:$0xff]
        %v1372 = vld [vmem:[%s705 + $0xbe8] sm:$0xff]
        %v1373 = vld [vmem:[%s705 + $0xbf0] sm:$0xff]
        %v1374 = vld [vmem:[%s705 + $0xbf8] sm:$0xff]
        %v1375 = vld [vmem:[%s705 + $0xc00] sm:$0xff]
        %v1376 = vld [vmem:[%s705 + $0xc08] sm:$0xff]
        %v1377 = vld [vmem:[%s705 + $0xc10] sm:$0xff]
        %v1378 = vld [vmem:[%s705 + $0xc18] sm:$0xff]
        %v1379 = vld [vmem:[%s705 + $0xc20] sm:$0xff]
        %v1380 = vld [vmem:[%s705 + $0xc28] sm:$0xff]
        %v1381 = vld [vmem:[%s705 + $0xc30] sm:$0xff]
        %v1382 = vld [vmem:[%s705 + $0xc38] sm:$0xff]
        %v1383 = vld [vmem:[%s705 + $0xc40] sm:$0xff]
        %v1384 = vld [vmem:[%s705 + $0xc48] sm:$0xff]
        %v1385 = vld [vmem:[%s705 + $0xc50] sm:$0xff]
        %v1386 = vld [vmem:[%s705 + $0xc58] sm:$0xff]
        %v1387 = vld [vmem:[%s705 + $0xc60] sm:$0xff]
        %v1388 = vld [vmem:[%s705 + $0xc68] sm:$0xff]
        %v1389 = vld [vmem:[%s705 + $0xc70] sm:$0xff]
        %v1390 = vld [vmem:[%s705 + $0xc78] sm:$0xff]
        %v1599 = vunpack.c.l.b16 %v783
        %v1600 = vunpack.c.h.b16 %v783
        %v1601 = vunpack.c.l.b16 %v784
        %v1602 = vunpack.c.h.b16 %v784
        %v1603 = vunpack.c.l.b16 %v785
        %v1604 = vunpack.c.h.b16 %v785
        %v1605 = vunpack.c.l.b16 %v786
        %v1606 = vunpack.c.h.b16 %v786
        %v1607 = vunpack.c.l.b16 %v787
        %v1608 = vunpack.c.h.b16 %v787
        %v1609 = vunpack.c.l.b16 %v788
        %v1610 = vunpack.c.h.b16 %v788
        %v1611 = vunpack.c.l.b16 %v789
        %v1612 = vunpack.c.h.b16 %v789
        %v1613 = vunpack.c.l.b16 %v790
        %v1614 = vunpack.c.h.b16 %v790
        %v1615 = vunpack.c.l.b16 %v791
        %v1616 = vunpack.c.h.b16 %v791
        %v1617 = vunpack.c.l.b16 %v792
        %v1618 = vunpack.c.h.b16 %v792
        %v1619 = vunpack.c.l.b16 %v793
        %v1620 = vunpack.c.h.b16 %v793
        %v1621 = vunpack.c.l.b16 %v794
        %v1622 = vunpack.c.h.b16 %v794
        %v1623 = vunpack.c.l.b16 %v795
        %v1624 = vunpack.c.l.b16 %v796
        %v1625 = vunpack.c.h.b16 %v796
        %v1626 = vunpack.c.l.b16 %v797
        %v1627 = vunpack.c.h.b16 %v797
        %v1628 = vunpack.c.l.b16 %v798
        %v1629 = vunpack.c.h.b16 %v798
        %v1630 = vunpack.c.l.b16 %v799
        %v1631 = vunpack.c.h.b16 %v799
        %v1632 = vunpack.c.l.b16 %v800
        %v1633 = vunpack.c.h.b16 %v800
        %v1634 = vunpack.c.l.b16 %v801
        %v1635 = vunpack.c.h.b16 %v801
        %v1636 = vunpack.c.l.b16 %v802
        %v1637 = vunpack.c.h.b16 %v802
        %v1638 = vunpack.c.l.b16 %v803
        %v1639 = vunpack.c.h.b16 %v803
        %v1640 = vunpack.c.l.b16 %v804
        %v1641 = vunpack.c.h.b16 %v804
        %v1642 = vunpack.c.l.b16 %v805
        %v1643 = vunpack.c.h.b16 %v805
        %v1644 = vunpack.c.l.b16 %v806
        %v1645 = vunpack.c.h.b16 %v806
        %v1646 = vunpack.c.l.b16 %v807
        %v1647 = vunpack.c.h.b16 %v807
        %v1648 = vunpack.c.l.b16 %v808
        %v1649 = vunpack.c.l.b16 %v809
        %v1650 = vunpack.c.h.b16 %v809
        %v1651 = vunpack.c.l.b16 %v810
        %v1652 = vunpack.c.h.b16 %v810
        %v1653 = vunpack.c.l.b16 %v811
        %v1654 = vunpack.c.h.b16 %v811
        %v1655 = vunpack.c.l.b16 %v812
        %v1656 = vunpack.c.h.b16 %v812
        %v1657 = vunpack.c.l.b16 %v813
        %v1658 = vunpack.c.h.b16 %v813
        %v1659 = vunpack.c.l.b16 %v814
        %v1660 = vunpack.c.h.b16 %v814
        %v1661 = vunpack.c.l.b16 %v815
        %v1662 = vunpack.c.h.b16 %v815
        %v1663 = vunpack.c.l.b16 %v816
        %v1664 = vunpack.c.h.b16 %v816
        %v1665 = vunpack.c.l.b16 %v817
        %v1666 = vunpack.c.h.b16 %v817
        %v1667 = vunpack.c.l.b16 %v818
        %v1668 = vunpack.c.h.b16 %v818
        %v1669 = vunpack.c.l.b16 %v819
        %v1670 = vunpack.c.h.b16 %v819
        %v1671 = vunpack.c.l.b16 %v820
        %v1672 = vunpack.c.h.b16 %v820
        %v1673 = vunpack.c.l.b16 %v821
        %v1674 = vunpack.c.l.b16 %v822
        %v1675 = vunpack.c.h.b16 %v822
        %v1676 = vunpack.c.l.b16 %v823
        %v1677 = vunpack.c.h.b16 %v823
        %v1678 = vunpack.c.l.b16 %v824
        %v1679 = vunpack.c.h.b16 %v824
        %v1680 = vunpack.c.l.b16 %v825
        %v1681 = vunpack.c.h.b16 %v825
        %v1682 = vunpack.c.l.b16 %v826
        %v1683 = vunpack.c.h.b16 %v826
        %v1684 = vunpack.c.l.b16 %v827
        %v1685 = vunpack.c.h.b16 %v827
        %v1686 = vunpack.c.l.b16 %v828
        %v1687 = vunpack.c.h.b16 %v828
        %v1688 = vunpack.c.l.b16 %v829
        %v1689 = vunpack.c.h.b16 %v829
        %v1690 = vunpack.c.l.b16 %v830
        %v1691 = vunpack.c.h.b16 %v830
        %v1692 = vunpack.c.l.b16 %v831
        %v1693 = vunpack.c.h.b16 %v831
        %v1694 = vunpack.c.l.b16 %v832
        %v1695 = vunpack.c.h.b16 %v832
        %v1696 = vunpack.c.l.b16 %v833
        %v1697 = vunpack.c.h.b16 %v833
        %v1698 = vunpack.c.l.b16 %v834
        %v1699 = vunpack.c.l.b16 %v835
        %v1700 = vunpack.c.h.b16 %v835
        %v1701 = vunpack.c.l.b16 %v836
        %v1702 = vunpack.c.h.b16 %v836
        %v1703 = vunpack.c.l.b16 %v837
        %v1704 = vunpack.c.h.b16 %v837
        %v1705 = vunpack.c.l.b16 %v838
        %v1706 = vunpack.c.h.b16 %v838
        %v1707 = vunpack.c.l.b16 %v839
        %v1708 = vunpack.c.h.b16 %v839
        %v1709 = vunpack.c.l.b16 %v840
        %v1710 = vunpack.c.h.b16 %v840
        %v1711 = vunpack.c.l.b16 %v841
        %v1712 = vunpack.c.h.b16 %v841
        %v1713 = vunpack.c.l.b16 %v842
        %v1714 = vunpack.c.h.b16 %v842
        %v1715 = vunpack.c.l.b16 %v843
        %v1716 = vunpack.c.h.b16 %v843
        %v1717 = vunpack.c.l.b16 %v844
        %v1718 = vunpack.c.h.b16 %v844
        %v1719 = vunpack.c.l.b16 %v845
        %v1720 = vunpack.c.h.b16 %v845
        %v1721 = vunpack.c.l.b16 %v846
        %v1722 = vunpack.c.h.b16 %v846
        %v1723 = vunpack.c.l.b16 %v847
        %v1724 = vunpack.c.l.b16 %v848
        %v1725 = vunpack.c.h.b16 %v848
        %v1726 = vunpack.c.l.b16 %v849
        %v1727 = vunpack.c.h.b16 %v849
        %v1728 = vunpack.c.l.b16 %v850
        %v1729 = vunpack.c.h.b16 %v850
        %v1730 = vunpack.c.l.b16 %v851
        %v1731 = vunpack.c.h.b16 %v851
        %v1732 = vunpack.c.l.b16 %v852
        %v1733 = vunpack.c.h.b16 %v852
        %v1734 = vunpack.c.l.b16 %v853
        %v1735 = vunpack.c.h.b16 %v853
        %v1736 = vunpack.c.l.b16 %v854
        %v1737 = vunpack.c.h.b16 %v854
        %v1738 = vunpack.c.l.b16 %v855
        %v1739 = vunpack.c.h.b16 %v855
        %v1740 = vunpack.c.l.b16 %v856
        %v1741 = vunpack.c.h.b16 %v856
        %v1742 = vunpack.c.l.b16 %v857
        %v1743 = vunpack.c.h.b16 %v857
        %v1744 = vunpack.c.l.b16 %v858
        %v1745 = vunpack.c.h.b16 %v858
        %v1746 = vunpack.c.l.b16 %v859
        %v1747 = vunpack.c.h.b16 %v859
        %v1748 = vunpack.c.l.b16 %v860
        %v1749 = vunpack.c.l.b16 %v861
        %v1750 = vunpack.c.h.b16 %v861
        %v1751 = vunpack.c.l.b16 %v862
        %v1752 = vunpack.c.h.b16 %v862
        %v1753 = vunpack.c.l.b16 %v863
        %v1754 = vunpack.c.h.b16 %v863
        %v1755 = vunpack.c.l.b16 %v864
        %v1756 = vunpack.c.h.b16 %v864
        %v1757 = vunpack.c.l.b16 %v865
        %v1758 = vunpack.c.h.b16 %v865
        %v1759 = vunpack.c.l.b16 %v866
        %v1760 = vunpack.c.h.b16 %v866
        %v1761 = vunpack.c.l.b16 %v867
        %v1762 = vunpack.c.h.b16 %v867
        %v1763 = vunpack.c.l.b16 %v868
        %v1764 = vunpack.c.h.b16 %v868
        %v1765 = vunpack.c.l.b16 %v869
        %v1766 = vunpack.c.h.b16 %v869
        %v1767 = vunpack.c.l.b16 %v870
        %v1768 = vunpack.c.h.b16 %v870
        %v1769 = vunpack.c.l.b16 %v871
        %v1770 = vunpack.c.h.b16 %v871
        %v1771 = vunpack.c.l.b16 %v872
        %v1772 = vunpack.c.h.b16 %v872
        %v1773 = vunpack.c.l.b16 %v873
        %v1774 = vunpack.c.l.b16 %v874
        %v1775 = vunpack.c.h.b16 %v874
        %v1776 = vunpack.c.l.b16 %v875
        %v1777 = vunpack.c.h.b16 %v875
        %v1778 = vunpack.c.l.b16 %v876
        %v1779 = vunpack.c.h.b16 %v876
        %v1780 = vunpack.c.l.b16 %v877
        %v1781 = vunpack.c.h.b16 %v877
        %v1782 = vunpack.c.l.b16 %v878
        %v1783 = vunpack.c.h.b16 %v878
        %v1784 = vunpack.c.l.b16 %v879
        %v1785 = vunpack.c.h.b16 %v879
        %v1786 = vunpack.c.l.b16 %v880
        %v1787 = vunpack.c.h.b16 %v880
        %v1788 = vunpack.c.l.b16 %v881
        %v1789 = vunpack.c.h.b16 %v881
        %v1790 = vunpack.c.l.b16 %v882
        %v1791 = vunpack.c.h.b16 %v882
        %v1792 = vunpack.c.l.b16 %v883
        %v1793 = vunpack.c.h.b16 %v883
        %v1794 = vunpack.c.l.b16 %v884
        %v1795 = vunpack.c.h.b16 %v884
        %v1796 = vunpack.c.l.b16 %v885
        %v1797 = vunpack.c.h.b16 %v885
        %v1798 = vunpack.c.l.b16 %v886
        %v1799 = vunpack.c.l.b16 %v887
        %v1800 = vunpack.c.h.b16 %v887
        %v1801 = vunpack.c.l.b16 %v888
        %v1802 = vunpack.c.h.b16 %v888
        %v1803 = vunpack.c.l.b16 %v889
        %v1804 = vunpack.c.h.b16 %v889
        %v1805 = vunpack.c.l.b16 %v890
        %v1806 = vunpack.c.h.b16 %v890
        %v1807 = vunpack.c.l.b16 %v891
        %v1808 = vunpack.c.h.b16 %v891
        %v1809 = vunpack.c.l.b16 %v892
        %v1810 = vunpack.c.h.b16 %v892
        %v1811 = vunpack.c.l.b16 %v893
        %v1812 = vunpack.c.h.b16 %v893
        %v1813 = vunpack.c.l.b16 %v894
        %v1814 = vunpack.c.h.b16 %v894
        %v1815 = vunpack.c.l.b16 %v895
        %v1816 = vunpack.c.h.b16 %v895
        %v1817 = vunpack.c.l.b16 %v896
        %v1818 = vunpack.c.h.b16 %v896
        %v1819 = vunpack.c.l.b16 %v897
        %v1820 = vunpack.c.h.b16 %v897
        %v1821 = vunpack.c.l.b16 %v898
        %v1822 = vunpack.c.h.b16 %v898
        %v1823 = vunpack.c.l.b16 %v899
        %v1824 = vunpack.c.l.b16 %v900
        %v1825 = vunpack.c.h.b16 %v900
        %v1826 = vunpack.c.l.b16 %v901
        %v1827 = vunpack.c.h.b16 %v901
        %v1828 = vunpack.c.l.b16 %v902
        %v1829 = vunpack.c.h.b16 %v902
        %v1830 = vunpack.c.l.b16 %v903
        %v1831 = vunpack.c.h.b16 %v903
        %v1832 = vunpack.c.l.b16 %v904
        %v1833 = vunpack.c.h.b16 %v904
        %v1834 = vunpack.c.l.b16 %v905
        %v1835 = vunpack.c.h.b16 %v905
        %v1836 = vunpack.c.l.b16 %v906
        %v1837 = vunpack.c.h.b16 %v906
        %v1838 = vunpack.c.l.b16 %v907
        %v1839 = vunpack.c.h.b16 %v907
        %v1840 = vunpack.c.l.b16 %v908
        %v1841 = vunpack.c.h.b16 %v908
        %v1842 = vunpack.c.l.b16 %v909
        %v1843 = vunpack.c.h.b16 %v909
        %v1844 = vunpack.c.l.b16 %v910
        %v1845 = vunpack.c.h.b16 %v910
        %v1846 = vunpack.c.l.b16 %v911
        %v1847 = vunpack.c.h.b16 %v911
        %v1848 = vunpack.c.l.b16 %v912
        %v1849 = vunpack.c.l.b16 %v913
        %v1850 = vunpack.c.h.b16 %v913
        %v1851 = vunpack.c.l.b16 %v914
        %v1852 = vunpack.c.h.b16 %v914
        %v1853 = vunpack.c.l.b16 %v915
        %v1854 = vunpack.c.h.b16 %v915
        %v1855 = vunpack.c.l.b16 %v916
        %v1856 = vunpack.c.h.b16 %v916
        %v1857 = vunpack.c.l.b16 %v917
        %v1858 = vunpack.c.h.b16 %v917
        %v1859 = vunpack.c.l.b16 %v918
        %v1860 = vunpack.c.h.b16 %v918
        %v1861 = vunpack.c.l.b16 %v919
        %v1862 = vunpack.c.h.b16 %v919
        %v1863 = vunpack.c.l.b16 %v920
        %v1864 = vunpack.c.h.b16 %v920
        %v1865 = vunpack.c.l.b16 %v921
        %v1866 = vunpack.c.h.b16 %v921
        %v1867 = vunpack.c.l.b16 %v922
        %v1868 = vunpack.c.h.b16 %v922
        %v1869 = vunpack.c.l.b16 %v923
        %v1870 = vunpack.c.h.b16 %v923
        %v1871 = vunpack.c.l.b16 %v924
        %v1872 = vunpack.c.h.b16 %v924
        %v1873 = vunpack.c.l.b16 %v925
        %v1874 = vunpack.c.l.b16 %v926
        %v1875 = vunpack.c.h.b16 %v926
        %v1876 = vunpack.c.l.b16 %v927
        %v1877 = vunpack.c.h.b16 %v927
        %v1878 = vunpack.c.l.b16 %v928
        %v1879 = vunpack.c.h.b16 %v928
        %v1880 = vunpack.c.l.b16 %v929
        %v1881 = vunpack.c.h.b16 %v929
        %v1882 = vunpack.c.l.b16 %v930
        %v1883 = vunpack.c.h.b16 %v930
        %v1884 = vunpack.c.l.b16 %v931
        %v1885 = vunpack.c.h.b16 %v931
        %v1886 = vunpack.c.l.b16 %v932
        %v1887 = vunpack.c.h.b16 %v932
        %v1888 = vunpack.c.l.b16 %v933
        %v1889 = vunpack.c.h.b16 %v933
        %v1890 = vunpack.c.l.b16 %v934
        %v1891 = vunpack.c.h.b16 %v934
        %v1892 = vunpack.c.l.b16 %v935
        %v1893 = vunpack.c.h.b16 %v935
        %v1894 = vunpack.c.l.b16 %v936
        %v1895 = vunpack.c.h.b16 %v936
        %v1896 = vunpack.c.l.b16 %v937
        %v1897 = vunpack.c.h.b16 %v937
        %v1898 = vunpack.c.l.b16 %v938
        %v1899 = vunpack.c.l.b16 %v939
        %v1900 = vunpack.c.h.b16 %v939
        %v1901 = vunpack.c.l.b16 %v940
        %v1902 = vunpack.c.h.b16 %v940
        %v1903 = vunpack.c.l.b16 %v941
        %v1904 = vunpack.c.h.b16 %v941
        %v1905 = vunpack.c.l.b16 %v942
        %v1906 = vunpack.c.h.b16 %v942
        %v1907 = vunpack.c.l.b16 %v943
        %v1908 = vunpack.c.h.b16 %v943
        %v1909 = vunpack.c.l.b16 %v944
        %v1910 = vunpack.c.h.b16 %v944
        %v1911 = vunpack.c.l.b16 %v945
        %v1912 = vunpack.c.h.b16 %v945
        %v1913 = vunpack.c.l.b16 %v946
        %v1914 = vunpack.c.h.b16 %v946
        %v1915 = vunpack.c.l.b16 %v947
        %v1916 = vunpack.c.h.b16 %v947
        %v1917 = vunpack.c.l.b16 %v948
        %v1918 = vunpack.c.h.b16 %v948
        %v1919 = vunpack.c.l.b16 %v949
        %v1920 = vunpack.c.h.b16 %v949
        %v1921 = vunpack.c.l.b16 %v950
        %v1922 = vunpack.c.h.b16 %v950
        %v1923 = vunpack.c.l.b16 %v951
        %v1924 = vunpack.c.l.b16 %v952
        %v1925 = vunpack.c.h.b16 %v952
        %v1926 = vunpack.c.l.b16 %v953
        %v1927 = vunpack.c.h.b16 %v953
        %v1928 = vunpack.c.l.b16 %v954
        %v1929 = vunpack.c.h.b16 %v954
        %v1930 = vunpack.c.l.b16 %v955
        %v1931 = vunpack.c.h.b16 %v955
        %v1932 = vunpack.c.l.b16 %v956
        %v1933 = vunpack.c.h.b16 %v956
        %v1934 = vunpack.c.l.b16 %v957
        %v1935 = vunpack.c.h.b16 %v957
        %v1936 = vunpack.c.l.b16 %v958
        %v1937 = vunpack.c.h.b16 %v958
        %v1938 = vunpack.c.l.b16 %v959
        %v1939 = vunpack.c.h.b16 %v959
        %v1940 = vunpack.c.l.b16 %v960
        %v1941 = vunpack.c.h.b16 %v960
        %v1942 = vunpack.c.l.b16 %v961
        %v1943 = vunpack.c.h.b16 %v961
        %v1944 = vunpack.c.l.b16 %v962
        %v1945 = vunpack.c.h.b16 %v962
        %v1946 = vunpack.c.l.b16 %v963
        %v1947 = vunpack.c.h.b16 %v963
        %v1948 = vunpack.c.l.b16 %v964
        %v1949 = vunpack.c.l.b16 %v965
        %v1950 = vunpack.c.h.b16 %v965
        %v1951 = vunpack.c.l.b16 %v966
        %v1952 = vunpack.c.h.b16 %v966
        %v1953 = vunpack.c.l.b16 %v967
        %v1954 = vunpack.c.h.b16 %v967
        %v1955 = vunpack.c.l.b16 %v968
        %v1956 = vunpack.c.h.b16 %v968
        %v1957 = vunpack.c.l.b16 %v969
        %v1958 = vunpack.c.h.b16 %v969
        %v1959 = vunpack.c.l.b16 %v970
        %v1960 = vunpack.c.h.b16 %v970
        %v1961 = vunpack.c.l.b16 %v971
        %v1962 = vunpack.c.h.b16 %v971
        %v1963 = vunpack.c.l.b16 %v972
        %v1964 = vunpack.c.h.b16 %v972
        %v1965 = vunpack.c.l.b16 %v973
        %v1966 = vunpack.c.h.b16 %v973
        %v1967 = vunpack.c.l.b16 %v974
        %v1968 = vunpack.c.h.b16 %v974
        %v1969 = vunpack.c.l.b16 %v975
        %v1970 = vunpack.c.h.b16 %v975
        %v1971 = vunpack.c.l.b16 %v976
        %v1972 = vunpack.c.h.b16 %v976
        %v1973 = vunpack.c.l.b16 %v977
        %v1974 = vunpack.c.l.b16 %v978
        %v1975 = vunpack.c.h.b16 %v978
        %v1976 = vunpack.c.l.b16 %v979
        %v1977 = vunpack.c.h.b16 %v979
        %v1978 = vunpack.c.l.b16 %v980
        %v1979 = vunpack.c.h.b16 %v980
        %v1980 = vunpack.c.l.b16 %v981
        %v1981 = vunpack.c.h.b16 %v981
        %v1982 = vunpack.c.l.b16 %v982
        %v1983 = vunpack.c.h.b16 %v982
        %v1984 = vunpack.c.l.b16 %v983
        %v1985 = vunpack.c.h.b16 %v983
        %v1986 = vunpack.c.l.b16 %v984
        %v1987 = vunpack.c.h.b16 %v984
        %v1988 = vunpack.c.l.b16 %v985
        %v1989 = vunpack.c.h.b16 %v985
        %v1990 = vunpack.c.l.b16 %v986
        %v1991 = vunpack.c.h.b16 %v986
        %v1992 = vunpack.c.l.b16 %v987
        %v1993 = vunpack.c.h.b16 %v987
        %v1994 = vunpack.c.l.b16 %v988
        %v1995 = vunpack.c.h.b16 %v988
        %v1996 = vunpack.c.l.b16 %v989
        %v1997 = vunpack.c.h.b16 %v989
        %v1998 = vunpack.c.l.b16 %v990
        %v1999 = vpack.c.b16 %v1624, %v1599
        %v2000 = vpack.c.b16 %v1625, %v1600
        %v2001 = vpack.c.b16 %v1626, %v1601
        %v2002 = vpack.c.b16 %v1627, %v1602
        %v2003 = vpack.c.b16 %v1628, %v1603
        %v2004 = vpack.c.b16 %v1629, %v1604
        %v2005 = vpack.c.b16 %v1630, %v1605
        %v2006 = vpack.c.b16 %v1631, %v1606
        %v2007 = vpack.c.b16 %v1632, %v1607
        %v2008 = vpack.c.b16 %v1633, %v1608
        %v2009 = vpack.c.b16 %v1634, %v1609
        %v2010 = vpack.c.b16 %v1635, %v1610
        %v2011 = vpack.c.b16 %v1636, %v1611
        %v2012 = vpack.c.b16 %v1637, %v1612
        %v2013 = vpack.c.b16 %v1638, %v1613
        %v2014 = vpack.c.b16 %v1639, %v1614
        %v2015 = vpack.c.b16 %v1640, %v1615
        %v2016 = vpack.c.b16 %v1641, %v1616
        %v2017 = vpack.c.b16 %v1642, %v1617
        %v2018 = vpack.c.b16 %v1643, %v1618
        %v2019 = vpack.c.b16 %v1644, %v1619
        %v2020 = vpack.c.b16 %v1645, %v1620
        %v2021 = vpack.c.b16 %v1646, %v1621
        %v2022 = vpack.c.b16 %v1647, %v1622
        %v2023 = vpack.c.b16 %v1648, %v1623
        %v2024 = vpack.c.b16 %v1674, %v1649
        %v2025 = vpack.c.b16 %v1675, %v1650
        %v2026 = vpack.c.b16 %v1676, %v1651
        %v2027 = vpack.c.b16 %v1677, %v1652
        %v2028 = vpack.c.b16 %v1678, %v1653
        %v2029 = vpack.c.b16 %v1679, %v1654
        %v2030 = vpack.c.b16 %v1680, %v1655
        %v2031 = vpack.c.b16 %v1681, %v1656
        %v2032 = vpack.c.b16 %v1682, %v1657
        %v2033 = vpack.c.b16 %v1683, %v1658
        %v2034 = vpack.c.b16 %v1684, %v1659
        %v2035 = vpack.c.b16 %v1685, %v1660
        %v2036 = vpack.c.b16 %v1686, %v1661
        %v2037 = vpack.c.b16 %v1687, %v1662
        %v2038 = vpack.c.b16 %v1688, %v1663
        %v2039 = vpack.c.b16 %v1689, %v1664
        %v2040 = vpack.c.b16 %v1690, %v1665
        %v2041 = vpack.c.b16 %v1691, %v1666
        %v2042 = vpack.c.b16 %v1692, %v1667
        %v2043 = vpack.c.b16 %v1693, %v1668
        %v2044 = vpack.c.b16 %v1694, %v1669
        %v2045 = vpack.c.b16 %v1695, %v1670
        %v2046 = vpack.c.b16 %v1696, %v1671
        %v2047 = vpack.c.b16 %v1697, %v1672
        %v2048 = vpack.c.b16 %v1698, %v1673
        %v2049 = vpack.c.b16 %v1724, %v1699
        %v2050 = vpack.c.b16 %v1725, %v1700
        %v2051 = vpack.c.b16 %v1726, %v1701
        %v2052 = vpack.c.b16 %v1727, %v1702
        %v2053 = vpack.c.b16 %v1728, %v1703
        %v2054 = vpack.c.b16 %v1729, %v1704
        %v2055 = vpack.c.b16 %v1730, %v1705
        %v2056 = vpack.c.b16 %v1731, %v1706
        %v2057 = vpack.c.b16 %v1732, %v1707
        %v2058 = vpack.c.b16 %v1733, %v1708
        %v2059 = vpack.c.b16 %v1734, %v1709
        %v2060 = vpack.c.b16 %v1735, %v1710
        %v2061 = vpack.c.b16 %v1736, %v1711
        %v2062 = vpack.c.b16 %v1737, %v1712
        %v2063 = vpack.c.b16 %v1738, %v1713
        %v2064 = vpack.c.b16 %v1739, %v1714
        %v2065 = vpack.c.b16 %v1740, %v1715
        %v2066 = vpack.c.b16 %v1741, %v1716
        %v2067 = vpack.c.b16 %v1742, %v1717
        %v2068 = vpack.c.b16 %v1743, %v1718
        %v2069 = vpack.c.b16 %v1744, %v1719
        %v2070 = vpack.c.b16 %v1745, %v1720
        %v2071 = vpack.c.b16 %v1746, %v1721
        %v2072 = vpack.c.b16 %v1747, %v1722
        %v2073 = vpack.c.b16 %v1748, %v1723
        %v2074 = vpack.c.b16 %v1774, %v1749
        %v2075 = vpack.c.b16 %v1775, %v1750
        %v2076 = vpack.c.b16 %v1776, %v1751
        %v2077 = vpack.c.b16 %v1777, %v1752
        %v2078 = vpack.c.b16 %v1778, %v1753
        %v2079 = vpack.c.b16 %v1779, %v1754
        %v2080 = vpack.c.b16 %v1780, %v1755
        %v2081 = vpack.c.b16 %v1781, %v1756
        %v2082 = vpack.c.b16 %v1782, %v1757
        %v2083 = vpack.c.b16 %v1783, %v1758
        %v2084 = vpack.c.b16 %v1784, %v1759
        %v2085 = vpack.c.b16 %v1785, %v1760
        %v2086 = vpack.c.b16 %v1786, %v1761
        %v2087 = vpack.c.b16 %v1787, %v1762
        %v2088 = vpack.c.b16 %v1788, %v1763
        %v2089 = vpack.c.b16 %v1789, %v1764
        %v2090 = vpack.c.b16 %v1790, %v1765
        %v2091 = vpack.c.b16 %v1791, %v1766
        %v2092 = vpack.c.b16 %v1792, %v1767
        %v2093 = vpack.c.b16 %v1793, %v1768
        %v2094 = vpack.c.b16 %v1794, %v1769
        %v2095 = vpack.c.b16 %v1795, %v1770
        %v2096 = vpack.c.b16 %v1796, %v1771
        %v2097 = vpack.c.b16 %v1797, %v1772
        %v2098 = vpack.c.b16 %v1798, %v1773
        %v2099 = vpack.c.b16 %v1824, %v1799
        %v2100 = vpack.c.b16 %v1825, %v1800
        %v2101 = vpack.c.b16 %v1826, %v1801
        %v2102 = vpack.c.b16 %v1827, %v1802
        %v2103 = vpack.c.b16 %v1828, %v1803
        %v2104 = vpack.c.b16 %v1829, %v1804
        %v2105 = vpack.c.b16 %v1830, %v1805
        %v2106 = vpack.c.b16 %v1831, %v1806
        %v2107 = vpack.c.b16 %v1832, %v1807
        %v2108 = vpack.c.b16 %v1833, %v1808
        %v2109 = vpack.c.b16 %v1834, %v1809
        %v2110 = vpack.c.b16 %v1835, %v1810
        %v2111 = vpack.c.b16 %v1836, %v1811
        %v2112 = vpack.c.b16 %v1837, %v1812
        %v2113 = vpack.c.b16 %v1838, %v1813
        %v2114 = vpack.c.b16 %v1839, %v1814
        %v2115 = vpack.c.b16 %v1840, %v1815
        %v2116 = vpack.c.b16 %v1841, %v1816
        %v2117 = vpack.c.b16 %v1842, %v1817
        %v2118 = vpack.c.b16 %v1843, %v1818
        %v2119 = vpack.c.b16 %v1844, %v1819
        %v2120 = vpack.c.b16 %v1845, %v1820
        %v2121 = vpack.c.b16 %v1846, %v1821
        %v2122 = vpack.c.b16 %v1847, %v1822
        %v2123 = vpack.c.b16 %v1848, %v1823
        %v2124 = vpack.c.b16 %v1874, %v1849
        %v2125 = vpack.c.b16 %v1875, %v1850
        %v2126 = vpack.c.b16 %v1876, %v1851
        %v2127 = vpack.c.b16 %v1877, %v1852
        %v2128 = vpack.c.b16 %v1878, %v1853
        %v2129 = vpack.c.b16 %v1879, %v1854
        %v2130 = vpack.c.b16 %v1880, %v1855
        %v2131 = vpack.c.b16 %v1881, %v1856
        %v2132 = vpack.c.b16 %v1882, %v1857
        %v2133 = vpack.c.b16 %v1883, %v1858
        %v2134 = vpack.c.b16 %v1884, %v1859
        %v2135 = vpack.c.b16 %v1885, %v1860
        %v2136 = vpack.c.b16 %v1886, %v1861
        %v2137 = vpack.c.b16 %v1887, %v1862
        %v2138 = vpack.c.b16 %v1888, %v1863
        %v2139 = vpack.c.b16 %v1889, %v1864
        %v2140 = vpack.c.b16 %v1890, %v1865
        %v2141 = vpack.c.b16 %v1891, %v1866
        %v2142 = vpack.c.b16 %v1892, %v1867
        %v2143 = vpack.c.b16 %v1893, %v1868
        %v2144 = vpack.c.b16 %v1894, %v1869
        %v2145 = vpack.c.b16 %v1895, %v1870
        %v2146 = vpack.c.b16 %v1896, %v1871
        %v2147 = vpack.c.b16 %v1897, %v1872
        %v2148 = vpack.c.b16 %v1898, %v1873
        %v2149 = vpack.c.b16 %v1924, %v1899
        %v2150 = vpack.c.b16 %v1925, %v1900
        %v2151 = vpack.c.b16 %v1926, %v1901
        %v2152 = vpack.c.b16 %v1927, %v1902
        %v2153 = vpack.c.b16 %v1928, %v1903
        %v2154 = vpack.c.b16 %v1929, %v1904
        %v2155 = vpack.c.b16 %v1930, %v1905
        %v2156 = vpack.c.b16 %v1931, %v1906
        %v2157 = vpack.c.b16 %v1932, %v1907
        %v2158 = vpack.c.b16 %v1933, %v1908
        %v2159 = vpack.c.b16 %v1934, %v1909
        %v2160 = vpack.c.b16 %v1935, %v1910
        %v2161 = vpack.c.b16 %v1936, %v1911
        %v2162 = vpack.c.b16 %v1937, %v1912
        %v2163 = vpack.c.b16 %v1938, %v1913
        %v2164 = vpack.c.b16 %v1939, %v1914
        %v2165 = vpack.c.b16 %v1940, %v1915
        %v2166 = vpack.c.b16 %v1941, %v1916
        %v2167 = vpack.c.b16 %v1942, %v1917
        %v2168 = vpack.c.b16 %v1943, %v1918
        %v2169 = vpack.c.b16 %v1944, %v1919
        %v2170 = vpack.c.b16 %v1945, %v1920
        %v2171 = vpack.c.b16 %v1946, %v1921
        %v2172 = vpack.c.b16 %v1947, %v1922
        %v2173 = vpack.c.b16 %v1948, %v1923
        %v2174 = vpack.c.b16 %v1974, %v1949
        %v2175 = vpack.c.b16 %v1975, %v1950
        %v2176 = vpack.c.b16 %v1976, %v1951
        %v2177 = vpack.c.b16 %v1977, %v1952
        %v2178 = vpack.c.b16 %v1978, %v1953
        %v2179 = vpack.c.b16 %v1979, %v1954
        %v2180 = vpack.c.b16 %v1980, %v1955
        %v2181 = vpack.c.b16 %v1981, %v1956
        %v2182 = vpack.c.b16 %v1982, %v1957
        %v2183 = vpack.c.b16 %v1983, %v1958
        %v2184 = vpack.c.b16 %v1984, %v1959
        %v2185 = vpack.c.b16 %v1985, %v1960
        %v2186 = vpack.c.b16 %v1986, %v1961
        %v2187 = vpack.c.b16 %v1987, %v1962
        %v2188 = vpack.c.b16 %v1988, %v1963
        %v2189 = vpack.c.b16 %v1989, %v1964
        %v2190 = vpack.c.b16 %v1990, %v1965
        %v2191 = vpack.c.b16 %v1991, %v1966
        %v2192 = vpack.c.b16 %v1992, %v1967
        %v2193 = vpack.c.b16 %v1993, %v1968
        %v2194 = vpack.c.b16 %v1994, %v1969
        %v2195 = vpack.c.b16 %v1995, %v1970
        %v2196 = vpack.c.b16 %v1996, %v1971
        %v2197 = vpack.c.b16 %v1997, %v1972
        %v2198 = vpack.c.b16 %v1998, %v1973
        %v2799 = vunpack.c.l.b16 %v991
        %v2800 = vunpack.c.h.b16 %v991
        %v2801 = vunpack.c.l.b16 %v992
        %v2802 = vunpack.c.h.b16 %v992
        %v2803 = vunpack.c.l.b16 %v993
        %v2804 = vunpack.c.h.b16 %v993
        %v2805 = vunpack.c.l.b16 %v994
        %v2806 = vunpack.c.h.b16 %v994
        %v2807 = vunpack.c.l.b16 %v995
        %v2808 = vunpack.c.h.b16 %v995
        %v2809 = vunpack.c.l.b16 %v996
        %v2810 = vunpack.c.h.b16 %v996
        %v2811 = vunpack.c.l.b16 %v997
        %v2812 = vunpack.c.h.b16 %v997
        %v2813 = vunpack.c.l.b16 %v998
        %v2814 = vunpack.c.h.b16 %v998
        %v2815 = vunpack.c.l.b16 %v999
        %v2816 = vunpack.c.h.b16 %v999
        %v2817 = vunpack.c.l.b16 %v1000
        %v2818 = vunpack.c.h.b16 %v1000
        %v2819 = vunpack.c.l.b16 %v1001
        %v2820 = vunpack.c.h.b16 %v1001
        %v2821 = vunpack.c.l.b16 %v1002
        %v2822 = vunpack.c.h.b16 %v1002
        %v2823 = vunpack.c.l.b16 %v1003
        %v2824 = vunpack.c.h.b16 %v1003
        %v2825 = vunpack.c.l.b16 %v1004
        %v2826 = vunpack.c.h.b16 %v1004
        %v2827 = vunpack.c.l.b16 %v1005
        %v2828 = vunpack.c.h.b16 %v1005
        %v2829 = vunpack.c.l.b16 %v1006
        %v2830 = vunpack.c.h.b16 %v1006
        %v2831 = vunpack.c.l.b16 %v1007
        %v2832 = vunpack.c.h.b16 %v1007
        %v2833 = vunpack.c.l.b16 %v1008
        %v2834 = vunpack.c.h.b16 %v1008
        %v2835 = vunpack.c.l.b16 %v1009
        %v2836 = vunpack.c.h.b16 %v1009
        %v2837 = vunpack.c.l.b16 %v1010
        %v2838 = vunpack.c.h.b16 %v1010
        %v2839 = vunpack.c.l.b16 %v1011
        %v2840 = vunpack.c.h.b16 %v1011
        %v2841 = vunpack.c.l.b16 %v1012
        %v2842 = vunpack.c.h.b16 %v1012
        %v2843 = vunpack.c.l.b16 %v1013
        %v2844 = vunpack.c.h.b16 %v1013
        %v2845 = vunpack.c.l.b16 %v1014
        %v2846 = vunpack.c.h.b16 %v1014
        %v2847 = vunpack.c.l.b16 %v1015
        %v2848 = vunpack.c.h.b16 %v1015
        %v2849 = vunpack.c.l.b16 %v1016
        %v2850 = vunpack.c.h.b16 %v1016
        %v2851 = vunpack.c.l.b16 %v1017
        %v2852 = vunpack.c.h.b16 %v1017
        %v2853 = vunpack.c.l.b16 %v1018
        %v2854 = vunpack.c.h.b16 %v1018
        %v2855 = vunpack.c.l.b16 %v1019
        %v2856 = vunpack.c.h.b16 %v1019
        %v2857 = vunpack.c.l.b16 %v1020
        %v2858 = vunpack.c.h.b16 %v1020
        %v2859 = vunpack.c.l.b16 %v1021
        %v2860 = vunpack.c.h.b16 %v1021
        %v2861 = vunpack.c.l.b16 %v1022
        %v2862 = vunpack.c.h.b16 %v1022
        %v2863 = vunpack.c.l.b16 %v1023
        %v2864 = vunpack.c.h.b16 %v1023
        %v2865 = vunpack.c.l.b16 %v1024
        %v2866 = vunpack.c.h.b16 %v1024
        %v2867 = vunpack.c.l.b16 %v1025
        %v2868 = vunpack.c.h.b16 %v1025
        %v2869 = vunpack.c.l.b16 %v1026
        %v2870 = vunpack.c.h.b16 %v1026
        %v2871 = vunpack.c.l.b16 %v1027
        %v2872 = vunpack.c.h.b16 %v1027
        %v2873 = vunpack.c.l.b16 %v1028
        %v2874 = vunpack.c.h.b16 %v1028
        %v2875 = vunpack.c.l.b16 %v1029
        %v2876 = vunpack.c.h.b16 %v1029
        %v2877 = vunpack.c.l.b16 %v1030
        %v2878 = vunpack.c.h.b16 %v1030
        %v2879 = vunpack.c.l.b16 %v1031
        %v2880 = vunpack.c.h.b16 %v1031
        %v2881 = vunpack.c.l.b16 %v1032
        %v2882 = vunpack.c.h.b16 %v1032
        %v2883 = vunpack.c.l.b16 %v1033
        %v2884 = vunpack.c.h.b16 %v1033
        %v2885 = vunpack.c.l.b16 %v1034
        %v2886 = vunpack.c.h.b16 %v1034
        %v2887 = vunpack.c.l.b16 %v1035
        %v2888 = vunpack.c.h.b16 %v1035
        %v2889 = vunpack.c.l.b16 %v1036
        %v2890 = vunpack.c.h.b16 %v1036
        %v2891 = vunpack.c.l.b16 %v1037
        %v2892 = vunpack.c.h.b16 %v1037
        %v2893 = vunpack.c.l.b16 %v1038
        %v2894 = vunpack.c.h.b16 %v1038
        %v2895 = vunpack.c.l.b16 %v1039
        %v2896 = vunpack.c.h.b16 %v1039
        %v2897 = vunpack.c.l.b16 %v1040
        %v2898 = vunpack.c.h.b16 %v1040
        %v2899 = vunpack.c.l.b16 %v1041
        %v2900 = vunpack.c.h.b16 %v1041
        %v2901 = vunpack.c.l.b16 %v1042
        %v2902 = vunpack.c.h.b16 %v1042
        %v2903 = vunpack.c.l.b16 %v1043
        %v2904 = vunpack.c.h.b16 %v1043
        %v2905 = vunpack.c.l.b16 %v1044
        %v2906 = vunpack.c.h.b16 %v1044
        %v2907 = vunpack.c.l.b16 %v1045
        %v2908 = vunpack.c.h.b16 %v1045
        %v2909 = vunpack.c.l.b16 %v1046
        %v2910 = vunpack.c.h.b16 %v1046
        %v2911 = vunpack.c.l.b16 %v1047
        %v2912 = vunpack.c.h.b16 %v1047
        %v2913 = vunpack.c.l.b16 %v1048
        %v2914 = vunpack.c.h.b16 %v1048
        %v2915 = vunpack.c.l.b16 %v1049
        %v2916 = vunpack.c.h.b16 %v1049
        %v2917 = vunpack.c.l.b16 %v1050
        %v2918 = vunpack.c.h.b16 %v1050
        %v2919 = vunpack.c.l.b16 %v1051
        %v2920 = vunpack.c.h.b16 %v1051
        %v2921 = vunpack.c.l.b16 %v1052
        %v2922 = vunpack.c.h.b16 %v1052
        %v2923 = vunpack.c.l.b16 %v1053
        %v2924 = vunpack.c.h.b16 %v1053
        %v2925 = vunpack.c.l.b16 %v1054
        %v2926 = vunpack.c.h.b16 %v1054
        %v2927 = vunpack.c.l.b16 %v1055
        %v2928 = vunpack.c.h.b16 %v1055
        %v2929 = vunpack.c.l.b16 %v1056
        %v2930 = vunpack.c.h.b16 %v1056
        %v2931 = vunpack.c.l.b16 %v1057
        %v2932 = vunpack.c.h.b16 %v1057
        %v2933 = vunpack.c.l.b16 %v1058
        %v2934 = vunpack.c.h.b16 %v1058
        %v2935 = vunpack.c.l.b16 %v1059
        %v2936 = vunpack.c.h.b16 %v1059
        %v2937 = vunpack.c.l.b16 %v1060
        %v2938 = vunpack.c.h.b16 %v1060
        %v2939 = vunpack.c.l.b16 %v1061
        %v2940 = vunpack.c.h.b16 %v1061
        %v2941 = vunpack.c.l.b16 %v1062
        %v2942 = vunpack.c.h.b16 %v1062
        %v2943 = vunpack.c.l.b16 %v1063
        %v2944 = vunpack.c.h.b16 %v1063
        %v2945 = vunpack.c.l.b16 %v1064
        %v2946 = vunpack.c.h.b16 %v1064
        %v2947 = vunpack.c.l.b16 %v1065
        %v2948 = vunpack.c.h.b16 %v1065
        %v2949 = vunpack.c.l.b16 %v1066
        %v2950 = vunpack.c.h.b16 %v1066
        %v2951 = vunpack.c.l.b16 %v1067
        %v2952 = vunpack.c.h.b16 %v1067
        %v2953 = vunpack.c.l.b16 %v1068
        %v2954 = vunpack.c.h.b16 %v1068
        %v2955 = vunpack.c.l.b16 %v1069
        %v2956 = vunpack.c.h.b16 %v1069
        %v2957 = vunpack.c.l.b16 %v1070
        %v2958 = vunpack.c.h.b16 %v1070
        %v2959 = vunpack.c.l.b16 %v1071
        %v2960 = vunpack.c.h.b16 %v1071
        %v2961 = vunpack.c.l.b16 %v1072
        %v2962 = vunpack.c.h.b16 %v1072
        %v2963 = vunpack.c.l.b16 %v1073
        %v2964 = vunpack.c.h.b16 %v1073
        %v2965 = vunpack.c.l.b16 %v1074
        %v2966 = vunpack.c.h.b16 %v1074
        %v2967 = vunpack.c.l.b16 %v1075
        %v2968 = vunpack.c.h.b16 %v1075
        %v2969 = vunpack.c.l.b16 %v1076
        %v2970 = vunpack.c.h.b16 %v1076
        %v2971 = vunpack.c.l.b16 %v1077
        %v2972 = vunpack.c.h.b16 %v1077
        %v2973 = vunpack.c.l.b16 %v1078
        %v2974 = vunpack.c.h.b16 %v1078
        %v2975 = vunpack.c.l.b16 %v1079
        %v2976 = vunpack.c.h.b16 %v1079
        %v2977 = vunpack.c.l.b16 %v1080
        %v2978 = vunpack.c.h.b16 %v1080
        %v2979 = vunpack.c.l.b16 %v1081
        %v2980 = vunpack.c.h.b16 %v1081
        %v2981 = vunpack.c.l.b16 %v1082
        %v2982 = vunpack.c.h.b16 %v1082
        %v2983 = vunpack.c.l.b16 %v1083
        %v2984 = vunpack.c.h.b16 %v1083
        %v2985 = vunpack.c.l.b16 %v1084
        %v2986 = vunpack.c.h.b16 %v1084
        %v2987 = vunpack.c.l.b16 %v1085
        %v2988 = vunpack.c.h.b16 %v1085
        %v2989 = vunpack.c.l.b16 %v1086
        %v2990 = vunpack.c.h.b16 %v1086
        %v2991 = vunpack.c.l.b16 %v1087
        %v2992 = vunpack.c.h.b16 %v1087
        %v2993 = vunpack.c.l.b16 %v1088
        %v2994 = vunpack.c.h.b16 %v1088
        %v2995 = vunpack.c.l.b16 %v1089
        %v2996 = vunpack.c.h.b16 %v1089
        %v2997 = vunpack.c.l.b16 %v1090
        %v2998 = vunpack.c.h.b16 %v1090
        %v2999 = vunpack.c.l.b16 %v1091
        %v3000 = vunpack.c.h.b16 %v1091
        %v3001 = vunpack.c.l.b16 %v1092
        %v3002 = vunpack.c.h.b16 %v1092
        %v3003 = vunpack.c.l.b16 %v1093
        %v3004 = vunpack.c.h.b16 %v1093
        %v3005 = vunpack.c.l.b16 %v1094
        %v3006 = vunpack.c.h.b16 %v1094
        %v3007 = vunpack.c.l.b16 %v1095
        %v3008 = vunpack.c.h.b16 %v1095
        %v3009 = vunpack.c.l.b16 %v1096
        %v3010 = vunpack.c.h.b16 %v1096
        %v3011 = vunpack.c.l.b16 %v1097
        %v3012 = vunpack.c.h.b16 %v1097
        %v3013 = vunpack.c.l.b16 %v1098
        %v3014 = vunpack.c.h.b16 %v1098
        %v3015 = vunpack.c.l.b16 %v1099
        %v3016 = vunpack.c.h.b16 %v1099
        %v3017 = vunpack.c.l.b16 %v1100
        %v3018 = vunpack.c.h.b16 %v1100
        %v3019 = vunpack.c.l.b16 %v1101
        %v3020 = vunpack.c.h.b16 %v1101
        %v3021 = vunpack.c.l.b16 %v1102
        %v3022 = vunpack.c.h.b16 %v1102
        %v3023 = vunpack.c.l.b16 %v1103
        %v3024 = vunpack.c.h.b16 %v1103
        %v3025 = vunpack.c.l.b16 %v1104
        %v3026 = vunpack.c.h.b16 %v1104
        %v3027 = vunpack.c.l.b16 %v1105
        %v3028 = vunpack.c.h.b16 %v1105
        %v3029 = vunpack.c.l.b16 %v1106
        %v3030 = vunpack.c.h.b16 %v1106
        %v3031 = vunpack.c.l.b16 %v1107
        %v3032 = vunpack.c.h.b16 %v1107
        %v3033 = vunpack.c.l.b16 %v1108
        %v3034 = vunpack.c.h.b16 %v1108
        %v3035 = vunpack.c.l.b16 %v1109
        %v3036 = vunpack.c.h.b16 %v1109
        %v3037 = vunpack.c.l.b16 %v1110
        %v3038 = vunpack.c.h.b16 %v1110
        %v3039 = vunpack.c.l.b16 %v1111
        %v3040 = vunpack.c.h.b16 %v1111
        %v3041 = vunpack.c.l.b16 %v1112
        %v3042 = vunpack.c.h.b16 %v1112
        %v3043 = vunpack.c.l.b16 %v1113
        %v3044 = vunpack.c.h.b16 %v1113
        %v3045 = vunpack.c.l.b16 %v1114
        %v3046 = vunpack.c.h.b16 %v1114
        %v3047 = vunpack.c.l.b16 %v1115
        %v3048 = vunpack.c.h.b16 %v1115
        %v3049 = vunpack.c.l.b16 %v1116
        %v3050 = vunpack.c.h.b16 %v1116
        %v3051 = vunpack.c.l.b16 %v1117
        %v3052 = vunpack.c.h.b16 %v1117
        %v3053 = vunpack.c.l.b16 %v1118
        %v3054 = vunpack.c.h.b16 %v1118
        %v3055 = vunpack.c.l.b16 %v1119
        %v3056 = vunpack.c.h.b16 %v1119
        %v3057 = vunpack.c.l.b16 %v1120
        %v3058 = vunpack.c.h.b16 %v1120
        %v3059 = vunpack.c.l.b16 %v1121
        %v3060 = vunpack.c.h.b16 %v1121
        %v3061 = vunpack.c.l.b16 %v1122
        %v3062 = vunpack.c.h.b16 %v1122
        %v3063 = vunpack.c.l.b16 %v1123
        %v3064 = vunpack.c.h.b16 %v1123
        %v3065 = vunpack.c.l.b16 %v1124
        %v3066 = vunpack.c.h.b16 %v1124
        %v3067 = vunpack.c.l.b16 %v1125
        %v3068 = vunpack.c.h.b16 %v1125
        %v3069 = vunpack.c.l.b16 %v1126
        %v3070 = vunpack.c.h.b16 %v1126
        %v3071 = vunpack.c.l.b16 %v1127
        %v3072 = vunpack.c.h.b16 %v1127
        %v3073 = vunpack.c.l.b16 %v1128
        %v3074 = vunpack.c.h.b16 %v1128
        %v3075 = vunpack.c.l.b16 %v1129
        %v3076 = vunpack.c.h.b16 %v1129
        %v3077 = vunpack.c.l.b16 %v1130
        %v3078 = vunpack.c.h.b16 %v1130
        %v3079 = vunpack.c.l.b16 %v1131
        %v3080 = vunpack.c.h.b16 %v1131
        %v3081 = vunpack.c.l.b16 %v1132
        %v3082 = vunpack.c.h.b16 %v1132
        %v3083 = vunpack.c.l.b16 %v1133
        %v3084 = vunpack.c.h.b16 %v1133
        %v3085 = vunpack.c.l.b16 %v1134
        %v3086 = vunpack.c.h.b16 %v1134
        %v3087 = vunpack.c.l.b16 %v1135
        %v3088 = vunpack.c.h.b16 %v1135
        %v3089 = vunpack.c.l.b16 %v1136
        %v3090 = vunpack.c.h.b16 %v1136
        %v3091 = vunpack.c.l.b16 %v1137
        %v3092 = vunpack.c.h.b16 %v1137
        %v3093 = vunpack.c.l.b16 %v1138
        %v3094 = vunpack.c.h.b16 %v1138
        %v3095 = vunpack.c.l.b16 %v1139
        %v3096 = vunpack.c.h.b16 %v1139
        %v3097 = vunpack.c.l.b16 %v1140
        %v3098 = vunpack.c.h.b16 %v1140
        %v3099 = vunpack.c.l.b16 %v1141
        %v3100 = vunpack.c.h.b16 %v1141
        %v3101 = vunpack.c.l.b16 %v1142
        %v3102 = vunpack.c.h.b16 %v1142
        %v3103 = vunpack.c.l.b16 %v1143
        %v3104 = vunpack.c.h.b16 %v1143
        %v3105 = vunpack.c.l.b16 %v1144
        %v3106 = vunpack.c.h.b16 %v1144
        %v3107 = vunpack.c.l.b16 %v1145
        %v3108 = vunpack.c.h.b16 %v1145
        %v3109 = vunpack.c.l.b16 %v1146
        %v3110 = vunpack.c.h.b16 %v1146
        %v3111 = vunpack.c.l.b16 %v1147
        %v3112 = vunpack.c.h.b16 %v1147
        %v3113 = vunpack.c.l.b16 %v1148
        %v3114 = vunpack.c.h.b16 %v1148
        %v3115 = vunpack.c.l.b16 %v1149
        %v3116 = vunpack.c.h.b16 %v1149
        %v3117 = vunpack.c.l.b16 %v1150
        %v3118 = vunpack.c.h.b16 %v1150
        %v3119 = vunpack.c.l.b16 %v1151
        %v3120 = vunpack.c.h.b16 %v1151
        %v3121 = vunpack.c.l.b16 %v1152
        %v3122 = vunpack.c.h.b16 %v1152
        %v3123 = vunpack.c.l.b16 %v1153
        %v3124 = vunpack.c.h.b16 %v1153
        %v3125 = vunpack.c.l.b16 %v1154
        %v3126 = vunpack.c.h.b16 %v1154
        %v3127 = vunpack.c.l.b16 %v1155
        %v3128 = vunpack.c.h.b16 %v1155
        %v3129 = vunpack.c.l.b16 %v1156
        %v3130 = vunpack.c.h.b16 %v1156
        %v3131 = vunpack.c.l.b16 %v1157
        %v3132 = vunpack.c.h.b16 %v1157
        %v3133 = vunpack.c.l.b16 %v1158
        %v3134 = vunpack.c.h.b16 %v1158
        %v3135 = vunpack.c.l.b16 %v1159
        %v3136 = vunpack.c.h.b16 %v1159
        %v3137 = vunpack.c.l.b16 %v1160
        %v3138 = vunpack.c.h.b16 %v1160
        %v3139 = vunpack.c.l.b16 %v1161
        %v3140 = vunpack.c.h.b16 %v1161
        %v3141 = vunpack.c.l.b16 %v1162
        %v3142 = vunpack.c.h.b16 %v1162
        %v3143 = vunpack.c.l.b16 %v1163
        %v3144 = vunpack.c.h.b16 %v1163
        %v3145 = vunpack.c.l.b16 %v1164
        %v3146 = vunpack.c.h.b16 %v1164
        %v3147 = vunpack.c.l.b16 %v1165
        %v3148 = vunpack.c.h.b16 %v1165
        %v3149 = vunpack.c.l.b16 %v1166
        %v3150 = vunpack.c.h.b16 %v1166
        %v3151 = vunpack.c.l.b16 %v1167
        %v3152 = vunpack.c.h.b16 %v1167
        %v3153 = vunpack.c.l.b16 %v1168
        %v3154 = vunpack.c.h.b16 %v1168
        %v3155 = vunpack.c.l.b16 %v1169
        %v3156 = vunpack.c.h.b16 %v1169
        %v3157 = vunpack.c.l.b16 %v1170
        %v3158 = vunpack.c.h.b16 %v1170
        %v3159 = vunpack.c.l.b16 %v1171
        %v3160 = vunpack.c.h.b16 %v1171
        %v3161 = vunpack.c.l.b16 %v1172
        %v3162 = vunpack.c.h.b16 %v1172
        %v3163 = vunpack.c.l.b16 %v1173
        %v3164 = vunpack.c.h.b16 %v1173
        %v3165 = vunpack.c.l.b16 %v1174
        %v3166 = vunpack.c.h.b16 %v1174
        %v3167 = vunpack.c.l.b16 %v1175
        %v3168 = vunpack.c.h.b16 %v1175
        %v3169 = vunpack.c.l.b16 %v1176
        %v3170 = vunpack.c.h.b16 %v1176
        %v3171 = vunpack.c.l.b16 %v1177
        %v3172 = vunpack.c.h.b16 %v1177
        %v3173 = vunpack.c.l.b16 %v1178
        %v3174 = vunpack.c.h.b16 %v1178
        %v3175 = vunpack.c.l.b16 %v1179
        %v3176 = vunpack.c.h.b16 %v1179
        %v3177 = vunpack.c.l.b16 %v1180
        %v3178 = vunpack.c.h.b16 %v1180
        %v3179 = vunpack.c.l.b16 %v1181
        %v3180 = vunpack.c.h.b16 %v1181
        %v3181 = vunpack.c.l.b16 %v1182
        %v3182 = vunpack.c.h.b16 %v1182
        %v3183 = vunpack.c.l.b16 %v1183
        %v3184 = vunpack.c.h.b16 %v1183
        %v3185 = vunpack.c.l.b16 %v1184
        %v3186 = vunpack.c.h.b16 %v1184
        %v3187 = vunpack.c.l.b16 %v1185
        %v3188 = vunpack.c.h.b16 %v1185
        %v3189 = vunpack.c.l.b16 %v1186
        %v3190 = vunpack.c.h.b16 %v1186
        %v3191 = vunpack.c.l.b16 %v1187
        %v3192 = vunpack.c.h.b16 %v1187
        %v3193 = vunpack.c.l.b16 %v1188
        %v3194 = vunpack.c.h.b16 %v1188
        %v3195 = vunpack.c.l.b16 %v1189
        %v3196 = vunpack.c.h.b16 %v1189
        %v3197 = vunpack.c.l.b16 %v1190
        %v3198 = vunpack.c.h.b16 %v1190
        %v3199 = vunpack.c.l.b16 %v1191
        %v3200 = vunpack.c.h.b16 %v1191
        %v3201 = vunpack.c.l.b16 %v1192
        %v3202 = vunpack.c.h.b16 %v1192
        %v3203 = vunpack.c.l.b16 %v1193
        %v3204 = vunpack.c.h.b16 %v1193
        %v3205 = vunpack.c.l.b16 %v1194
        %v3206 = vunpack.c.h.b16 %v1194
        %v3207 = vunpack.c.l.b16 %v1195
        %v3208 = vunpack.c.h.b16 %v1195
        %v3209 = vunpack.c.l.b16 %v1196
        %v3210 = vunpack.c.h.b16 %v1196
        %v3211 = vunpack.c.l.b16 %v1197
        %v3212 = vunpack.c.h.b16 %v1197
        %v3213 = vunpack.c.l.b16 %v1198
        %v3214 = vunpack.c.h.b16 %v1198
        %v3215 = vunpack.c.l.b16 %v1199
        %v3216 = vunpack.c.h.b16 %v1199
        %v3217 = vunpack.c.l.b16 %v1200
        %v3218 = vunpack.c.h.b16 %v1200
        %v3219 = vunpack.c.l.b16 %v1201
        %v3220 = vunpack.c.h.b16 %v1201
        %v3221 = vunpack.c.l.b16 %v1202
        %v3222 = vunpack.c.h.b16 %v1202
        %v3223 = vunpack.c.l.b16 %v1203
        %v3224 = vunpack.c.h.b16 %v1203
        %v3225 = vunpack.c.l.b16 %v1204
        %v3226 = vunpack.c.h.b16 %v1204
        %v3227 = vunpack.c.l.b16 %v1205
        %v3228 = vunpack.c.h.b16 %v1205
        %v3229 = vunpack.c.l.b16 %v1206
        %v3230 = vunpack.c.h.b16 %v1206
        %v3231 = vunpack.c.l.b16 %v1207
        %v3232 = vunpack.c.h.b16 %v1207
        %v3233 = vunpack.c.l.b16 %v1208
        %v3234 = vunpack.c.h.b16 %v1208
        %v3235 = vunpack.c.l.b16 %v1209
        %v3236 = vunpack.c.h.b16 %v1209
        %v3237 = vunpack.c.l.b16 %v1210
        %v3238 = vunpack.c.h.b16 %v1210
        %v3239 = vunpack.c.l.b16 %v1211
        %v3240 = vunpack.c.h.b16 %v1211
        %v3241 = vunpack.c.l.b16 %v1212
        %v3242 = vunpack.c.h.b16 %v1212
        %v3243 = vunpack.c.l.b16 %v1213
        %v3244 = vunpack.c.h.b16 %v1213
        %v3245 = vunpack.c.l.b16 %v1214
        %v3246 = vunpack.c.h.b16 %v1214
        %v3247 = vunpack.c.l.b16 %v1215
        %v3248 = vunpack.c.h.b16 %v1215
        %v3249 = vunpack.c.l.b16 %v1216
        %v3250 = vunpack.c.h.b16 %v1216
        %v3251 = vunpack.c.l.b16 %v1217
        %v3252 = vunpack.c.h.b16 %v1217
        %v3253 = vunpack.c.l.b16 %v1218
        %v3254 = vunpack.c.h.b16 %v1218
        %v3255 = vunpack.c.l.b16 %v1219
        %v3256 = vunpack.c.h.b16 %v1219
        %v3257 = vunpack.c.l.b16 %v1220
        %v3258 = vunpack.c.h.b16 %v1220
        %v3259 = vunpack.c.l.b16 %v1221
        %v3260 = vunpack.c.h.b16 %v1221
        %v3261 = vunpack.c.l.b16 %v1222
        %v3262 = vunpack.c.h.b16 %v1222
        %v3263 = vunpack.c.l.b16 %v1223
        %v3264 = vunpack.c.h.b16 %v1223
        %v3265 = vunpack.c.l.b16 %v1224
        %v3266 = vunpack.c.h.b16 %v1224
        %v3267 = vunpack.c.l.b16 %v1225
        %v3268 = vunpack.c.h.b16 %v1225
        %v3269 = vunpack.c.l.b16 %v1226
        %v3270 = vunpack.c.h.b16 %v1226
        %v3271 = vunpack.c.l.b16 %v1227
        %v3272 = vunpack.c.h.b16 %v1227
        %v3273 = vunpack.c.l.b16 %v1228
        %v3274 = vunpack.c.h.b16 %v1228
        %v3275 = vunpack.c.l.b16 %v1229
        %v3276 = vunpack.c.h.b16 %v1229
        %v3277 = vunpack.c.l.b16 %v1230
        %v3278 = vunpack.c.h.b16 %v1230
        %v3279 = vunpack.c.l.b16 %v1231
        %v3280 = vunpack.c.h.b16 %v1231
        %v3281 = vunpack.c.l.b16 %v1232
        %v3282 = vunpack.c.h.b16 %v1232
        %v3283 = vunpack.c.l.b16 %v1233
        %v3284 = vunpack.c.h.b16 %v1233
        %v3285 = vunpack.c.l.b16 %v1234
        %v3286 = vunpack.c.h.b16 %v1234
        %v3287 = vunpack.c.l.b16 %v1235
        %v3288 = vunpack.c.h.b16 %v1235
        %v3289 = vunpack.c.l.b16 %v1236
        %v3290 = vunpack.c.h.b16 %v1236
        %v3291 = vunpack.c.l.b16 %v1237
        %v3292 = vunpack.c.h.b16 %v1237
        %v3293 = vunpack.c.l.b16 %v1238
        %v3294 = vunpack.c.h.b16 %v1238
        %v3295 = vunpack.c.l.b16 %v1239
        %v3296 = vunpack.c.h.b16 %v1239
        %v3297 = vunpack.c.l.b16 %v1240
        %v3298 = vunpack.c.h.b16 %v1240
        %v3299 = vunpack.c.l.b16 %v1241
        %v3300 = vunpack.c.h.b16 %v1241
        %v3301 = vunpack.c.l.b16 %v1242
        %v3302 = vunpack.c.h.b16 %v1242
        %v3303 = vunpack.c.l.b16 %v1243
        %v3304 = vunpack.c.h.b16 %v1243
        %v3305 = vunpack.c.l.b16 %v1244
        %v3306 = vunpack.c.h.b16 %v1244
        %v3307 = vunpack.c.l.b16 %v1245
        %v3308 = vunpack.c.h.b16 %v1245
        %v3309 = vunpack.c.l.b16 %v1246
        %v3310 = vunpack.c.h.b16 %v1246
        %v3311 = vunpack.c.l.b16 %v1247
        %v3312 = vunpack.c.h.b16 %v1247
        %v3313 = vunpack.c.l.b16 %v1248
        %v3314 = vunpack.c.h.b16 %v1248
        %v3315 = vunpack.c.l.b16 %v1249
        %v3316 = vunpack.c.h.b16 %v1249
        %v3317 = vunpack.c.l.b16 %v1250
        %v3318 = vunpack.c.h.b16 %v1250
        %v3319 = vunpack.c.l.b16 %v1251
        %v3320 = vunpack.c.h.b16 %v1251
        %v3321 = vunpack.c.l.b16 %v1252
        %v3322 = vunpack.c.h.b16 %v1252
        %v3323 = vunpack.c.l.b16 %v1253
        %v3324 = vunpack.c.h.b16 %v1253
        %v3325 = vunpack.c.l.b16 %v1254
        %v3326 = vunpack.c.h.b16 %v1254
        %v3327 = vunpack.c.l.b16 %v1255
        %v3328 = vunpack.c.h.b16 %v1255
        %v3329 = vunpack.c.l.b16 %v1256
        %v3330 = vunpack.c.h.b16 %v1256
        %v3331 = vunpack.c.l.b16 %v1257
        %v3332 = vunpack.c.h.b16 %v1257
        %v3333 = vunpack.c.l.b16 %v1258
        %v3334 = vunpack.c.h.b16 %v1258
        %v3335 = vunpack.c.l.b16 %v1259
        %v3336 = vunpack.c.h.b16 %v1259
        %v3337 = vunpack.c.l.b16 %v1260
        %v3338 = vunpack.c.h.b16 %v1260
        %v3339 = vunpack.c.l.b16 %v1261
        %v3340 = vunpack.c.h.b16 %v1261
        %v3341 = vunpack.c.l.b16 %v1262
        %v3342 = vunpack.c.h.b16 %v1262
        %v3343 = vunpack.c.l.b16 %v1263
        %v3344 = vunpack.c.h.b16 %v1263
        %v3345 = vunpack.c.l.b16 %v1264
        %v3346 = vunpack.c.h.b16 %v1264
        %v3347 = vunpack.c.l.b16 %v1265
        %v3348 = vunpack.c.h.b16 %v1265
        %v3349 = vunpack.c.l.b16 %v1266
        %v3350 = vunpack.c.h.b16 %v1266
        %v3351 = vunpack.c.l.b16 %v1267
        %v3352 = vunpack.c.h.b16 %v1267
        %v3353 = vunpack.c.l.b16 %v1268
        %v3354 = vunpack.c.h.b16 %v1268
        %v3355 = vunpack.c.l.b16 %v1269
        %v3356 = vunpack.c.h.b16 %v1269
        %v3357 = vunpack.c.l.b16 %v1270
        %v3358 = vunpack.c.h.b16 %v1270
        %v3359 = vunpack.c.l.b16 %v1271
        %v3360 = vunpack.c.h.b16 %v1271
        %v3361 = vunpack.c.l.b16 %v1272
        %v3362 = vunpack.c.h.b16 %v1272
        %v3363 = vunpack.c.l.b16 %v1273
        %v3364 = vunpack.c.h.b16 %v1273
        %v3365 = vunpack.c.l.b16 %v1274
        %v3366 = vunpack.c.h.b16 %v1274
        %v3367 = vunpack.c.l.b16 %v1275
        %v3368 = vunpack.c.h.b16 %v1275
        %v3369 = vunpack.c.l.b16 %v1276
        %v3370 = vunpack.c.h.b16 %v1276
        %v3371 = vunpack.c.l.b16 %v1277
        %v3372 = vunpack.c.h.b16 %v1277
        %v3373 = vunpack.c.l.b16 %v1278
        %v3374 = vunpack.c.h.b16 %v1278
        %v3375 = vunpack.c.l.b16 %v1279
        %v3376 = vunpack.c.h.b16 %v1279
        %v3377 = vunpack.c.l.b16 %v1280
        %v3378 = vunpack.c.h.b16 %v1280
        %v3379 = vunpack.c.l.b16 %v1281
        %v3380 = vunpack.c.h.b16 %v1281
        %v3381 = vunpack.c.l.b16 %v1282
        %v3382 = vunpack.c.h.b16 %v1282
        %v3383 = vunpack.c.l.b16 %v1283
        %v3384 = vunpack.c.h.b16 %v1283
        %v3385 = vunpack.c.l.b16 %v1284
        %v3386 = vunpack.c.h.b16 %v1284
        %v3387 = vunpack.c.l.b16 %v1285
        %v3388 = vunpack.c.h.b16 %v1285
        %v3389 = vunpack.c.l.b16 %v1286
        %v3390 = vunpack.c.h.b16 %v1286
        %v3391 = vunpack.c.l.b16 %v1287
        %v3392 = vunpack.c.h.b16 %v1287
        %v3393 = vunpack.c.l.b16 %v1288
        %v3394 = vunpack.c.h.b16 %v1288
        %v3395 = vunpack.c.l.b16 %v1289
        %v3396 = vunpack.c.h.b16 %v1289
        %v3397 = vunpack.c.l.b16 %v1290
        %v3398 = vunpack.c.h.b16 %v1290
        %v3399 = vunpack.c.l.b16 %v1291
        %v3400 = vunpack.c.h.b16 %v1291
        %v3401 = vunpack.c.l.b16 %v1292
        %v3402 = vunpack.c.h.b16 %v1292
        %v3403 = vunpack.c.l.b16 %v1293
        %v3404 = vunpack.c.h.b16 %v1293
        %v3405 = vunpack.c.l.b16 %v1294
        %v3406 = vunpack.c.h.b16 %v1294
        %v3407 = vunpack.c.l.b16 %v1295
        %v3408 = vunpack.c.h.b16 %v1295
        %v3409 = vunpack.c.l.b16 %v1296
        %v3410 = vunpack.c.h.b16 %v1296
        %v3411 = vunpack.c.l.b16 %v1297
        %v3412 = vunpack.c.h.b16 %v1297
        %v3413 = vunpack.c.l.b16 %v1298
        %v3414 = vunpack.c.h.b16 %v1298
        %v3415 = vunpack.c.l.b16 %v1299
        %v3416 = vunpack.c.h.b16 %v1299
        %v3417 = vunpack.c.l.b16 %v1300
        %v3418 = vunpack.c.h.b16 %v1300
        %v3419 = vunpack.c.l.b16 %v1301
        %v3420 = vunpack.c.h.b16 %v1301
        %v3421 = vunpack.c.l.b16 %v1302
        %v3422 = vunpack.c.h.b16 %v1302
        %v3423 = vunpack.c.l.b16 %v1303
        %v3424 = vunpack.c.h.b16 %v1303
        %v3425 = vunpack.c.l.b16 %v1304
        %v3426 = vunpack.c.h.b16 %v1304
        %v3427 = vunpack.c.l.b16 %v1305
        %v3428 = vunpack.c.h.b16 %v1305
        %v3429 = vunpack.c.l.b16 %v1306
        %v3430 = vunpack.c.h.b16 %v1306
        %v3431 = vunpack.c.l.b16 %v1307
        %v3432 = vunpack.c.h.b16 %v1307
        %v3433 = vunpack.c.l.b16 %v1308
        %v3434 = vunpack.c.h.b16 %v1308
        %v3435 = vunpack.c.l.b16 %v1309
        %v3436 = vunpack.c.h.b16 %v1309
        %v3437 = vunpack.c.l.b16 %v1310
        %v3438 = vunpack.c.h.b16 %v1310
        %v3439 = vunpack.c.l.b16 %v1311
        %v3440 = vunpack.c.h.b16 %v1311
        %v3441 = vunpack.c.l.b16 %v1312
        %v3442 = vunpack.c.h.b16 %v1312
        %v3443 = vunpack.c.l.b16 %v1313
        %v3444 = vunpack.c.h.b16 %v1313
        %v3445 = vunpack.c.l.b16 %v1314
        %v3446 = vunpack.c.h.b16 %v1314
        %v3447 = vunpack.c.l.b16 %v1315
        %v3448 = vunpack.c.h.b16 %v1315
        %v3449 = vunpack.c.l.b16 %v1316
        %v3450 = vunpack.c.h.b16 %v1316
        %v3451 = vunpack.c.l.b16 %v1317
        %v3452 = vunpack.c.h.b16 %v1317
        %v3453 = vunpack.c.l.b16 %v1318
        %v3454 = vunpack.c.h.b16 %v1318
        %v3455 = vunpack.c.l.b16 %v1319
        %v3456 = vunpack.c.h.b16 %v1319
        %v3457 = vunpack.c.l.b16 %v1320
        %v3458 = vunpack.c.h.b16 %v1320
        %v3459 = vunpack.c.l.b16 %v1321
        %v3460 = vunpack.c.h.b16 %v1321
        %v3461 = vunpack.c.l.b16 %v1322
        %v3462 = vunpack.c.h.b16 %v1322
        %v3463 = vunpack.c.l.b16 %v1323
        %v3464 = vunpack.c.h.b16 %v1323
        %v3465 = vunpack.c.l.b16 %v1324
        %v3466 = vunpack.c.h.b16 %v1324
        %v3467 = vunpack.c.l.b16 %v1325
        %v3468 = vunpack.c.h.b16 %v1325
        %v3469 = vunpack.c.l.b16 %v1326
        %v3470 = vunpack.c.h.b16 %v1326
        %v3471 = vunpack.c.l.b16 %v1327
        %v3472 = vunpack.c.h.b16 %v1327
        %v3473 = vunpack.c.l.b16 %v1328
        %v3474 = vunpack.c.h.b16 %v1328
        %v3475 = vunpack.c.l.b16 %v1329
        %v3476 = vunpack.c.h.b16 %v1329
        %v3477 = vunpack.c.l.b16 %v1330
        %v3478 = vunpack.c.h.b16 %v1330
        %v3479 = vunpack.c.l.b16 %v1331
        %v3480 = vunpack.c.h.b16 %v1331
        %v3481 = vunpack.c.l.b16 %v1332
        %v3482 = vunpack.c.h.b16 %v1332
        %v3483 = vunpack.c.l.b16 %v1333
        %v3484 = vunpack.c.h.b16 %v1333
        %v3485 = vunpack.c.l.b16 %v1334
        %v3486 = vunpack.c.h.b16 %v1334
        %v3487 = vunpack.c.l.b16 %v1335
        %v3488 = vunpack.c.h.b16 %v1335
        %v3489 = vunpack.c.l.b16 %v1336
        %v3490 = vunpack.c.h.b16 %v1336
        %v3491 = vunpack.c.l.b16 %v1337
        %v3492 = vunpack.c.h.b16 %v1337
        %v3493 = vunpack.c.l.b16 %v1338
        %v3494 = vunpack.c.h.b16 %v1338
        %v3495 = vunpack.c.l.b16 %v1339
        %v3496 = vunpack.c.h.b16 %v1339
        %v3497 = vunpack.c.l.b16 %v1340
        %v3498 = vunpack.c.h.b16 %v1340
        %v3499 = vunpack.c.l.b16 %v1341
        %v3500 = vunpack.c.h.b16 %v1341
        %v3501 = vunpack.c.l.b16 %v1342
        %v3502 = vunpack.c.h.b16 %v1342
        %v3503 = vunpack.c.l.b16 %v1343
        %v3504 = vunpack.c.h.b16 %v1343
        %v3505 = vunpack.c.l.b16 %v1344
        %v3506 = vunpack.c.h.b16 %v1344
        %v3507 = vunpack.c.l.b16 %v1345
        %v3508 = vunpack.c.h.b16 %v1345
        %v3509 = vunpack.c.l.b16 %v1346
        %v3510 = vunpack.c.h.b16 %v1346
        %v3511 = vunpack.c.l.b16 %v1347
        %v3512 = vunpack.c.h.b16 %v1347
        %v3513 = vunpack.c.l.b16 %v1348
        %v3514 = vunpack.c.h.b16 %v1348
        %v3515 = vunpack.c.l.b16 %v1349
        %v3516 = vunpack.c.h.b16 %v1349
        %v3517 = vunpack.c.l.b16 %v1350
        %v3518 = vunpack.c.h.b16 %v1350
        %v3519 = vunpack.c.l.b16 %v1351
        %v3520 = vunpack.c.h.b16 %v1351
        %v3521 = vunpack.c.l.b16 %v1352
        %v3522 = vunpack.c.h.b16 %v1352
        %v3523 = vunpack.c.l.b16 %v1353
        %v3524 = vunpack.c.h.b16 %v1353
        %v3525 = vunpack.c.l.b16 %v1354
        %v3526 = vunpack.c.h.b16 %v1354
        %v3527 = vunpack.c.l.b16 %v1355
        %v3528 = vunpack.c.h.b16 %v1355
        %v3529 = vunpack.c.l.b16 %v1356
        %v3530 = vunpack.c.h.b16 %v1356
        %v3531 = vunpack.c.l.b16 %v1357
        %v3532 = vunpack.c.h.b16 %v1357
        %v3533 = vunpack.c.l.b16 %v1358
        %v3534 = vunpack.c.h.b16 %v1358
        %v3535 = vunpack.c.l.b16 %v1359
        %v3536 = vunpack.c.h.b16 %v1359
        %v3537 = vunpack.c.l.b16 %v1360
        %v3538 = vunpack.c.h.b16 %v1360
        %v3539 = vunpack.c.l.b16 %v1361
        %v3540 = vunpack.c.h.b16 %v1361
        %v3541 = vunpack.c.l.b16 %v1362
        %v3542 = vunpack.c.h.b16 %v1362
        %v3543 = vunpack.c.l.b16 %v1363
        %v3544 = vunpack.c.h.b16 %v1363
        %v3545 = vunpack.c.l.b16 %v1364
        %v3546 = vunpack.c.h.b16 %v1364
        %v3547 = vunpack.c.l.b16 %v1365
        %v3548 = vunpack.c.h.b16 %v1365
        %v3549 = vunpack.c.l.b16 %v1366
        %v3550 = vunpack.c.h.b16 %v1366
        %v3551 = vunpack.c.l.b16 %v1367
        %v3552 = vunpack.c.h.b16 %v1367
        %v3553 = vunpack.c.l.b16 %v1368
        %v3554 = vunpack.c.h.b16 %v1368
        %v3555 = vunpack.c.l.b16 %v1369
        %v3556 = vunpack.c.h.b16 %v1369
        %v3557 = vunpack.c.l.b16 %v1370
        %v3558 = vunpack.c.h.b16 %v1370
        %v3559 = vunpack.c.l.b16 %v1371
        %v3560 = vunpack.c.h.b16 %v1371
        %v3561 = vunpack.c.l.b16 %v1372
        %v3562 = vunpack.c.h.b16 %v1372
        %v3563 = vunpack.c.l.b16 %v1373
        %v3564 = vunpack.c.h.b16 %v1373
        %v3565 = vunpack.c.l.b16 %v1374
        %v3566 = vunpack.c.h.b16 %v1374
        %v3567 = vunpack.c.l.b16 %v1375
        %v3568 = vunpack.c.h.b16 %v1375
        %v3569 = vunpack.c.l.b16 %v1376
        %v3570 = vunpack.c.h.b16 %v1376
        %v3571 = vunpack.c.l.b16 %v1377
        %v3572 = vunpack.c.h.b16 %v1377
        %v3573 = vunpack.c.l.b16 %v1378
        %v3574 = vunpack.c.h.b16 %v1378
        %v3575 = vunpack.c.l.b16 %v1379
        %v3576 = vunpack.c.h.b16 %v1379
        %v3577 = vunpack.c.l.b16 %v1380
        %v3578 = vunpack.c.h.b16 %v1380
        %v3579 = vunpack.c.l.b16 %v1381
        %v3580 = vunpack.c.h.b16 %v1381
        %v3581 = vunpack.c.l.b16 %v1382
        %v3582 = vunpack.c.h.b16 %v1382
        %v3583 = vunpack.c.l.b16 %v1383
        %v3584 = vunpack.c.h.b16 %v1383
        %v3585 = vunpack.c.l.b16 %v1384
        %v3586 = vunpack.c.h.b16 %v1384
        %v3587 = vunpack.c.l.b16 %v1385
        %v3588 = vunpack.c.h.b16 %v1385
        %v3589 = vunpack.c.l.b16 %v1386
        %v3590 = vunpack.c.h.b16 %v1386
        %v3591 = vunpack.c.l.b16 %v1387
        %v3592 = vunpack.c.h.b16 %v1387
        %v3593 = vunpack.c.l.b16 %v1388
        %v3594 = vunpack.c.h.b16 %v1388
        %v3595 = vunpack.c.l.b16 %v1389
        %v3596 = vunpack.c.h.b16 %v1389
        %v3597 = vunpack.c.l.b16 %v1390
        %v3598 = vunpack.c.h.b16 %v1390
        %v3599 = vpack.c.b16 %v2801, %v2799
        %v3600 = vpack.c.b16 %v2802, %v2800
        %v3601 = vpack.c.b16 %v2805, %v2803
        %v3602 = vpack.c.b16 %v2806, %v2804
        %v3603 = vpack.c.b16 %v2809, %v2807
        %v3604 = vpack.c.b16 %v2810, %v2808
        %v3605 = vpack.c.b16 %v2813, %v2811
        %v3606 = vpack.c.b16 %v2814, %v2812
        %v3607 = vpack.c.b16 %v2817, %v2815
        %v3608 = vpack.c.b16 %v2818, %v2816
        %v3609 = vpack.c.b16 %v2821, %v2819
        %v3610 = vpack.c.b16 %v2822, %v2820
        %v3611 = vpack.c.b16 %v2825, %v2823
        %v3612 = vpack.c.b16 %v2826, %v2824
        %v3613 = vpack.c.b16 %v2829, %v2827
        %v3614 = vpack.c.b16 %v2830, %v2828
        %v3615 = vpack.c.b16 %v2833, %v2831
        %v3616 = vpack.c.b16 %v2834, %v2832
        %v3617 = vpack.c.b16 %v2837, %v2835
        %v3618 = vpack.c.b16 %v2838, %v2836
        %v3619 = vpack.c.b16 %v2841, %v2839
        %v3620 = vpack.c.b16 %v2842, %v2840
        %v3621 = vpack.c.b16 %v2845, %v2843
        %v3622 = vpack.c.b16 %v2846, %v2844
        %v3623 = vpack.c.b16 %v2849, %v2847
        %v3624 = vpack.c.b16 %v2850, %v2848
        %v3625 = vpack.c.b16 %v2853, %v2851
        %v3626 = vpack.c.b16 %v2854, %v2852
        %v3627 = vpack.c.b16 %v2857, %v2855
        %v3628 = vpack.c.b16 %v2858, %v2856
        %v3629 = vpack.c.b16 %v2861, %v2859
        %v3630 = vpack.c.b16 %v2862, %v2860
        %v3631 = vpack.c.b16 %v2865, %v2863
        %v3632 = vpack.c.b16 %v2866, %v2864
        %v3633 = vpack.c.b16 %v2869, %v2867
        %v3634 = vpack.c.b16 %v2870, %v2868
        %v3635 = vpack.c.b16 %v2873, %v2871
        %v3636 = vpack.c.b16 %v2874, %v2872
        %v3637 = vpack.c.b16 %v2877, %v2875
        %v3638 = vpack.c.b16 %v2878, %v2876
        %v3639 = vpack.c.b16 %v2881, %v2879
        %v3640 = vpack.c.b16 %v2882, %v2880
        %v3641 = vpack.c.b16 %v2885, %v2883
        %v3642 = vpack.c.b16 %v2886, %v2884
        %v3643 = vpack.c.b16 %v2889, %v2887
        %v3644 = vpack.c.b16 %v2890, %v2888
        %v3645 = vpack.c.b16 %v2893, %v2891
        %v3646 = vpack.c.b16 %v2894, %v2892
        %v3647 = vpack.c.b16 %v2897, %v2895
        %v3648 = vpack.c.b16 %v2898, %v2896
        %v3649 = vpack.c.b16 %v2901, %v2899
        %v3650 = vpack.c.b16 %v2902, %v2900
        %v3651 = vpack.c.b16 %v2905, %v2903
        %v3652 = vpack.c.b16 %v2906, %v2904
        %v3653 = vpack.c.b16 %v2909, %v2907
        %v3654 = vpack.c.b16 %v2910, %v2908
        %v3655 = vpack.c.b16 %v2913, %v2911
        %v3656 = vpack.c.b16 %v2914, %v2912
        %v3657 = vpack.c.b16 %v2917, %v2915
        %v3658 = vpack.c.b16 %v2918, %v2916
        %v3659 = vpack.c.b16 %v2921, %v2919
        %v3660 = vpack.c.b16 %v2922, %v2920
        %v3661 = vpack.c.b16 %v2925, %v2923
        %v3662 = vpack.c.b16 %v2926, %v2924
        %v3663 = vpack.c.b16 %v2929, %v2927
        %v3664 = vpack.c.b16 %v2930, %v2928
        %v3665 = vpack.c.b16 %v2933, %v2931
        %v3666 = vpack.c.b16 %v2934, %v2932
        %v3667 = vpack.c.b16 %v2937, %v2935
        %v3668 = vpack.c.b16 %v2938, %v2936
        %v3669 = vpack.c.b16 %v2941, %v2939
        %v3670 = vpack.c.b16 %v2942, %v2940
        %v3671 = vpack.c.b16 %v2945, %v2943
        %v3672 = vpack.c.b16 %v2946, %v2944
        %v3673 = vpack.c.b16 %v2949, %v2947
        %v3674 = vpack.c.b16 %v2950, %v2948
        %v3675 = vpack.c.b16 %v2953, %v2951
        %v3676 = vpack.c.b16 %v2954, %v2952
        %v3677 = vpack.c.b16 %v2957, %v2955
        %v3678 = vpack.c.b16 %v2958, %v2956
        %v3679 = vpack.c.b16 %v2961, %v2959
        %v3680 = vpack.c.b16 %v2962, %v2960
        %v3681 = vpack.c.b16 %v2965, %v2963
        %v3682 = vpack.c.b16 %v2966, %v2964
        %v3683 = vpack.c.b16 %v2969, %v2967
        %v3684 = vpack.c.b16 %v2970, %v2968
        %v3685 = vpack.c.b16 %v2973, %v2971
        %v3686 = vpack.c.b16 %v2974, %v2972
        %v3687 = vpack.c.b16 %v2977, %v2975
        %v3688 = vpack.c.b16 %v2978, %v2976
        %v3689 = vpack.c.b16 %v2981, %v2979
        %v3690 = vpack.c.b16 %v2982, %v2980
        %v3691 = vpack.c.b16 %v2985, %v2983
        %v3692 = vpack.c.b16 %v2986, %v2984
        %v3693 = vpack.c.b16 %v2989, %v2987
        %v3694 = vpack.c.b16 %v2990, %v2988
        %v3695 = vpack.c.b16 %v2993, %v2991
        %v3696 = vpack.c.b16 %v2994, %v2992
        %v3697 = vpack.c.b16 %v2997, %v2995
        %v3698 = vpack.c.b16 %v2998, %v2996
        %v3699 = vpack.c.b16 %v3001, %v2999
        %v3700 = vpack.c.b16 %v3002, %v3000
        %v3701 = vpack.c.b16 %v3005, %v3003
        %v3702 = vpack.c.b16 %v3006, %v3004
        %v3703 = vpack.c.b16 %v3009, %v3007
        %v3704 = vpack.c.b16 %v3010, %v3008
        %v3705 = vpack.c.b16 %v3013, %v3011
        %v3706 = vpack.c.b16 %v3014, %v3012
        %v3707 = vpack.c.b16 %v3017, %v3015
        %v3708 = vpack.c.b16 %v3018, %v3016
        %v3709 = vpack.c.b16 %v3021, %v3019
        %v3710 = vpack.c.b16 %v3022, %v3020
        %v3711 = vpack.c.b16 %v3025, %v3023
        %v3712 = vpack.c.b16 %v3026, %v3024
        %v3713 = vpack.c.b16 %v3029, %v3027
        %v3714 = vpack.c.b16 %v3030, %v3028
        %v3715 = vpack.c.b16 %v3033, %v3031
        %v3716 = vpack.c.b16 %v3034, %v3032
        %v3717 = vpack.c.b16 %v3037, %v3035
        %v3718 = vpack.c.b16 %v3038, %v3036
        %v3719 = vpack.c.b16 %v3041, %v3039
        %v3720 = vpack.c.b16 %v3042, %v3040
        %v3721 = vpack.c.b16 %v3045, %v3043
        %v3722 = vpack.c.b16 %v3046, %v3044
        %v3723 = vpack.c.b16 %v3049, %v3047
        %v3724 = vpack.c.b16 %v3050, %v3048
        %v3725 = vpack.c.b16 %v3053, %v3051
        %v3726 = vpack.c.b16 %v3054, %v3052
        %v3727 = vpack.c.b16 %v3057, %v3055
        %v3728 = vpack.c.b16 %v3058, %v3056
        %v3729 = vpack.c.b16 %v3061, %v3059
        %v3730 = vpack.c.b16 %v3062, %v3060
        %v3731 = vpack.c.b16 %v3065, %v3063
        %v3732 = vpack.c.b16 %v3066, %v3064
        %v3733 = vpack.c.b16 %v3069, %v3067
        %v3734 = vpack.c.b16 %v3070, %v3068
        %v3735 = vpack.c.b16 %v3073, %v3071
        %v3736 = vpack.c.b16 %v3074, %v3072
        %v3737 = vpack.c.b16 %v3077, %v3075
        %v3738 = vpack.c.b16 %v3078, %v3076
        %v3739 = vpack.c.b16 %v3081, %v3079
        %v3740 = vpack.c.b16 %v3082, %v3080
        %v3741 = vpack.c.b16 %v3085, %v3083
        %v3742 = vpack.c.b16 %v3086, %v3084
        %v3743 = vpack.c.b16 %v3089, %v3087
        %v3744 = vpack.c.b16 %v3090, %v3088
        %v3745 = vpack.c.b16 %v3093, %v3091
        %v3746 = vpack.c.b16 %v3094, %v3092
        %v3747 = vpack.c.b16 %v3097, %v3095
        %v3748 = vpack.c.b16 %v3098, %v3096
        %v3749 = vpack.c.b16 %v3101, %v3099
        %v3750 = vpack.c.b16 %v3102, %v3100
        %v3751 = vpack.c.b16 %v3105, %v3103
        %v3752 = vpack.c.b16 %v3106, %v3104
        %v3753 = vpack.c.b16 %v3109, %v3107
        %v3754 = vpack.c.b16 %v3110, %v3108
        %v3755 = vpack.c.b16 %v3113, %v3111
        %v3756 = vpack.c.b16 %v3114, %v3112
        %v3757 = vpack.c.b16 %v3117, %v3115
        %v3758 = vpack.c.b16 %v3118, %v3116
        %v3759 = vpack.c.b16 %v3121, %v3119
        %v3760 = vpack.c.b16 %v3122, %v3120
        %v3761 = vpack.c.b16 %v3125, %v3123
        %v3762 = vpack.c.b16 %v3126, %v3124
        %v3763 = vpack.c.b16 %v3129, %v3127
        %v3764 = vpack.c.b16 %v3130, %v3128
        %v3765 = vpack.c.b16 %v3133, %v3131
        %v3766 = vpack.c.b16 %v3134, %v3132
        %v3767 = vpack.c.b16 %v3137, %v3135
        %v3768 = vpack.c.b16 %v3138, %v3136
        %v3769 = vpack.c.b16 %v3141, %v3139
        %v3770 = vpack.c.b16 %v3142, %v3140
        %v3771 = vpack.c.b16 %v3145, %v3143
        %v3772 = vpack.c.b16 %v3146, %v3144
        %v3773 = vpack.c.b16 %v3149, %v3147
        %v3774 = vpack.c.b16 %v3150, %v3148
        %v3775 = vpack.c.b16 %v3153, %v3151
        %v3776 = vpack.c.b16 %v3154, %v3152
        %v3777 = vpack.c.b16 %v3157, %v3155
        %v3778 = vpack.c.b16 %v3158, %v3156
        %v3779 = vpack.c.b16 %v3161, %v3159
        %v3780 = vpack.c.b16 %v3162, %v3160
        %v3781 = vpack.c.b16 %v3165, %v3163
        %v3782 = vpack.c.b16 %v3166, %v3164
        %v3783 = vpack.c.b16 %v3169, %v3167
        %v3784 = vpack.c.b16 %v3170, %v3168
        %v3785 = vpack.c.b16 %v3173, %v3171
        %v3786 = vpack.c.b16 %v3174, %v3172
        %v3787 = vpack.c.b16 %v3177, %v3175
        %v3788 = vpack.c.b16 %v3178, %v3176
        %v3789 = vpack.c.b16 %v3181, %v3179
        %v3790 = vpack.c.b16 %v3182, %v3180
        %v3791 = vpack.c.b16 %v3185, %v3183
        %v3792 = vpack.c.b16 %v3186, %v3184
        %v3793 = vpack.c.b16 %v3189, %v3187
        %v3794 = vpack.c.b16 %v3190, %v3188
        %v3795 = vpack.c.b16 %v3193, %v3191
        %v3796 = vpack.c.b16 %v3194, %v3192
        %v3797 = vpack.c.b16 %v3197, %v3195
        %v3798 = vpack.c.b16 %v3198, %v3196
        %v3799 = vpack.c.b16 %v3201, %v3199
        %v3800 = vpack.c.b16 %v3202, %v3200
        %v3801 = vpack.c.b16 %v3205, %v3203
        %v3802 = vpack.c.b16 %v3206, %v3204
        %v3803 = vpack.c.b16 %v3209, %v3207
        %v3804 = vpack.c.b16 %v3210, %v3208
        %v3805 = vpack.c.b16 %v3213, %v3211
        %v3806 = vpack.c.b16 %v3214, %v3212
        %v3807 = vpack.c.b16 %v3217, %v3215
        %v3808 = vpack.c.b16 %v3218, %v3216
        %v3809 = vpack.c.b16 %v3221, %v3219
        %v3810 = vpack.c.b16 %v3222, %v3220
        %v3811 = vpack.c.b16 %v3225, %v3223
        %v3812 = vpack.c.b16 %v3226, %v3224
        %v3813 = vpack.c.b16 %v3229, %v3227
        %v3814 = vpack.c.b16 %v3230, %v3228
        %v3815 = vpack.c.b16 %v3233, %v3231
        %v3816 = vpack.c.b16 %v3234, %v3232
        %v3817 = vpack.c.b16 %v3237, %v3235
        %v3818 = vpack.c.b16 %v3238, %v3236
        %v3819 = vpack.c.b16 %v3241, %v3239
        %v3820 = vpack.c.b16 %v3242, %v3240
        %v3821 = vpack.c.b16 %v3245, %v3243
        %v3822 = vpack.c.b16 %v3246, %v3244
        %v3823 = vpack.c.b16 %v3249, %v3247
        %v3824 = vpack.c.b16 %v3250, %v3248
        %v3825 = vpack.c.b16 %v3253, %v3251
        %v3826 = vpack.c.b16 %v3254, %v3252
        %v3827 = vpack.c.b16 %v3257, %v3255
        %v3828 = vpack.c.b16 %v3258, %v3256
        %v3829 = vpack.c.b16 %v3261, %v3259
        %v3830 = vpack.c.b16 %v3262, %v3260
        %v3831 = vpack.c.b16 %v3265, %v3263
        %v3832 = vpack.c.b16 %v3266, %v3264
        %v3833 = vpack.c.b16 %v3269, %v3267
        %v3834 = vpack.c.b16 %v3270, %v3268
        %v3835 = vpack.c.b16 %v3273, %v3271
        %v3836 = vpack.c.b16 %v3274, %v3272
        %v3837 = vpack.c.b16 %v3277, %v3275
        %v3838 = vpack.c.b16 %v3278, %v3276
        %v3839 = vpack.c.b16 %v3281, %v3279
        %v3840 = vpack.c.b16 %v3282, %v3280
        %v3841 = vpack.c.b16 %v3285, %v3283
        %v3842 = vpack.c.b16 %v3286, %v3284
        %v3843 = vpack.c.b16 %v3289, %v3287
        %v3844 = vpack.c.b16 %v3290, %v3288
        %v3845 = vpack.c.b16 %v3293, %v3291
        %v3846 = vpack.c.b16 %v3294, %v3292
        %v3847 = vpack.c.b16 %v3297, %v3295
        %v3848 = vpack.c.b16 %v3298, %v3296
        %v3849 = vpack.c.b16 %v3301, %v3299
        %v3850 = vpack.c.b16 %v3302, %v3300
        %v3851 = vpack.c.b16 %v3305, %v3303
        %v3852 = vpack.c.b16 %v3306, %v3304
        %v3853 = vpack.c.b16 %v3309, %v3307
        %v3854 = vpack.c.b16 %v3310, %v3308
        %v3855 = vpack.c.b16 %v3313, %v3311
        %v3856 = vpack.c.b16 %v3314, %v3312
        %v3857 = vpack.c.b16 %v3317, %v3315
        %v3858 = vpack.c.b16 %v3318, %v3316
        %v3859 = vpack.c.b16 %v3321, %v3319
        %v3860 = vpack.c.b16 %v3322, %v3320
        %v3861 = vpack.c.b16 %v3325, %v3323
        %v3862 = vpack.c.b16 %v3326, %v3324
        %v3863 = vpack.c.b16 %v3329, %v3327
        %v3864 = vpack.c.b16 %v3330, %v3328
        %v3865 = vpack.c.b16 %v3333, %v3331
        %v3866 = vpack.c.b16 %v3334, %v3332
        %v3867 = vpack.c.b16 %v3337, %v3335
        %v3868 = vpack.c.b16 %v3338, %v3336
        %v3869 = vpack.c.b16 %v3341, %v3339
        %v3870 = vpack.c.b16 %v3342, %v3340
        %v3871 = vpack.c.b16 %v3345, %v3343
        %v3872 = vpack.c.b16 %v3346, %v3344
        %v3873 = vpack.c.b16 %v3349, %v3347
        %v3874 = vpack.c.b16 %v3350, %v3348
        %v3875 = vpack.c.b16 %v3353, %v3351
        %v3876 = vpack.c.b16 %v3354, %v3352
        %v3877 = vpack.c.b16 %v3357, %v3355
        %v3878 = vpack.c.b16 %v3358, %v3356
        %v3879 = vpack.c.b16 %v3361, %v3359
        %v3880 = vpack.c.b16 %v3362, %v3360
        %v3881 = vpack.c.b16 %v3365, %v3363
        %v3882 = vpack.c.b16 %v3366, %v3364
        %v3883 = vpack.c.b16 %v3369, %v3367
        %v3884 = vpack.c.b16 %v3370, %v3368
        %v3885 = vpack.c.b16 %v3373, %v3371
        %v3886 = vpack.c.b16 %v3374, %v3372
        %v3887 = vpack.c.b16 %v3377, %v3375
        %v3888 = vpack.c.b16 %v3378, %v3376
        %v3889 = vpack.c.b16 %v3381, %v3379
        %v3890 = vpack.c.b16 %v3382, %v3380
        %v3891 = vpack.c.b16 %v3385, %v3383
        %v3892 = vpack.c.b16 %v3386, %v3384
        %v3893 = vpack.c.b16 %v3389, %v3387
        %v3894 = vpack.c.b16 %v3390, %v3388
        %v3895 = vpack.c.b16 %v3393, %v3391
        %v3896 = vpack.c.b16 %v3394, %v3392
        %v3897 = vpack.c.b16 %v3397, %v3395
        %v3898 = vpack.c.b16 %v3398, %v3396
        %v3899 = vpack.c.b16 %v3401, %v3399
        %v3900 = vpack.c.b16 %v3402, %v3400
        %v3901 = vpack.c.b16 %v3405, %v3403
        %v3902 = vpack.c.b16 %v3406, %v3404
        %v3903 = vpack.c.b16 %v3409, %v3407
        %v3904 = vpack.c.b16 %v3410, %v3408
        %v3905 = vpack.c.b16 %v3413, %v3411
        %v3906 = vpack.c.b16 %v3414, %v3412
        %v3907 = vpack.c.b16 %v3417, %v3415
        %v3908 = vpack.c.b16 %v3418, %v3416
        %v3909 = vpack.c.b16 %v3421, %v3419
        %v3910 = vpack.c.b16 %v3422, %v3420
        %v3911 = vpack.c.b16 %v3425, %v3423
        %v3912 = vpack.c.b16 %v3426, %v3424
        %v3913 = vpack.c.b16 %v3429, %v3427
        %v3914 = vpack.c.b16 %v3430, %v3428
        %v3915 = vpack.c.b16 %v3433, %v3431
        %v3916 = vpack.c.b16 %v3434, %v3432
        %v3917 = vpack.c.b16 %v3437, %v3435
        %v3918 = vpack.c.b16 %v3438, %v3436
        %v3919 = vpack.c.b16 %v3441, %v3439
        %v3920 = vpack.c.b16 %v3442, %v3440
        %v3921 = vpack.c.b16 %v3445, %v3443
        %v3922 = vpack.c.b16 %v3446, %v3444
        %v3923 = vpack.c.b16 %v3449, %v3447
        %v3924 = vpack.c.b16 %v3450, %v3448
        %v3925 = vpack.c.b16 %v3453, %v3451
        %v3926 = vpack.c.b16 %v3454, %v3452
        %v3927 = vpack.c.b16 %v3457, %v3455
        %v3928 = vpack.c.b16 %v3458, %v3456
        %v3929 = vpack.c.b16 %v3461, %v3459
        %v3930 = vpack.c.b16 %v3462, %v3460
        %v3931 = vpack.c.b16 %v3465, %v3463
        %v3932 = vpack.c.b16 %v3466, %v3464
        %v3933 = vpack.c.b16 %v3469, %v3467
        %v3934 = vpack.c.b16 %v3470, %v3468
        %v3935 = vpack.c.b16 %v3473, %v3471
        %v3936 = vpack.c.b16 %v3474, %v3472
        %v3937 = vpack.c.b16 %v3477, %v3475
        %v3938 = vpack.c.b16 %v3478, %v3476
        %v3939 = vpack.c.b16 %v3481, %v3479
        %v3940 = vpack.c.b16 %v3482, %v3480
        %v3941 = vpack.c.b16 %v3485, %v3483
        %v3942 = vpack.c.b16 %v3486, %v3484
        %v3943 = vpack.c.b16 %v3489, %v3487
        %v3944 = vpack.c.b16 %v3490, %v3488
        %v3945 = vpack.c.b16 %v3493, %v3491
        %v3946 = vpack.c.b16 %v3494, %v3492
        %v3947 = vpack.c.b16 %v3497, %v3495
        %v3948 = vpack.c.b16 %v3498, %v3496
        %v3949 = vpack.c.b16 %v3501, %v3499
        %v3950 = vpack.c.b16 %v3502, %v3500
        %v3951 = vpack.c.b16 %v3505, %v3503
        %v3952 = vpack.c.b16 %v3506, %v3504
        %v3953 = vpack.c.b16 %v3509, %v3507
        %v3954 = vpack.c.b16 %v3510, %v3508
        %v3955 = vpack.c.b16 %v3513, %v3511
        %v3956 = vpack.c.b16 %v3514, %v3512
        %v3957 = vpack.c.b16 %v3517, %v3515
        %v3958 = vpack.c.b16 %v3518, %v3516
        %v3959 = vpack.c.b16 %v3521, %v3519
        %v3960 = vpack.c.b16 %v3522, %v3520
        %v3961 = vpack.c.b16 %v3525, %v3523
        %v3962 = vpack.c.b16 %v3526, %v3524
        %v3963 = vpack.c.b16 %v3529, %v3527
        %v3964 = vpack.c.b16 %v3530, %v3528
        %v3965 = vpack.c.b16 %v3533, %v3531
        %v3966 = vpack.c.b16 %v3534, %v3532
        %v3967 = vpack.c.b16 %v3537, %v3535
        %v3968 = vpack.c.b16 %v3538, %v3536
        %v3969 = vpack.c.b16 %v3541, %v3539
        %v3970 = vpack.c.b16 %v3542, %v3540
        %v3971 = vpack.c.b16 %v3545, %v3543
        %v3972 = vpack.c.b16 %v3546, %v3544
        %v3973 = vpack.c.b16 %v3549, %v3547
        %v3974 = vpack.c.b16 %v3550, %v3548
        %v3975 = vpack.c.b16 %v3553, %v3551
        %v3976 = vpack.c.b16 %v3554, %v3552
        %v3977 = vpack.c.b16 %v3557, %v3555
        %v3978 = vpack.c.b16 %v3558, %v3556
        %v3979 = vpack.c.b16 %v3561, %v3559
        %v3980 = vpack.c.b16 %v3562, %v3560
        %v3981 = vpack.c.b16 %v3565, %v3563
        %v3982 = vpack.c.b16 %v3566, %v3564
        %v3983 = vpack.c.b16 %v3569, %v3567
        %v3984 = vpack.c.b16 %v3570, %v3568
        %v3985 = vpack.c.b16 %v3573, %v3571
        %v3986 = vpack.c.b16 %v3574, %v3572
        %v3987 = vpack.c.b16 %v3577, %v3575
        %v3988 = vpack.c.b16 %v3578, %v3576
        %v3989 = vpack.c.b16 %v3581, %v3579
        %v3990 = vpack.c.b16 %v3582, %v3580
        %v3991 = vpack.c.b16 %v3585, %v3583
        %v3992 = vpack.c.b16 %v3586, %v3584
        %v3993 = vpack.c.b16 %v3589, %v3587
        %v3994 = vpack.c.b16 %v3590, %v3588
        %v3995 = vpack.c.b16 %v3593, %v3591
        %v3996 = vpack.c.b16 %v3594, %v3592
        %v3997 = vpack.c.b16 %v3597, %v3595
        %v3998 = vpack.c.b16 %v3598, %v3596
        %4399 = vmatprep.subr.bf16.mxu0 %v3600
        %4400 = vmatpush1.bf16.msra.mxu0 %v3599
        %4401 = vmatprep.subr.bf16.mxu0 %v3602
        %4402 = vmatpush1.bf16.msra.mxu0 %v3601
        %4403 = vmatprep.subr.bf16.mxu0 %v3604
        %4404 = vmatpush1.bf16.msra.mxu0 %v3603
        %4405 = vmatprep.subr.bf16.mxu0 %v3606
        %4406 = vmatpush1.bf16.msra.mxu0 %v3605
        %4407 = vmatprep.subr.bf16.mxu0 %v3608
        %4408 = vmatpush1.bf16.msra.mxu0 %v3607
        %4409 = vmatprep.subr.bf16.mxu0 %v3610
        %4410 = vmatpush1.bf16.msra.mxu0 %v3609
        %4411 = vmatprep.subr.bf16.mxu0 %v3612
        %4412 = vmatpush1.bf16.msra.mxu0 %v3611
        %4413 = vmatprep.subr.bf16.mxu0 %v3614
        %4414 = vmatpush1.bf16.msra.mxu0 %v3613
        %4415 = vmatprep.subr.bf16.mxu0 %v3616
        %4416 = vmatpush1.bf16.msra.mxu0 %v3615
        %4417 = vmatprep.subr.bf16.mxu0 %v3618
        %4418 = vmatpush1.bf16.msra.mxu0 %v3617
        %4419 = vmatprep.subr.bf16.mxu0 %v3620
        %4420 = vmatpush1.bf16.msra.mxu0 %v3619
        %4421 = vmatprep.subr.bf16.mxu0 %v3622
        %4422 = vmatpush1.bf16.msra.mxu0 %v3621
        %4423 = vmatprep.subr.bf16.mxu0 %v3624
        %4424 = vmatpush1.bf16.msra.mxu0 %v3623
        %4425 = vmatprep.subr.bf16.mxu0 %v3626
        %4426 = vmatpush1.bf16.msra.mxu0 %v3625
        %4427 = vmatprep.subr.bf16.mxu0 %v3628
        %4428 = vmatpush1.bf16.msra.mxu0 %v3627
        %4429 = vmatprep.subr.bf16.mxu0 %v3630
        %4430 = vmatpush1.bf16.msra.mxu0 %v3629
        %4431 = vmatprep.mubr.bf16.mxu0 %v2000
        %4432 = vmatmul.mubr.bf16.gmra.mrb[0].mxu0 %v1999
        %v4433 = vpop.f32.mrb[0].mxu0
        %v4434 = vadd.f32 0.0, %v4433
        %v4435 = vpop.f32.mrb[0].mxu0
        %v4436 = vadd.f32 0.0, %v4435
        %v4437 = vpop.f32.mrb[0].mxu0
        %v4438 = vadd.f32 0.0, %v4437
        %v4439 = vpop.f32.mrb[0].mxu0
        %v4440 = vadd.f32 0.0, %v4439
        %4441 = vmatprep.mubr.bf16.mxu0 %v2025
        %4442 = vmatmul.mubr.bf16.gmra.mrb[0].mxu0 %v2024
        %v4443 = vpop.f32.mrb[0].mxu0
        %v4444 = vadd.f32 0.0, %v4443
        %v4445 = vpop.f32.mrb[0].mxu0
        %v4446 = vadd.f32 0.0, %v4445
        %v4447 = vpop.f32.mrb[0].mxu0
        %v4448 = vadd.f32 0.0, %v4447
        %v4449 = vpop.f32.mrb[0].mxu0
        %v4450 = vadd.f32 0.0, %v4449
        %4451 = vmatprep.mubr.bf16.mxu0 %v2050
        %4452 = vmatmul.mubr.bf16.gmra.mrb[0].mxu0 %v2049
        %v4453 = vpop.f32.mrb[0].mxu0
        %v4454 = vadd.f32 0.0, %v4453
        %v4455 = vpop.f32.mrb[0].mxu0
        %v4456 = vadd.f32 0.0, %v4455
        %v4457 = vpop.f32.mrb[0].mxu0
        %v4458 = vadd.f32 0.0, %v4457
        %v4459 = vpop.f32.mrb[0].mxu0
        %v4460 = vadd.f32 0.0, %v4459
        %4461 = vmatprep.mubr.bf16.mxu0 %v2075
        %4462 = vmatmul.mubr.bf16.gmra.mrb[0].mxu0 %v2074
        %v4463 = vpop.f32.mrb[0].mxu0
        %v4464 = vadd.f32 0.0, %v4463
        %v4465 = vpop.f32.mrb[0].mxu0
        %v4466 = vadd.f32 0.0, %v4465
        %v4467 = vpop.f32.mrb[0].mxu0
        %v4468 = vadd.f32 0.0, %v4467
        %v4469 = vpop.f32.mrb[0].mxu0
        %v4470 = vadd.f32 0.0, %v4469
        %4471 = vmatprep.mubr.bf16.mxu0 %v2100
        %4472 = vmatmul.mubr.bf16.gmra.mrb[0].mxu0 %v2099
        %v4473 = vpop.f32.mrb[0].mxu0
        %v4474 = vadd.f32 0.0, %v4473
        %v4475 = vpop.f32.mrb[0].mxu0
        %v4476 = vadd.f32 0.0, %v4475
        %v4477 = vpop.f32.mrb[0].mxu0
        %v4478 = vadd.f32 0.0, %v4477
        %v4479 = vpop.f32.mrb[0].mxu0
        %v4480 = vadd.f32 0.0, %v4479
        %4481 = vmatprep.mubr.bf16.mxu0 %v2125
        %4482 = vmatmul.mubr.bf16.gmra.mrb[0].mxu0 %v2124
        %v4483 = vpop.f32.mrb[0].mxu0
        %v4484 = vadd.f32 0.0, %v4483
        %v4485 = vpop.f32.mrb[0].mxu0
        %v4486 = vadd.f32 0.0, %v4485
        %v4487 = vpop.f32.mrb[0].mxu0
        %v4488 = vadd.f32 0.0, %v4487
        %v4489 = vpop.f32.mrb[0].mxu0
        %v4490 = vadd.f32 0.0, %v4489
        %4491 = vmatprep.mubr.bf16.mxu0 %v2150
        %4492 = vmatmul.mubr.bf16.gmra.mrb[0].mxu0 %v2149
        %v4493 = vpop.f32.mrb[0].mxu0
        %v4494 = vadd.f32 0.0, %v4493
        %v4495 = vpop.f32.mrb[0].mxu0
        %v4496 = vadd.f32 0.0, %v4495
        %v4497 = vpop.f32.mrb[0].mxu0
        %v4498 = vadd.f32 0.0, %v4497
        %v4499 = vpop.f32.mrb[0].mxu0
        %v4500 = vadd.f32 0.0, %v4499
        %4501 = vmatprep.mubr.bf16.mxu0 %v2175
        %4502 = vmatmul.mubr.bf16.gmra.mrb[0].mxu0 %v2174
        %v4503 = vpop.f32.mrb[0].mxu0
        %v4504 = vadd.f32 0.0, %v4503
        %v4505 = vpop.f32.mrb[0].mxu0
        %v4506 = vadd.f32 0.0, %v4505
        %v4507 = vpop.f32.mrb[0].mxu0
        %v4508 = vadd.f32 0.0, %v4507
        %v4509 = vpop.f32.mrb[0].mxu0
        %v4510 = vadd.f32 0.0, %v4509
        %4511 = vdwg.mxu0
        %4512 = vmatprep.subr.bf16.mxu0 %v3632
        %4513 = vmatpush1.bf16.msra.mxu0 %v3631
        %4514 = vmatprep.subr.bf16.mxu0 %v3634
        %4515 = vmatpush1.bf16.msra.mxu0 %v3633
        %4516 = vmatprep.subr.bf16.mxu0 %v3636
        %4517 = vmatpush1.bf16.msra.mxu0 %v3635
        %4518 = vmatprep.subr.bf16.mxu0 %v3638
        %4519 = vmatpush1.bf16.msra.mxu0 %v3637
        %4520 = vmatprep.subr.bf16.mxu0 %v3640
        %4521 = vmatpush1.bf16.msra.mxu0 %v3639
        %4522 = vmatprep.subr.bf16.mxu0 %v3642
        %4523 = vmatpush1.bf16.msra.mxu0 %v3641
        %4524 = vmatprep.subr.bf16.mxu0 %v3644
        %4525 = vmatpush1.bf16.msra.mxu0 %v3643
        %4526 = vmatprep.subr.bf16.mxu0 %v3646
        %4527 = vmatpush1.bf16.msra.mxu0 %v3645
        %4528 = vmatprep.subr.bf16.mxu0 %v3648
        %4529 = vmatpush1.bf16.msra.mxu0 %v3647
        %4530 = vmatprep.subr.bf16.mxu0 %v3650
        %4531 = vmatpush1.bf16.msra.mxu0 %v3649
        %4532 = vmatprep.subr.bf16.mxu0 %v3652
        %4533 = vmatpush1.bf16.msra.mxu0 %v3651
        %4534 = vmatprep.subr.bf16.mxu0 %v3654
        %4535 = vmatpush1.bf16.msra.mxu0 %v3653
        %4536 = vmatprep.subr.bf16.mxu0 %v3656
        %4537 = vmatpush1.bf16.msra.mxu0 %v3655
        %4538 = vmatprep.subr.bf16.mxu0 %v3658
        %4539 = vmatpush1.bf16.msra.mxu0 %v3657
        %4540 = vmatprep.subr.bf16.mxu0 %v3660
        %4541 = vmatpush1.bf16.msra.mxu0 %v3659
        %4542 = vmatprep.subr.bf16.mxu0 %v3662
        %4543 = vmatpush1.bf16.msra.mxu0 %v3661
        %4544 = vmatprep.mubr.bf16.mxu0 %v2002
        %4545 = vmatmul.mubr.bf16.gmra.mrb[0].mxu0 %v2001
        %v4546 = vpop.f32.mrb[0].mxu0
        %v4547 = vadd.f32 %v4434, %v4546
        %v4548 = vpop.f32.mrb[0].mxu0
        %v4549 = vadd.f32 %v4436, %v4548
        %v4550 = vpop.f32.mrb[0].mxu0
        %v4551 = vadd.f32 %v4438, %v4550
        %v4552 = vpop.f32.mrb[0].mxu0
        %v4553 = vadd.f32 %v4440, %v4552
        %4554 = vmatprep.mubr.bf16.mxu0 %v2027
        %4555 = vmatmul.mubr.bf16.gmra.mrb[0].mxu0 %v2026
        %v4556 = vpop.f32.mrb[0].mxu0
        %v4557 = vadd.f32 %v4444, %v4556
        %v4558 = vpop.f32.mrb[0].mxu0
        %v4559 = vadd.f32 %v4446, %v4558
        %v4560 = vpop.f32.mrb[0].mxu0
        %v4561 = vadd.f32 %v4448, %v4560
        %v4562 = vpop.f32.mrb[0].mxu0
        %v4563 = vadd.f32 %v4450, %v4562
        %4564 = vmatprep.mubr.bf16.mxu0 %v2052
        %4565 = vmatmul.mubr.bf16.gmra.mrb[0].mxu0 %v2051
        %v4566 = vpop.f32.mrb[0].mxu0
        %v4567 = vadd.f32 %v4454, %v4566
        %v4568 = vpop.f32.mrb[0].mxu0
        %v4569 = vadd.f32 %v4456, %v4568
        %v4570 = vpop.f32.mrb[0].mxu0
        %v4571 = vadd.f32 %v4458, %v4570
        %v4572 = vpop.f32.mrb[0].mxu0
        %v4573 = vadd.f32 %v4460, %v4572
        %4574 = vmatprep.mubr.bf16.mxu0 %v2077
        %4575 = vmatmul.mubr.bf16.gmra.mrb[0].mxu0 %v2076
        %v4576 = vpop.f32.mrb[0].mxu0
        %v4577 = vadd.f32 %v4464, %v4576
        %v4578 = vpop.f32.mrb[0].mxu0
        %v4579 = vadd.f32 %v4466, %v4578
        %v4580 = vpop.f32.mrb[0].mxu0
        %v4581 = vadd.f32 %v4468, %v4580
        %v4582 = vpop.f32.mrb[0].mxu0
        %v4583 = vadd.f32 %v4470, %v4582
        %4584 = vmatprep.mubr.bf16.mxu0 %v2102
        %4585 = vmatmul.mubr.bf16.gmra.mrb[0].mxu0 %v2101
        %v4586 = vpop.f32.mrb[0].mxu0
        %v4587 = vadd.f32 %v4474, %v4586
        %v4588 = vpop.f32.mrb[0].mxu0
        %v4589 = vadd.f32 %v4476, %v4588
        %v4590 = vpop.f32.mrb[0].mxu0
        %v4591 = vadd.f32 %v4478, %v4590
        %v4592 = vpop.f32.mrb[0].mxu0
        %v4593 = vadd.f32 %v4480, %v4592
        %4594 = vmatprep.mubr.bf16.mxu0 %v2127
        %4595 = vmatmul.mubr.bf16.gmra.mrb[0].mxu0 %v2126
        %v4596 = vpop.f32.mrb[0].mxu0
        %v4597 = vadd.f32 %v4484, %v4596
        %v4598 = vpop.f32.mrb[0].mxu0
        %v4599 = vadd.f32 %v4486, %v4598
        %v4600 = vpop.f32.mrb[0].mxu0
        %v4601 = vadd.f32 %v4488, %v4600
        %v4602 = vpop.f32.mrb[0].mxu0
        %v4603 = vadd.f32 %v4490, %v4602
        %4604 = vmatprep.mubr.bf16.mxu0 %v2152
        %4605 = vmatmul.mubr.bf16.gmra.mrb[0].mxu0 %v2151
        %v4606 = vpop.f32.mrb[0].mxu0
        %v4607 = vadd.f32 %v4494, %v4606
        %v4608 = vpop.f32.mrb[0].mxu0
        %v4609 = vadd.f32 %v4496, %v4608
        %v4610 = vpop.f32.mrb[0].mxu0
        %v4611 = vadd.f32 %v4498, %v4610
        %v4612 = vpop.f32.mrb[0].mxu0
        %v4613 = vadd.f32 %v4500, %v4612
        %4614 = vmatprep.mubr.bf16.mxu0 %v2177
        %4615 = vmatmul.mubr.bf16.gmra.mrb[0].mxu0 %v2176
        %v4616 = vpop.f32.mrb[0].mxu0
        %v4617 = vadd.f32 %v4504, %v4616
        %v4618 = vpop.f32.mrb[0].mxu0
        %v4619 = vadd.f32 %v4506, %v4618
        %v4620 = vpop.f32.mrb[0].mxu0
        %v4621 = vadd.f32 %v4508, %v4620
        %v4622 = vpop.f32.mrb[0].mxu0
        %v4623 = vadd.f32 %v4510, %v4622
        %4624 = vdwg.mxu0
        %4625 = vmatprep.subr.bf16.mxu0 %v3664
        %4626 = vmatpush1.bf16.msra.mxu0 %v3663
        %4627 = vmatprep.subr.bf16.mxu0 %v3666
        %4628 = vmatpush1.bf16.msra.mxu0 %v3665
        %4629 = vmatprep.subr.bf16.mxu0 %v3668
        %4630 = vmatpush1.bf16.msra.mxu0 %v3667
        %4631 = vmatprep.subr.bf16.mxu0 %v3670
        %4632 = vmatpush1.bf16.msra.mxu0 %v3669
        %4633 = vmatprep.subr.bf16.mxu0 %v3672
        %4634 = vmatpush1.bf16.msra.mxu0 %v3671
        %4635 = vmatprep.subr.bf16.mxu0 %v3674
        %4636 = vmatpush1.bf16.msra.mxu0 %v3673
        %4637 = vmatprep.subr.bf16.mxu0 %v3676
        %4638 = vmatpush1.bf16.msra.mxu0 %v3675
        %4639 = vmatprep.subr.bf16.mxu0 %v3678
        %4640 = vmatpush1.bf16.msra.mxu0 %v3677
        %4641 = vmatprep.subr.bf16.mxu0 %v3680
        %4642 = vmatpush1.bf16.msra.mxu0 %v3679
        %4643 = vmatprep.subr.bf16.mxu0 %v3682
        %4644 = vmatpush1.bf16.msra.mxu0 %v3681
        %4645 = vmatprep.subr.bf16.mxu0 %v3684
        %4646 = vmatpush1.bf16.msra.mxu0 %v3683
        %4647 = vmatprep.subr.bf16.mxu0 %v3686
        %4648 = vmatpush1.bf16.msra.mxu0 %v3685
        %4649 = vmatprep.subr.bf16.mxu0 %v3688
        %4650 = vmatpush1.bf16.msra.mxu0 %v3687
        %4651 = vmatprep.subr.bf16.mxu0 %v3690
        %4652 = vmatpush1.bf16.msra.mxu0 %v3689
        %4653 = vmatprep.subr.bf16.mxu0 %v3692
        %4654 = vmatpush1.bf16.msra.mxu0 %v3691
        %4655 = vmatprep.subr.bf16.mxu0 %v3694
        %4656 = vmatpush1.bf16.msra.mxu0 %v3693
        %4657 = vmatprep.mubr.bf16.mxu0 %v2004
        %4658 = vmatmul.mubr.bf16.gmra.mrb[0].mxu0 %v2003
        %v4659 = vpop.f32.mrb[0].mxu0
        %v4660 = vadd.f32 %v4547, %v4659
        %v4661 = vpop.f32.mrb[0].mxu0
        %v4662 = vadd.f32 %v4549, %v4661
        %v4663 = vpop.f32.mrb[0].mxu0
        %v4664 = vadd.f32 %v4551, %v4663
        %v4665 = vpop.f32.mrb[0].mxu0
        %v4666 = vadd.f32 %v4553, %v4665
        %4667 = vmatprep.mubr.bf16.mxu0 %v2029
        %4668 = vmatmul.mubr.bf16.gmra.mrb[0].mxu0 %v2028
        %v4669 = vpop.f32.mrb[0].mxu0
        %v4670 = vadd.f32 %v4557, %v4669
        %v4671 = vpop.f32.mrb[0].mxu0
        %v4672 = vadd.f32 %v4559, %v4671
        %v4673 = vpop.f32.mrb[0].mxu0
        %v4674 = vadd.f32 %v4561, %v4673
        %v4675 = vpop.f32.mrb[0].mxu0
        %v4676 = vadd.f32 %v4563, %v4675
        %4677 = vmatprep.mubr.bf16.mxu0 %v2054
        %4678 = vmatmul.mubr.bf16.gmra.mrb[0].mxu0 %v2053
        %v4679 = vpop.f32.mrb[0].mxu0
        %v4680 = vadd.f32 %v4567, %v4679
        %v4681 = vpop.f32.mrb[0].mxu0
        %v4682 = vadd.f32 %v4569, %v4681
        %v4683 = vpop.f32.mrb[0].mxu0
        %v4684 = vadd.f32 %v4571, %v4683
        %v4685 = vpop.f32.mrb[0].mxu0
        %v4686 = vadd.f32 %v4573, %v4685
        %4687 = vmatprep.mubr.bf16.mxu0 %v2079
        %4688 = vmatmul.mubr.bf16.gmra.mrb[0].mxu0 %v2078
        %v4689 = vpop.f32.mrb[0].mxu0
        %v4690 = vadd.f32 %v4577, %v4689
        %v4691 = vpop.f32.mrb[0].mxu0
        %v4692 = vadd.f32 %v4579, %v4691
        %v4693 = vpop.f32.mrb[0].mxu0
        %v4694 = vadd.f32 %v4581, %v4693
        %v4695 = vpop.f32.mrb[0].mxu0
        %v4696 = vadd.f32 %v4583, %v4695
        %4697 = vmatprep.mubr.bf16.mxu0 %v2104
        %4698 = vmatmul.mubr.bf16.gmra.mrb[0].mxu0 %v2103
        %v4699 = vpop.f32.mrb[0].mxu0
        %v4700 = vadd.f32 %v4587, %v4699
        %v4701 = vpop.f32.mrb[0].mxu0
        %v4702 = vadd.f32 %v4589, %v4701
        %v4703 = vpop.f32.mrb[0].mxu0
        %v4704 = vadd.f32 %v4591, %v4703
        %v4705 = vpop.f32.mrb[0].mxu0
        %v4706 = vadd.f32 %v4593, %v4705
        %4707 = vmatprep.mubr.bf16.mxu0 %v2129
        %4708 = vmatmul.mubr.bf16.gmra.mrb[0].mxu0 %v2128
        %v4709 = vpop.f32.mrb[0].mxu0
        %v4710 = vadd.f32 %v4597, %v4709
        %v4711 = vpop.f32.mrb[0].mxu0
        %v4712 = vadd.f32 %v4599, %v4711
        %v4713 = vpop.f32.mrb[0].mxu0
        %v4714 = vadd.f32 %v4601, %v4713
        %v4715 = vpop.f32.mrb[0].mxu0
        %v4716 = vadd.f32 %v4603, %v4715
        %4717 = vmatprep.mubr.bf16.mxu0 %v2154
        %4718 = vmatmul.mubr.bf16.gmra.mrb[0].mxu0 %v2153
        %v4719 = vpop.f32.mrb[0].mxu0
        %v4720 = vadd.f32 %v4607, %v4719
        %v4721 = vpop.f32.mrb[0].mxu0
        %v4722 = vadd.f32 %v4609, %v4721
        %v4723 = vpop.f32.mrb[0].mxu0
        %v4724 = vadd.f32 %v4611, %v4723
        %v4725 = vpop.f32.mrb[0].mxu0
        %v4726 = vadd.f32 %v4613, %v4725
        %4727 = vmatprep.mubr.bf16.mxu0 %v2179
        %4728 = vmatmul.mubr.bf16.gmra.mrb[0].mxu0 %v2178
        %v4729 = vpop.f32.mrb[0].mxu0
        %v4730 = vadd.f32 %v4617, %v4729
        %v4731 = vpop.f32.mrb[0].mxu0
        %v4732 = vadd.f32 %v4619, %v4731
        %v4733 = vpop.f32.mrb[0].mxu0
        %v4734 = vadd.f32 %v4621, %v4733
        %v4735 = vpop.f32.mrb[0].mxu0
        %v4736 = vadd.f32 %v4623, %v4735
        %4737 = vdwg.mxu0
        %4738 = vmatprep.subr.bf16.mxu0 %v3696
        %4739 = vmatpush1.bf16.msra.mxu0 %v3695
        %4740 = vmatprep.subr.bf16.mxu0 %v3698
        %4741 = vmatpush1.bf16.msra.mxu0 %v3697
        %4742 = vmatprep.subr.bf16.mxu0 %v3700
        %4743 = vmatpush1.bf16.msra.mxu0 %v3699
        %4744 = vmatprep.subr.bf16.mxu0 %v3702
        %4745 = vmatpush1.bf16.msra.mxu0 %v3701
        %4746 = vmatprep.subr.bf16.mxu0 %v3704
        %4747 = vmatpush1.bf16.msra.mxu0 %v3703
        %4748 = vmatprep.subr.bf16.mxu0 %v3706
        %4749 = vmatpush1.bf16.msra.mxu0 %v3705
        %4750 = vmatprep.subr.bf16.mxu0 %v3708
        %4751 = vmatpush1.bf16.msra.mxu0 %v3707
        %4752 = vmatprep.subr.bf16.mxu0 %v3710
        %4753 = vmatpush1.bf16.msra.mxu0 %v3709
        %4754 = vmatprep.subr.bf16.mxu0 %v3712
        %4755 = vmatpush1.bf16.msra.mxu0 %v3711
        %4756 = vmatprep.subr.bf16.mxu0 %v3714
        %4757 = vmatpush1.bf16.msra.mxu0 %v3713
        %4758 = vmatprep.subr.bf16.mxu0 %v3716
        %4759 = vmatpush1.bf16.msra.mxu0 %v3715
        %4760 = vmatprep.subr.bf16.mxu0 %v3718
        %4761 = vmatpush1.bf16.msra.mxu0 %v3717
        %4762 = vmatprep.subr.bf16.mxu0 %v3720
        %4763 = vmatpush1.bf16.msra.mxu0 %v3719
        %4764 = vmatprep.subr.bf16.mxu0 %v3722
        %4765 = vmatpush1.bf16.msra.mxu0 %v3721
        %4766 = vmatprep.subr.bf16.mxu0 %v3724
        %4767 = vmatpush1.bf16.msra.mxu0 %v3723
        %4768 = vmatprep.subr.bf16.mxu0 %v3726
        %4769 = vmatpush1.bf16.msra.mxu0 %v3725
        %4770 = vmatprep.mubr.bf16.mxu0 %v2006
        %4771 = vmatmul.mubr.bf16.gmra.mrb[0].mxu0 %v2005
        %v4772 = vpop.f32.mrb[0].mxu0
        %v4773 = vadd.f32 %v4660, %v4772
        %v4774 = vpop.f32.mrb[0].mxu0
        %v4775 = vadd.f32 %v4662, %v4774
        %v4776 = vpop.f32.mrb[0].mxu0
        %v4777 = vadd.f32 %v4664, %v4776
        %v4778 = vpop.f32.mrb[0].mxu0
        %v4779 = vadd.f32 %v4666, %v4778
        %4780 = vmatprep.mubr.bf16.mxu0 %v2031
        %4781 = vmatmul.mubr.bf16.gmra.mrb[0].mxu0 %v2030
        %v4782 = vpop.f32.mrb[0].mxu0
        %v4783 = vadd.f32 %v4670, %v4782
        %v4784 = vpop.f32.mrb[0].mxu0
        %v4785 = vadd.f32 %v4672, %v4784
        %v4786 = vpop.f32.mrb[0].mxu0
        %v4787 = vadd.f32 %v4674, %v4786
        %v4788 = vpop.f32.mrb[0].mxu0
        %v4789 = vadd.f32 %v4676, %v4788
        %4790 = vmatprep.mubr.bf16.mxu0 %v2056
        %4791 = vmatmul.mubr.bf16.gmra.mrb[0].mxu0 %v2055
        %v4792 = vpop.f32.mrb[0].mxu0
        %v4793 = vadd.f32 %v4680, %v4792
        %v4794 = vpop.f32.mrb[0].mxu0
        %v4795 = vadd.f32 %v4682, %v4794
        %v4796 = vpop.f32.mrb[0].mxu0
        %v4797 = vadd.f32 %v4684, %v4796
        %v4798 = vpop.f32.mrb[0].mxu0
        %v4799 = vadd.f32 %v4686, %v4798
        %4800 = vmatprep.mubr.bf16.mxu0 %v2081
        %4801 = vmatmul.mubr.bf16.gmra.mrb[0].mxu0 %v2080
        %v4802 = vpop.f32.mrb[0].mxu0
        %v4803 = vadd.f32 %v4690, %v4802
        %v4804 = vpop.f32.mrb[0].mxu0
        %v4805 = vadd.f32 %v4692, %v4804
        %v4806 = vpop.f32.mrb[0].mxu0
        %v4807 = vadd.f32 %v4694, %v4806
        %v4808 = vpop.f32.mrb[0].mxu0
        %v4809 = vadd.f32 %v4696, %v4808
        %4810 = vmatprep.mubr.bf16.mxu0 %v2106
        %4811 = vmatmul.mubr.bf16.gmra.mrb[0].mxu0 %v2105
        %v4812 = vpop.f32.mrb[0].mxu0
        %v4813 = vadd.f32 %v4700, %v4812
        %v4814 = vpop.f32.mrb[0].mxu0
        %v4815 = vadd.f32 %v4702, %v4814
        %v4816 = vpop.f32.mrb[0].mxu0
        %v4817 = vadd.f32 %v4704, %v4816
        %v4818 = vpop.f32.mrb[0].mxu0
        %v4819 = vadd.f32 %v4706, %v4818
        %4820 = vmatprep.mubr.bf16.mxu0 %v2131
        %4821 = vmatmul.mubr.bf16.gmra.mrb[0].mxu0 %v2130
        %v4822 = vpop.f32.mrb[0].mxu0
        %v4823 = vadd.f32 %v4710, %v4822
        %v4824 = vpop.f32.mrb[0].mxu0
        %v4825 = vadd.f32 %v4712, %v4824
        %v4826 = vpop.f32.mrb[0].mxu0
        %v4827 = vadd.f32 %v4714, %v4826
        %v4828 = vpop.f32.mrb[0].mxu0
        %v4829 = vadd.f32 %v4716, %v4828
        %4830 = vmatprep.mubr.bf16.mxu0 %v2156
        %4831 = vmatmul.mubr.bf16.gmra.mrb[0].mxu0 %v2155
        %v4832 = vpop.f32.mrb[0].mxu0
        %v4833 = vadd.f32 %v4720, %v4832
        %v4834 = vpop.f32.mrb[0].mxu0
        %v4835 = vadd.f32 %v4722, %v4834
        %v4836 = vpop.f32.mrb[0].mxu0
        %v4837 = vadd.f32 %v4724, %v4836
        %v4838 = vpop.f32.mrb[0].mxu0
        %v4839 = vadd.f32 %v4726, %v4838
        %4840 = vmatprep.mubr.bf16.mxu0 %v2181
        %4841 = vmatmul.mubr.bf16.gmra.mrb[0].mxu0 %v2180
        %v4842 = vpop.f32.mrb[0].mxu0
        %v4843 = vadd.f32 %v4730, %v4842
        %v4844 = vpop.f32.mrb[0].mxu0
        %v4845 = vadd.f32 %v4732, %v4844
        %v4846 = vpop.f32.mrb[0].mxu0
        %v4847 = vadd.f32 %v4734, %v4846
        %v4848 = vpop.f32.mrb[0].mxu0
        %v4849 = vadd.f32 %v4736, %v4848
        %4850 = vdwg.mxu0
        %4851 = vmatprep.subr.bf16.mxu0 %v3728
        %4852 = vmatpush1.bf16.msra.mxu0 %v3727
        %4853 = vmatprep.subr.bf16.mxu0 %v3730
        %4854 = vmatpush1.bf16.msra.mxu0 %v3729
        %4855 = vmatprep.subr.bf16.mxu0 %v3732
        %4856 = vmatpush1.bf16.msra.mxu0 %v3731
        %4857 = vmatprep.subr.bf16.mxu0 %v3734
        %4858 = vmatpush1.bf16.msra.mxu0 %v3733
        %4859 = vmatprep.subr.bf16.mxu0 %v3736
        %4860 = vmatpush1.bf16.msra.mxu0 %v3735
        %4861 = vmatprep.subr.bf16.mxu0 %v3738
        %4862 = vmatpush1.bf16.msra.mxu0 %v3737
        %4863 = vmatprep.subr.bf16.mxu0 %v3740
        %4864 = vmatpush1.bf16.msra.mxu0 %v3739
        %4865 = vmatprep.subr.bf16.mxu0 %v3742
        %4866 = vmatpush1.bf16.msra.mxu0 %v3741
        %4867 = vmatprep.subr.bf16.mxu0 %v3744
        %4868 = vmatpush1.bf16.msra.mxu0 %v3743
        %4869 = vmatprep.subr.bf16.mxu0 %v3746
        %4870 = vmatpush1.bf16.msra.mxu0 %v3745
        %4871 = vmatprep.subr.bf16.mxu0 %v3748
        %4872 = vmatpush1.bf16.msra.mxu0 %v3747
        %4873 = vmatprep.subr.bf16.mxu0 %v3750
        %4874 = vmatpush1.bf16.msra.mxu0 %v3749
        %4875 = vmatprep.subr.bf16.mxu0 %v3752
        %4876 = vmatpush1.bf16.msra.mxu0 %v3751
        %4877 = vmatprep.subr.bf16.mxu0 %v3754
        %4878 = vmatpush1.bf16.msra.mxu0 %v3753
        %4879 = vmatprep.subr.bf16.mxu0 %v3756
        %4880 = vmatpush1.bf16.msra.mxu0 %v3755
        %4881 = vmatprep.subr.bf16.mxu0 %v3758
        %4882 = vmatpush1.bf16.msra.mxu0 %v3757
        %4883 = vmatprep.mubr.bf16.mxu0 %v2008
        %4884 = vmatmul.mubr.bf16.gmra.mrb[0].mxu0 %v2007
        %v4885 = vpop.f32.mrb[0].mxu0
        %v4886 = vadd.f32 %v4773, %v4885
        %v4887 = vpop.f32.mrb[0].mxu0
        %v4888 = vadd.f32 %v4775, %v4887
        %v4889 = vpop.f32.mrb[0].mxu0
        %v4890 = vadd.f32 %v4777, %v4889
        %v4891 = vpop.f32.mrb[0].mxu0
        %v4892 = vadd.f32 %v4779, %v4891
        %4893 = vmatprep.mubr.bf16.mxu0 %v2033
        %4894 = vmatmul.mubr.bf16.gmra.mrb[0].mxu0 %v2032
        %v4895 = vpop.f32.mrb[0].mxu0
        %v4896 = vadd.f32 %v4783, %v4895
        %v4897 = vpop.f32.mrb[0].mxu0
        %v4898 = vadd.f32 %v4785, %v4897
        %v4899 = vpop.f32.mrb[0].mxu0
        %v4900 = vadd.f32 %v4787, %v4899
        %v4901 = vpop.f32.mrb[0].mxu0
        %v4902 = vadd.f32 %v4789, %v4901
        %4903 = vmatprep.mubr.bf16.mxu0 %v2058
        %4904 = vmatmul.mubr.bf16.gmra.mrb[0].mxu0 %v2057
        %v4905 = vpop.f32.mrb[0].mxu0
        %v4906 = vadd.f32 %v4793, %v4905
        %v4907 = vpop.f32.mrb[0].mxu0
        %v4908 = vadd.f32 %v4795, %v4907
        %v4909 = vpop.f32.mrb[0].mxu0
        %v4910 = vadd.f32 %v4797, %v4909
        %v4911 = vpop.f32.mrb[0].mxu0
        %v4912 = vadd.f32 %v4799, %v4911
        %4913 = vmatprep.mubr.bf16.mxu0 %v2083
        %4914 = vmatmul.mubr.bf16.gmra.mrb[0].mxu0 %v2082
        %v4915 = vpop.f32.mrb[0].mxu0
        %v4916 = vadd.f32 %v4803, %v4915
        %v4917 = vpop.f32.mrb[0].mxu0
        %v4918 = vadd.f32 %v4805, %v4917
        %v4919 = vpop.f32.mrb[0].mxu0
        %v4920 = vadd.f32 %v4807, %v4919
        %v4921 = vpop.f32.mrb[0].mxu0
        %v4922 = vadd.f32 %v4809, %v4921
        %4923 = vmatprep.mubr.bf16.mxu0 %v2108
        %4924 = vmatmul.mubr.bf16.gmra.mrb[0].mxu0 %v2107
        %v4925 = vpop.f32.mrb[0].mxu0
        %v4926 = vadd.f32 %v4813, %v4925
        %v4927 = vpop.f32.mrb[0].mxu0
        %v4928 = vadd.f32 %v4815, %v4927
        %v4929 = vpop.f32.mrb[0].mxu0
        %v4930 = vadd.f32 %v4817, %v4929
        %v4931 = vpop.f32.mrb[0].mxu0
        %v4932 = vadd.f32 %v4819, %v4931
        %4933 = vmatprep.mubr.bf16.mxu0 %v2133
        %4934 = vmatmul.mubr.bf16.gmra.mrb[0].mxu0 %v2132
        %v4935 = vpop.f32.mrb[0].mxu0
        %v4936 = vadd.f32 %v4823, %v4935
        %v4937 = vpop.f32.mrb[0].mxu0
        %v4938 = vadd.f32 %v4825, %v4937
        %v4939 = vpop.f32.mrb[0].mxu0
        %v4940 = vadd.f32 %v4827, %v4939
        %v4941 = vpop.f32.mrb[0].mxu0
        %v4942 = vadd.f32 %v4829, %v4941
        %4943 = vmatprep.mubr.bf16.mxu0 %v2158
        %4944 = vmatmul.mubr.bf16.gmra.mrb[0].mxu0 %v2157
        %v4945 = vpop.f32.mrb[0].mxu0
        %v4946 = vadd.f32 %v4833, %v4945
        %v4947 = vpop.f32.mrb[0].mxu0
        %v4948 = vadd.f32 %v4835, %v4947
        %v4949 = vpop.f32.mrb[0].mxu0
        %v4950 = vadd.f32 %v4837, %v4949
        %v4951 = vpop.f32.mrb[0].mxu0
        %v4952 = vadd.f32 %v4839, %v4951
        %4953 = vmatprep.mubr.bf16.mxu0 %v2183
        %4954 = vmatmul.mubr.bf16.gmra.mrb[0].mxu0 %v2182
        %v4955 = vpop.f32.mrb[0].mxu0
        %v4956 = vadd.f32 %v4843, %v4955
        %v4957 = vpop.f32.mrb[0].mxu0
        %v4958 = vadd.f32 %v4845, %v4957
        %v4959 = vpop.f32.mrb[0].mxu0
        %v4960 = vadd.f32 %v4847, %v4959
        %v4961 = vpop.f32.mrb[0].mxu0
        %v4962 = vadd.f32 %v4849, %v4961
        %4963 = vdwg.mxu0
        %4964 = vmatprep.subr.bf16.mxu0 %v3760
        %4965 = vmatpush1.bf16.msra.mxu0 %v3759
        %4966 = vmatprep.subr.bf16.mxu0 %v3762
        %4967 = vmatpush1.bf16.msra.mxu0 %v3761
        %4968 = vmatprep.subr.bf16.mxu0 %v3764
        %4969 = vmatpush1.bf16.msra.mxu0 %v3763
        %4970 = vmatprep.subr.bf16.mxu0 %v3766
        %4971 = vmatpush1.bf16.msra.mxu0 %v3765
        %4972 = vmatprep.subr.bf16.mxu0 %v3768
        %4973 = vmatpush1.bf16.msra.mxu0 %v3767
        %4974 = vmatprep.subr.bf16.mxu0 %v3770
        %4975 = vmatpush1.bf16.msra.mxu0 %v3769
        %4976 = vmatprep.subr.bf16.mxu0 %v3772
        %4977 = vmatpush1.bf16.msra.mxu0 %v3771
        %4978 = vmatprep.subr.bf16.mxu0 %v3774
        %4979 = vmatpush1.bf16.msra.mxu0 %v3773
        %4980 = vmatprep.subr.bf16.mxu0 %v3776
        %4981 = vmatpush1.bf16.msra.mxu0 %v3775
        %4982 = vmatprep.subr.bf16.mxu0 %v3778
        %4983 = vmatpush1.bf16.msra.mxu0 %v3777
        %4984 = vmatprep.subr.bf16.mxu0 %v3780
        %4985 = vmatpush1.bf16.msra.mxu0 %v3779
        %4986 = vmatprep.subr.bf16.mxu0 %v3782
        %4987 = vmatpush1.bf16.msra.mxu0 %v3781
        %4988 = vmatprep.subr.bf16.mxu0 %v3784
        %4989 = vmatpush1.bf16.msra.mxu0 %v3783
        %4990 = vmatprep.subr.bf16.mxu0 %v3786
        %4991 = vmatpush1.bf16.msra.mxu0 %v3785
        %4992 = vmatprep.subr.bf16.mxu0 %v3788
        %4993 = vmatpush1.bf16.msra.mxu0 %v3787
        %4994 = vmatprep.subr.bf16.mxu0 %v3790
        %4995 = vmatpush1.bf16.msra.mxu0 %v3789
        %4996 = vmatprep.mubr.bf16.mxu0 %v2010
        %4997 = vmatmul.mubr.bf16.gmra.mrb[0].mxu0 %v2009
        %v4998 = vpop.f32.mrb[0].mxu0
        %v4999 = vadd.f32 %v4886, %v4998
        %v5000 = vpop.f32.mrb[0].mxu0
        %v5001 = vadd.f32 %v4888, %v5000
        %v5002 = vpop.f32.mrb[0].mxu0
        %v5003 = vadd.f32 %v4890, %v5002
        %v5004 = vpop.f32.mrb[0].mxu0
        %v5005 = vadd.f32 %v4892, %v5004
        %5006 = vmatprep.mubr.bf16.mxu0 %v2035
        %5007 = vmatmul.mubr.bf16.gmra.mrb[0].mxu0 %v2034
        %v5008 = vpop.f32.mrb[0].mxu0
        %v5009 = vadd.f32 %v4896, %v5008
        %v5010 = vpop.f32.mrb[0].mxu0
        %v5011 = vadd.f32 %v4898, %v5010
        %v5012 = vpop.f32.mrb[0].mxu0
        %v5013 = vadd.f32 %v4900, %v5012
        %v5014 = vpop.f32.mrb[0].mxu0
        %v5015 = vadd.f32 %v4902, %v5014
        %5016 = vmatprep.mubr.bf16.mxu0 %v2060
        %5017 = vmatmul.mubr.bf16.gmra.mrb[0].mxu0 %v2059
        %v5018 = vpop.f32.mrb[0].mxu0
        %v5019 = vadd.f32 %v4906, %v5018
        %v5020 = vpop.f32.mrb[0].mxu0
        %v5021 = vadd.f32 %v4908, %v5020
        %v5022 = vpop.f32.mrb[0].mxu0
        %v5023 = vadd.f32 %v4910, %v5022
        %v5024 = vpop.f32.mrb[0].mxu0
        %v5025 = vadd.f32 %v4912, %v5024
        %5026 = vmatprep.mubr.bf16.mxu0 %v2085
        %5027 = vmatmul.mubr.bf16.gmra.mrb[0].mxu0 %v2084
        %v5028 = vpop.f32.mrb[0].mxu0
        %v5029 = vadd.f32 %v4916, %v5028
        %v5030 = vpop.f32.mrb[0].mxu0
        %v5031 = vadd.f32 %v4918, %v5030
        %v5032 = vpop.f32.mrb[0].mxu0
        %v5033 = vadd.f32 %v4920, %v5032
        %v5034 = vpop.f32.mrb[0].mxu0
        %v5035 = vadd.f32 %v4922, %v5034
        %5036 = vmatprep.mubr.bf16.mxu0 %v2110
        %5037 = vmatmul.mubr.bf16.gmra.mrb[0].mxu0 %v2109
        %v5038 = vpop.f32.mrb[0].mxu0
        %v5039 = vadd.f32 %v4926, %v5038
        %v5040 = vpop.f32.mrb[0].mxu0
        %v5041 = vadd.f32 %v4928, %v5040
        %v5042 = vpop.f32.mrb[0].mxu0
        %v5043 = vadd.f32 %v4930, %v5042
        %v5044 = vpop.f32.mrb[0].mxu0
        %v5045 = vadd.f32 %v4932, %v5044
        %5046 = vmatprep.mubr.bf16.mxu0 %v2135
        %5047 = vmatmul.mubr.bf16.gmra.mrb[0].mxu0 %v2134
        %v5048 = vpop.f32.mrb[0].mxu0
        %v5049 = vadd.f32 %v4936, %v5048
        %v5050 = vpop.f32.mrb[0].mxu0
        %v5051 = vadd.f32 %v4938, %v5050
        %v5052 = vpop.f32.mrb[0].mxu0
        %v5053 = vadd.f32 %v4940, %v5052
        %v5054 = vpop.f32.mrb[0].mxu0
        %v5055 = vadd.f32 %v4942, %v5054
        %5056 = vmatprep.mubr.bf16.mxu0 %v2160
        %5057 = vmatmul.mubr.bf16.gmra.mrb[0].mxu0 %v2159
        %v5058 = vpop.f32.mrb[0].mxu0
        %v5059 = vadd.f32 %v4946, %v5058
        %v5060 = vpop.f32.mrb[0].mxu0
        %v5061 = vadd.f32 %v4948, %v5060
        %v5062 = vpop.f32.mrb[0].mxu0
        %v5063 = vadd.f32 %v4950, %v5062
        %v5064 = vpop.f32.mrb[0].mxu0
        %v5065 = vadd.f32 %v4952, %v5064
        %5066 = vmatprep.mubr.bf16.mxu0 %v2185
        %5067 = vmatmul.mubr.bf16.gmra.mrb[0].mxu0 %v2184
        %v5068 = vpop.f32.mrb[0].mxu0
        %v5069 = vadd.f32 %v4956, %v5068
        %v5070 = vpop.f32.mrb[0].mxu0
        %v5071 = vadd.f32 %v4958, %v5070
        %v5072 = vpop.f32.mrb[0].mxu0
        %v5073 = vadd.f32 %v4960, %v5072
        %v5074 = vpop.f32.mrb[0].mxu0
        %v5075 = vadd.f32 %v4962, %v5074
        %5076 = vdwg.mxu0
        %5077 = vmatprep.subr.bf16.mxu0 %v3792
        %5078 = vmatpush1.bf16.msra.mxu0 %v3791
        %5079 = vmatprep.subr.bf16.mxu0 %v3794
        %5080 = vmatpush1.bf16.msra.mxu0 %v3793
        %5081 = vmatprep.subr.bf16.mxu0 %v3796
        %5082 = vmatpush1.bf16.msra.mxu0 %v3795
        %5083 = vmatprep.subr.bf16.mxu0 %v3798
        %5084 = vmatpush1.bf16.msra.mxu0 %v3797
        %5085 = vmatprep.subr.bf16.mxu0 %v3800
        %5086 = vmatpush1.bf16.msra.mxu0 %v3799
        %5087 = vmatprep.subr.bf16.mxu0 %v3802
        %5088 = vmatpush1.bf16.msra.mxu0 %v3801
        %5089 = vmatprep.subr.bf16.mxu0 %v3804
        %5090 = vmatpush1.bf16.msra.mxu0 %v3803
        %5091 = vmatprep.subr.bf16.mxu0 %v3806
        %5092 = vmatpush1.bf16.msra.mxu0 %v3805
        %5093 = vmatprep.subr.bf16.mxu0 %v3808
        %5094 = vmatpush1.bf16.msra.mxu0 %v3807
        %5095 = vmatprep.subr.bf16.mxu0 %v3810
        %5096 = vmatpush1.bf16.msra.mxu0 %v3809
        %5097 = vmatprep.subr.bf16.mxu0 %v3812
        %5098 = vmatpush1.bf16.msra.mxu0 %v3811
        %5099 = vmatprep.subr.bf16.mxu0 %v3814
        %5100 = vmatpush1.bf16.msra.mxu0 %v3813
        %5101 = vmatprep.subr.bf16.mxu0 %v3816
        %5102 = vmatpush1.bf16.msra.mxu0 %v3815
        %5103 = vmatprep.subr.bf16.mxu0 %v3818
        %5104 = vmatpush1.bf16.msra.mxu0 %v3817
        %5105 = vmatprep.subr.bf16.mxu0 %v3820
        %5106 = vmatpush1.bf16.msra.mxu0 %v3819
        %5107 = vmatprep.subr.bf16.mxu0 %v3822
        %5108 = vmatpush1.bf16.msra.mxu0 %v3821
        %5109 = vmatprep.mubr.bf16.mxu0 %v2012
        %5110 = vmatmul.mubr.bf16.gmra.mrb[0].mxu0 %v2011
        %v5111 = vpop.f32.mrb[0].mxu0
        %v5112 = vadd.f32 %v4999, %v5111
        %v5113 = vpop.f32.mrb[0].mxu0
        %v5114 = vadd.f32 %v5001, %v5113
        %v5115 = vpop.f32.mrb[0].mxu0
        %v5116 = vadd.f32 %v5003, %v5115
        %v5117 = vpop.f32.mrb[0].mxu0
        %v5118 = vadd.f32 %v5005, %v5117
        %5119 = vmatprep.mubr.bf16.mxu0 %v2037
        %5120 = vmatmul.mubr.bf16.gmra.mrb[0].mxu0 %v2036
        %v5121 = vpop.f32.mrb[0].mxu0
        %v5122 = vadd.f32 %v5009, %v5121
        %v5123 = vpop.f32.mrb[0].mxu0
        %v5124 = vadd.f32 %v5011, %v5123
        %v5125 = vpop.f32.mrb[0].mxu0
        %v5126 = vadd.f32 %v5013, %v5125
        %v5127 = vpop.f32.mrb[0].mxu0
        %v5128 = vadd.f32 %v5015, %v5127
        %5129 = vmatprep.mubr.bf16.mxu0 %v2062
        %5130 = vmatmul.mubr.bf16.gmra.mrb[0].mxu0 %v2061
        %v5131 = vpop.f32.mrb[0].mxu0
        %v5132 = vadd.f32 %v5019, %v5131
        %v5133 = vpop.f32.mrb[0].mxu0
        %v5134 = vadd.f32 %v5021, %v5133
        %v5135 = vpop.f32.mrb[0].mxu0
        %v5136 = vadd.f32 %v5023, %v5135
        %v5137 = vpop.f32.mrb[0].mxu0
        %v5138 = vadd.f32 %v5025, %v5137
        %5139 = vmatprep.mubr.bf16.mxu0 %v2087
        %5140 = vmatmul.mubr.bf16.gmra.mrb[0].mxu0 %v2086
        %v5141 = vpop.f32.mrb[0].mxu0
        %v5142 = vadd.f32 %v5029, %v5141
        %v5143 = vpop.f32.mrb[0].mxu0
        %v5144 = vadd.f32 %v5031, %v5143
        %v5145 = vpop.f32.mrb[0].mxu0
        %v5146 = vadd.f32 %v5033, %v5145
        %v5147 = vpop.f32.mrb[0].mxu0
        %v5148 = vadd.f32 %v5035, %v5147
        %5149 = vmatprep.mubr.bf16.mxu0 %v2112
        %5150 = vmatmul.mubr.bf16.gmra.mrb[0].mxu0 %v2111
        %v5151 = vpop.f32.mrb[0].mxu0
        %v5152 = vadd.f32 %v5039, %v5151
        %v5153 = vpop.f32.mrb[0].mxu0
        %v5154 = vadd.f32 %v5041, %v5153
        %v5155 = vpop.f32.mrb[0].mxu0
        %v5156 = vadd.f32 %v5043, %v5155
        %v5157 = vpop.f32.mrb[0].mxu0
        %v5158 = vadd.f32 %v5045, %v5157
        %5159 = vmatprep.mubr.bf16.mxu0 %v2137
        %5160 = vmatmul.mubr.bf16.gmra.mrb[0].mxu0 %v2136
        %v5161 = vpop.f32.mrb[0].mxu0
        %v5162 = vadd.f32 %v5049, %v5161
        %v5163 = vpop.f32.mrb[0].mxu0
        %v5164 = vadd.f32 %v5051, %v5163
        %v5165 = vpop.f32.mrb[0].mxu0
        %v5166 = vadd.f32 %v5053, %v5165
        %v5167 = vpop.f32.mrb[0].mxu0
        %v5168 = vadd.f32 %v5055, %v5167
        %5169 = vmatprep.mubr.bf16.mxu0 %v2162
        %5170 = vmatmul.mubr.bf16.gmra.mrb[0].mxu0 %v2161
        %v5171 = vpop.f32.mrb[0].mxu0
        %v5172 = vadd.f32 %v5059, %v5171
        %v5173 = vpop.f32.mrb[0].mxu0
        %v5174 = vadd.f32 %v5061, %v5173
        %v5175 = vpop.f32.mrb[0].mxu0
        %v5176 = vadd.f32 %v5063, %v5175
        %v5177 = vpop.f32.mrb[0].mxu0
        %v5178 = vadd.f32 %v5065, %v5177
        %5179 = vmatprep.mubr.bf16.mxu0 %v2187
        %5180 = vmatmul.mubr.bf16.gmra.mrb[0].mxu0 %v2186
        %v5181 = vpop.f32.mrb[0].mxu0
        %v5182 = vadd.f32 %v5069, %v5181
        %v5183 = vpop.f32.mrb[0].mxu0
        %v5184 = vadd.f32 %v5071, %v5183
        %v5185 = vpop.f32.mrb[0].mxu0
        %v5186 = vadd.f32 %v5073, %v5185
        %v5187 = vpop.f32.mrb[0].mxu0
        %v5188 = vadd.f32 %v5075, %v5187
        %5189 = vdwg.mxu0
        %5190 = vmatprep.subr.bf16.mxu0 %v3824
        %5191 = vmatpush1.bf16.msra.mxu0 %v3823
        %5192 = vmatprep.subr.bf16.mxu0 %v3826
        %5193 = vmatpush1.bf16.msra.mxu0 %v3825
        %5194 = vmatprep.subr.bf16.mxu0 %v3828
        %5195 = vmatpush1.bf16.msra.mxu0 %v3827
        %5196 = vmatprep.subr.bf16.mxu0 %v3830
        %5197 = vmatpush1.bf16.msra.mxu0 %v3829
        %5198 = vmatprep.subr.bf16.mxu0 %v3832
        %5199 = vmatpush1.bf16.msra.mxu0 %v3831
        %5200 = vmatprep.subr.bf16.mxu0 %v3834
        %5201 = vmatpush1.bf16.msra.mxu0 %v3833
        %5202 = vmatprep.subr.bf16.mxu0 %v3836
        %5203 = vmatpush1.bf16.msra.mxu0 %v3835
        %5204 = vmatprep.subr.bf16.mxu0 %v3838
        %5205 = vmatpush1.bf16.msra.mxu0 %v3837
        %5206 = vmatprep.subr.bf16.mxu0 %v3840
        %5207 = vmatpush1.bf16.msra.mxu0 %v3839
        %5208 = vmatprep.subr.bf16.mxu0 %v3842
        %5209 = vmatpush1.bf16.msra.mxu0 %v3841
        %5210 = vmatprep.subr.bf16.mxu0 %v3844
        %5211 = vmatpush1.bf16.msra.mxu0 %v3843
        %5212 = vmatprep.subr.bf16.mxu0 %v3846
        %5213 = vmatpush1.bf16.msra.mxu0 %v3845
        %5214 = vmatprep.subr.bf16.mxu0 %v3848
        %5215 = vmatpush1.bf16.msra.mxu0 %v3847
        %5216 = vmatprep.subr.bf16.mxu0 %v3850
        %5217 = vmatpush1.bf16.msra.mxu0 %v3849
        %5218 = vmatprep.subr.bf16.mxu0 %v3852
        %5219 = vmatpush1.bf16.msra.mxu0 %v3851
        %5220 = vmatprep.subr.bf16.mxu0 %v3854
        %5221 = vmatpush1.bf16.msra.mxu0 %v3853
        %5222 = vmatprep.mubr.bf16.mxu0 %v2014
        %5223 = vmatmul.mubr.bf16.gmra.mrb[0].mxu0 %v2013
        %v5224 = vpop.f32.mrb[0].mxu0
        %v5225 = vadd.f32 %v5112, %v5224
        %v5226 = vpop.f32.mrb[0].mxu0
        %v5227 = vadd.f32 %v5114, %v5226
        %v5228 = vpop.f32.mrb[0].mxu0
        %v5229 = vadd.f32 %v5116, %v5228
        %v5230 = vpop.f32.mrb[0].mxu0
        %v5231 = vadd.f32 %v5118, %v5230
        %5232 = vmatprep.mubr.bf16.mxu0 %v2039
        %5233 = vmatmul.mubr.bf16.gmra.mrb[0].mxu0 %v2038
        %v5234 = vpop.f32.mrb[0].mxu0
        %v5235 = vadd.f32 %v5122, %v5234
        %v5236 = vpop.f32.mrb[0].mxu0
        %v5237 = vadd.f32 %v5124, %v5236
        %v5238 = vpop.f32.mrb[0].mxu0
        %v5239 = vadd.f32 %v5126, %v5238
        %v5240 = vpop.f32.mrb[0].mxu0
        %v5241 = vadd.f32 %v5128, %v5240
        %5242 = vmatprep.mubr.bf16.mxu0 %v2064
        %5243 = vmatmul.mubr.bf16.gmra.mrb[0].mxu0 %v2063
        %v5244 = vpop.f32.mrb[0].mxu0
        %v5245 = vadd.f32 %v5132, %v5244
        %v5246 = vpop.f32.mrb[0].mxu0
        %v5247 = vadd.f32 %v5134, %v5246
        %v5248 = vpop.f32.mrb[0].mxu0
        %v5249 = vadd.f32 %v5136, %v5248
        %v5250 = vpop.f32.mrb[0].mxu0
        %v5251 = vadd.f32 %v5138, %v5250
        %5252 = vmatprep.mubr.bf16.mxu0 %v2089
        %5253 = vmatmul.mubr.bf16.gmra.mrb[0].mxu0 %v2088
        %v5254 = vpop.f32.mrb[0].mxu0
        %v5255 = vadd.f32 %v5142, %v5254
        %v5256 = vpop.f32.mrb[0].mxu0
        %v5257 = vadd.f32 %v5144, %v5256
        %v5258 = vpop.f32.mrb[0].mxu0
        %v5259 = vadd.f32 %v5146, %v5258
        %v5260 = vpop.f32.mrb[0].mxu0
        %v5261 = vadd.f32 %v5148, %v5260
        %5262 = vmatprep.mubr.bf16.mxu0 %v2114
        %5263 = vmatmul.mubr.bf16.gmra.mrb[0].mxu0 %v2113
        %v5264 = vpop.f32.mrb[0].mxu0
        %v5265 = vadd.f32 %v5152, %v5264
        %v5266 = vpop.f32.mrb[0].mxu0
        %v5267 = vadd.f32 %v5154, %v5266
        %v5268 = vpop.f32.mrb[0].mxu0
        %v5269 = vadd.f32 %v5156, %v5268
        %v5270 = vpop.f32.mrb[0].mxu0
        %v5271 = vadd.f32 %v5158, %v5270
        %5272 = vmatprep.mubr.bf16.mxu0 %v2139
        %5273 = vmatmul.mubr.bf16.gmra.mrb[0].mxu0 %v2138
        %v5274 = vpop.f32.mrb[0].mxu0
        %v5275 = vadd.f32 %v5162, %v5274
        %v5276 = vpop.f32.mrb[0].mxu0
        %v5277 = vadd.f32 %v5164, %v5276
        %v5278 = vpop.f32.mrb[0].mxu0
        %v5279 = vadd.f32 %v5166, %v5278
        %v5280 = vpop.f32.mrb[0].mxu0
        %v5281 = vadd.f32 %v5168, %v5280
        %5282 = vmatprep.mubr.bf16.mxu0 %v2164
        %5283 = vmatmul.mubr.bf16.gmra.mrb[0].mxu0 %v2163
        %v5284 = vpop.f32.mrb[0].mxu0
        %v5285 = vadd.f32 %v5172, %v5284
        %v5286 = vpop.f32.mrb[0].mxu0
        %v5287 = vadd.f32 %v5174, %v5286
        %v5288 = vpop.f32.mrb[0].mxu0
        %v5289 = vadd.f32 %v5176, %v5288
        %v5290 = vpop.f32.mrb[0].mxu0
        %v5291 = vadd.f32 %v5178, %v5290
        %5292 = vmatprep.mubr.bf16.mxu0 %v2189
        %5293 = vmatmul.mubr.bf16.gmra.mrb[0].mxu0 %v2188
        %v5294 = vpop.f32.mrb[0].mxu0
        %v5295 = vadd.f32 %v5182, %v5294
        %v5296 = vpop.f32.mrb[0].mxu0
        %v5297 = vadd.f32 %v5184, %v5296
        %v5298 = vpop.f32.mrb[0].mxu0
        %v5299 = vadd.f32 %v5186, %v5298
        %v5300 = vpop.f32.mrb[0].mxu0
        %v5301 = vadd.f32 %v5188, %v5300
        %5302 = vdwg.mxu0
        %5303 = vmatprep.subr.bf16.mxu0 %v3856
        %5304 = vmatpush1.bf16.msra.mxu0 %v3855
        %5305 = vmatprep.subr.bf16.mxu0 %v3858
        %5306 = vmatpush1.bf16.msra.mxu0 %v3857
        %5307 = vmatprep.subr.bf16.mxu0 %v3860
        %5308 = vmatpush1.bf16.msra.mxu0 %v3859
        %5309 = vmatprep.subr.bf16.mxu0 %v3862
        %5310 = vmatpush1.bf16.msra.mxu0 %v3861
        %5311 = vmatprep.subr.bf16.mxu0 %v3864
        %5312 = vmatpush1.bf16.msra.mxu0 %v3863
        %5313 = vmatprep.subr.bf16.mxu0 %v3866
        %5314 = vmatpush1.bf16.msra.mxu0 %v3865
        %5315 = vmatprep.subr.bf16.mxu0 %v3868
        %5316 = vmatpush1.bf16.msra.mxu0 %v3867
        %5317 = vmatprep.subr.bf16.mxu0 %v3870
        %5318 = vmatpush1.bf16.msra.mxu0 %v3869
        %5319 = vmatprep.subr.bf16.mxu0 %v3872
        %5320 = vmatpush1.bf16.msra.mxu0 %v3871
        %5321 = vmatprep.subr.bf16.mxu0 %v3874
        %5322 = vmatpush1.bf16.msra.mxu0 %v3873
        %5323 = vmatprep.subr.bf16.mxu0 %v3876
        %5324 = vmatpush1.bf16.msra.mxu0 %v3875
        %5325 = vmatprep.subr.bf16.mxu0 %v3878
        %5326 = vmatpush1.bf16.msra.mxu0 %v3877
        %5327 = vmatprep.subr.bf16.mxu0 %v3880
        %5328 = vmatpush1.bf16.msra.mxu0 %v3879
        %5329 = vmatprep.subr.bf16.mxu0 %v3882
        %5330 = vmatpush1.bf16.msra.mxu0 %v3881
        %5331 = vmatprep.subr.bf16.mxu0 %v3884
        %5332 = vmatpush1.bf16.msra.mxu0 %v3883
        %5333 = vmatprep.subr.bf16.mxu0 %v3886
        %5334 = vmatpush1.bf16.msra.mxu0 %v3885
        %5335 = vmatprep.mubr.bf16.mxu0 %v2016
        %5336 = vmatmul.mubr.bf16.gmra.mrb[0].mxu0 %v2015
        %v5337 = vpop.f32.mrb[0].mxu0
        %v5338 = vadd.f32 %v5225, %v5337
        %v5339 = vpop.f32.mrb[0].mxu0
        %v5340 = vadd.f32 %v5227, %v5339
        %v5341 = vpop.f32.mrb[0].mxu0
        %v5342 = vadd.f32 %v5229, %v5341
        %v5343 = vpop.f32.mrb[0].mxu0
        %v5344 = vadd.f32 %v5231, %v5343
        %5345 = vmatprep.mubr.bf16.mxu0 %v2041
        %5346 = vmatmul.mubr.bf16.gmra.mrb[0].mxu0 %v2040
        %v5347 = vpop.f32.mrb[0].mxu0
        %v5348 = vadd.f32 %v5235, %v5347
        %v5349 = vpop.f32.mrb[0].mxu0
        %v5350 = vadd.f32 %v5237, %v5349
        %v5351 = vpop.f32.mrb[0].mxu0
        %v5352 = vadd.f32 %v5239, %v5351
        %v5353 = vpop.f32.mrb[0].mxu0
        %v5354 = vadd.f32 %v5241, %v5353
        %5355 = vmatprep.mubr.bf16.mxu0 %v2066
        %5356 = vmatmul.mubr.bf16.gmra.mrb[0].mxu0 %v2065
        %v5357 = vpop.f32.mrb[0].mxu0
        %v5358 = vadd.f32 %v5245, %v5357
        %v5359 = vpop.f32.mrb[0].mxu0
        %v5360 = vadd.f32 %v5247, %v5359
        %v5361 = vpop.f32.mrb[0].mxu0
        %v5362 = vadd.f32 %v5249, %v5361
        %v5363 = vpop.f32.mrb[0].mxu0
        %v5364 = vadd.f32 %v5251, %v5363
        %5365 = vmatprep.mubr.bf16.mxu0 %v2091
        %5366 = vmatmul.mubr.bf16.gmra.mrb[0].mxu0 %v2090
        %v5367 = vpop.f32.mrb[0].mxu0
        %v5368 = vadd.f32 %v5255, %v5367
        %v5369 = vpop.f32.mrb[0].mxu0
        %v5370 = vadd.f32 %v5257, %v5369
        %v5371 = vpop.f32.mrb[0].mxu0
        %v5372 = vadd.f32 %v5259, %v5371
        %v5373 = vpop.f32.mrb[0].mxu0
        %v5374 = vadd.f32 %v5261, %v5373
        %5375 = vmatprep.mubr.bf16.mxu0 %v2116
        %5376 = vmatmul.mubr.bf16.gmra.mrb[0].mxu0 %v2115
        %v5377 = vpop.f32.mrb[0].mxu0
        %v5378 = vadd.f32 %v5265, %v5377
        %v5379 = vpop.f32.mrb[0].mxu0
        %v5380 = vadd.f32 %v5267, %v5379
        %v5381 = vpop.f32.mrb[0].mxu0
        %v5382 = vadd.f32 %v5269, %v5381
        %v5383 = vpop.f32.mrb[0].mxu0
        %v5384 = vadd.f32 %v5271, %v5383
        %5385 = vmatprep.mubr.bf16.mxu0 %v2141
        %5386 = vmatmul.mubr.bf16.gmra.mrb[0].mxu0 %v2140
        %v5387 = vpop.f32.mrb[0].mxu0
        %v5388 = vadd.f32 %v5275, %v5387
        %v5389 = vpop.f32.mrb[0].mxu0
        %v5390 = vadd.f32 %v5277, %v5389
        %v5391 = vpop.f32.mrb[0].mxu0
        %v5392 = vadd.f32 %v5279, %v5391
        %v5393 = vpop.f32.mrb[0].mxu0
        %v5394 = vadd.f32 %v5281, %v5393
        %5395 = vmatprep.mubr.bf16.mxu0 %v2166
        %5396 = vmatmul.mubr.bf16.gmra.mrb[0].mxu0 %v2165
        %v5397 = vpop.f32.mrb[0].mxu0
        %v5398 = vadd.f32 %v5285, %v5397
        %v5399 = vpop.f32.mrb[0].mxu0
        %v5400 = vadd.f32 %v5287, %v5399
        %v5401 = vpop.f32.mrb[0].mxu0
        %v5402 = vadd.f32 %v5289, %v5401
        %v5403 = vpop.f32.mrb[0].mxu0
        %v5404 = vadd.f32 %v5291, %v5403
        %5405 = vmatprep.mubr.bf16.mxu0 %v2191
        %5406 = vmatmul.mubr.bf16.gmra.mrb[0].mxu0 %v2190
        %v5407 = vpop.f32.mrb[0].mxu0
        %v5408 = vadd.f32 %v5295, %v5407
        %v5409 = vpop.f32.mrb[0].mxu0
        %v5410 = vadd.f32 %v5297, %v5409
        %v5411 = vpop.f32.mrb[0].mxu0
        %v5412 = vadd.f32 %v5299, %v5411
        %v5413 = vpop.f32.mrb[0].mxu0
        %v5414 = vadd.f32 %v5301, %v5413
        %5415 = vdwg.mxu0
        %5416 = vmatprep.subr.bf16.mxu0 %v3888
        %5417 = vmatpush1.bf16.msra.mxu0 %v3887
        %5418 = vmatprep.subr.bf16.mxu0 %v3890
        %5419 = vmatpush1.bf16.msra.mxu0 %v3889
        %5420 = vmatprep.subr.bf16.mxu0 %v3892
        %5421 = vmatpush1.bf16.msra.mxu0 %v3891
        %5422 = vmatprep.subr.bf16.mxu0 %v3894
        %5423 = vmatpush1.bf16.msra.mxu0 %v3893
        %5424 = vmatprep.subr.bf16.mxu0 %v3896
        %5425 = vmatpush1.bf16.msra.mxu0 %v3895
        %5426 = vmatprep.subr.bf16.mxu0 %v3898
        %5427 = vmatpush1.bf16.msra.mxu0 %v3897
        %5428 = vmatprep.subr.bf16.mxu0 %v3900
        %5429 = vmatpush1.bf16.msra.mxu0 %v3899
        %5430 = vmatprep.subr.bf16.mxu0 %v3902
        %5431 = vmatpush1.bf16.msra.mxu0 %v3901
        %5432 = vmatprep.subr.bf16.mxu0 %v3904
        %5433 = vmatpush1.bf16.msra.mxu0 %v3903
        %5434 = vmatprep.subr.bf16.mxu0 %v3906
        %5435 = vmatpush1.bf16.msra.mxu0 %v3905
        %5436 = vmatprep.subr.bf16.mxu0 %v3908
        %5437 = vmatpush1.bf16.msra.mxu0 %v3907
        %5438 = vmatprep.subr.bf16.mxu0 %v3910
        %5439 = vmatpush1.bf16.msra.mxu0 %v3909
        %5440 = vmatprep.subr.bf16.mxu0 %v3912
        %5441 = vmatpush1.bf16.msra.mxu0 %v3911
        %5442 = vmatprep.subr.bf16.mxu0 %v3914
        %5443 = vmatpush1.bf16.msra.mxu0 %v3913
        %5444 = vmatprep.subr.bf16.mxu0 %v3916
        %5445 = vmatpush1.bf16.msra.mxu0 %v3915
        %5446 = vmatprep.subr.bf16.mxu0 %v3918
        %5447 = vmatpush1.bf16.msra.mxu0 %v3917
        %5448 = vmatprep.mubr.bf16.mxu0 %v2018
        %5449 = vmatmul.mubr.bf16.gmra.mrb[0].mxu0 %v2017
        %v5450 = vpop.f32.mrb[0].mxu0
        %v5451 = vadd.f32 %v5338, %v5450
        %v5452 = vpop.f32.mrb[0].mxu0
        %v5453 = vadd.f32 %v5340, %v5452
        %v5454 = vpop.f32.mrb[0].mxu0
        %v5455 = vadd.f32 %v5342, %v5454
        %v5456 = vpop.f32.mrb[0].mxu0
        %v5457 = vadd.f32 %v5344, %v5456
        %5458 = vmatprep.mubr.bf16.mxu0 %v2043
        %5459 = vmatmul.mubr.bf16.gmra.mrb[0].mxu0 %v2042
        %v5460 = vpop.f32.mrb[0].mxu0
        %v5461 = vadd.f32 %v5348, %v5460
        %v5462 = vpop.f32.mrb[0].mxu0
        %v5463 = vadd.f32 %v5350, %v5462
        %v5464 = vpop.f32.mrb[0].mxu0
        %v5465 = vadd.f32 %v5352, %v5464
        %v5466 = vpop.f32.mrb[0].mxu0
        %v5467 = vadd.f32 %v5354, %v5466
        %5468 = vmatprep.mubr.bf16.mxu0 %v2068
        %5469 = vmatmul.mubr.bf16.gmra.mrb[0].mxu0 %v2067
        %v5470 = vpop.f32.mrb[0].mxu0
        %v5471 = vadd.f32 %v5358, %v5470
        %v5472 = vpop.f32.mrb[0].mxu0
        %v5473 = vadd.f32 %v5360, %v5472
        %v5474 = vpop.f32.mrb[0].mxu0
        %v5475 = vadd.f32 %v5362, %v5474
        %v5476 = vpop.f32.mrb[0].mxu0
        %v5477 = vadd.f32 %v5364, %v5476
        %5478 = vmatprep.mubr.bf16.mxu0 %v2093
        %5479 = vmatmul.mubr.bf16.gmra.mrb[0].mxu0 %v2092
        %v5480 = vpop.f32.mrb[0].mxu0
        %v5481 = vadd.f32 %v5368, %v5480
        %v5482 = vpop.f32.mrb[0].mxu0
        %v5483 = vadd.f32 %v5370, %v5482
        %v5484 = vpop.f32.mrb[0].mxu0
        %v5485 = vadd.f32 %v5372, %v5484
        %v5486 = vpop.f32.mrb[0].mxu0
        %v5487 = vadd.f32 %v5374, %v5486
        %5488 = vmatprep.mubr.bf16.mxu0 %v2118
        %5489 = vmatmul.mubr.bf16.gmra.mrb[0].mxu0 %v2117
        %v5490 = vpop.f32.mrb[0].mxu0
        %v5491 = vadd.f32 %v5378, %v5490
        %v5492 = vpop.f32.mrb[0].mxu0
        %v5493 = vadd.f32 %v5380, %v5492
        %v5494 = vpop.f32.mrb[0].mxu0
        %v5495 = vadd.f32 %v5382, %v5494
        %v5496 = vpop.f32.mrb[0].mxu0
        %v5497 = vadd.f32 %v5384, %v5496
        %5498 = vmatprep.mubr.bf16.mxu0 %v2143
        %5499 = vmatmul.mubr.bf16.gmra.mrb[0].mxu0 %v2142
        %v5500 = vpop.f32.mrb[0].mxu0
        %v5501 = vadd.f32 %v5388, %v5500
        %v5502 = vpop.f32.mrb[0].mxu0
        %v5503 = vadd.f32 %v5390, %v5502
        %v5504 = vpop.f32.mrb[0].mxu0
        %v5505 = vadd.f32 %v5392, %v5504
        %v5506 = vpop.f32.mrb[0].mxu0
        %v5507 = vadd.f32 %v5394, %v5506
        %5508 = vmatprep.mubr.bf16.mxu0 %v2168
        %5509 = vmatmul.mubr.bf16.gmra.mrb[0].mxu0 %v2167
        %v5510 = vpop.f32.mrb[0].mxu0
        %v5511 = vadd.f32 %v5398, %v5510
        %v5512 = vpop.f32.mrb[0].mxu0
        %v5513 = vadd.f32 %v5400, %v5512
        %v5514 = vpop.f32.mrb[0].mxu0
        %v5515 = vadd.f32 %v5402, %v5514
        %v5516 = vpop.f32.mrb[0].mxu0
        %v5517 = vadd.f32 %v5404, %v5516
        %5518 = vmatprep.mubr.bf16.mxu0 %v2193
        %5519 = vmatmul.mubr.bf16.gmra.mrb[0].mxu0 %v2192
        %v5520 = vpop.f32.mrb[0].mxu0
        %v5521 = vadd.f32 %v5408, %v5520
        %v5522 = vpop.f32.mrb[0].mxu0
        %v5523 = vadd.f32 %v5410, %v5522
        %v5524 = vpop.f32.mrb[0].mxu0
        %v5525 = vadd.f32 %v5412, %v5524
        %v5526 = vpop.f32.mrb[0].mxu0
        %v5527 = vadd.f32 %v5414, %v5526
        %5528 = vdwg.mxu0
        %5529 = vmatprep.subr.bf16.mxu0 %v3920
        %5530 = vmatpush1.bf16.msra.mxu0 %v3919
        %5531 = vmatprep.subr.bf16.mxu0 %v3922
        %5532 = vmatpush1.bf16.msra.mxu0 %v3921
        %5533 = vmatprep.subr.bf16.mxu0 %v3924
        %5534 = vmatpush1.bf16.msra.mxu0 %v3923
        %5535 = vmatprep.subr.bf16.mxu0 %v3926
        %5536 = vmatpush1.bf16.msra.mxu0 %v3925
        %5537 = vmatprep.subr.bf16.mxu0 %v3928
        %5538 = vmatpush1.bf16.msra.mxu0 %v3927
        %5539 = vmatprep.subr.bf16.mxu0 %v3930
        %5540 = vmatpush1.bf16.msra.mxu0 %v3929
        %5541 = vmatprep.subr.bf16.mxu0 %v3932
        %5542 = vmatpush1.bf16.msra.mxu0 %v3931
        %5543 = vmatprep.subr.bf16.mxu0 %v3934
        %5544 = vmatpush1.bf16.msra.mxu0 %v3933
        %5545 = vmatprep.subr.bf16.mxu0 %v3936
        %5546 = vmatpush1.bf16.msra.mxu0 %v3935
        %5547 = vmatprep.subr.bf16.mxu0 %v3938
        %5548 = vmatpush1.bf16.msra.mxu0 %v3937
        %5549 = vmatprep.subr.bf16.mxu0 %v3940
        %5550 = vmatpush1.bf16.msra.mxu0 %v3939
        %5551 = vmatprep.subr.bf16.mxu0 %v3942
        %5552 = vmatpush1.bf16.msra.mxu0 %v3941
        %5553 = vmatprep.subr.bf16.mxu0 %v3944
        %5554 = vmatpush1.bf16.msra.mxu0 %v3943
        %5555 = vmatprep.subr.bf16.mxu0 %v3946
        %5556 = vmatpush1.bf16.msra.mxu0 %v3945
        %5557 = vmatprep.subr.bf16.mxu0 %v3948
        %5558 = vmatpush1.bf16.msra.mxu0 %v3947
        %5559 = vmatprep.subr.bf16.mxu0 %v3950
        %5560 = vmatpush1.bf16.msra.mxu0 %v3949
        %5561 = vmatprep.mubr.bf16.mxu0 %v2020
        %5562 = vmatmul.mubr.bf16.gmra.mrb[0].mxu0 %v2019
        %v5563 = vpop.f32.mrb[0].mxu0
        %v5564 = vadd.f32 %v5451, %v5563
        %v5565 = vpop.f32.mrb[0].mxu0
        %v5566 = vadd.f32 %v5453, %v5565
        %v5567 = vpop.f32.mrb[0].mxu0
        %v5568 = vadd.f32 %v5455, %v5567
        %v5569 = vpop.f32.mrb[0].mxu0
        %v5570 = vadd.f32 %v5457, %v5569
        %5571 = vmatprep.mubr.bf16.mxu0 %v2045
        %5572 = vmatmul.mubr.bf16.gmra.mrb[0].mxu0 %v2044
        %v5573 = vpop.f32.mrb[0].mxu0
        %v5574 = vadd.f32 %v5461, %v5573
        %v5575 = vpop.f32.mrb[0].mxu0
        %v5576 = vadd.f32 %v5463, %v5575
        %v5577 = vpop.f32.mrb[0].mxu0
        %v5578 = vadd.f32 %v5465, %v5577
        %v5579 = vpop.f32.mrb[0].mxu0
        %v5580 = vadd.f32 %v5467, %v5579
        %5581 = vmatprep.mubr.bf16.mxu0 %v2070
        %5582 = vmatmul.mubr.bf16.gmra.mrb[0].mxu0 %v2069
        %v5583 = vpop.f32.mrb[0].mxu0
        %v5584 = vadd.f32 %v5471, %v5583
        %v5585 = vpop.f32.mrb[0].mxu0
        %v5586 = vadd.f32 %v5473, %v5585
        %v5587 = vpop.f32.mrb[0].mxu0
        %v5588 = vadd.f32 %v5475, %v5587
        %v5589 = vpop.f32.mrb[0].mxu0
        %v5590 = vadd.f32 %v5477, %v5589
        %5591 = vmatprep.mubr.bf16.mxu0 %v2095
        %5592 = vmatmul.mubr.bf16.gmra.mrb[0].mxu0 %v2094
        %v5593 = vpop.f32.mrb[0].mxu0
        %v5594 = vadd.f32 %v5481, %v5593
        %v5595 = vpop.f32.mrb[0].mxu0
        %v5596 = vadd.f32 %v5483, %v5595
        %v5597 = vpop.f32.mrb[0].mxu0
        %v5598 = vadd.f32 %v5485, %v5597
        %v5599 = vpop.f32.mrb[0].mxu0
        %v5600 = vadd.f32 %v5487, %v5599
        %5601 = vmatprep.mubr.bf16.mxu0 %v2120
        %5602 = vmatmul.mubr.bf16.gmra.mrb[0].mxu0 %v2119
        %v5603 = vpop.f32.mrb[0].mxu0
        %v5604 = vadd.f32 %v5491, %v5603
        %v5605 = vpop.f32.mrb[0].mxu0
        %v5606 = vadd.f32 %v5493, %v5605
        %v5607 = vpop.f32.mrb[0].mxu0
        %v5608 = vadd.f32 %v5495, %v5607
        %v5609 = vpop.f32.mrb[0].mxu0
        %v5610 = vadd.f32 %v5497, %v5609
        %5611 = vmatprep.mubr.bf16.mxu0 %v2145
        %5612 = vmatmul.mubr.bf16.gmra.mrb[0].mxu0 %v2144
        %v5613 = vpop.f32.mrb[0].mxu0
        %v5614 = vadd.f32 %v5501, %v5613
        %v5615 = vpop.f32.mrb[0].mxu0
        %v5616 = vadd.f32 %v5503, %v5615
        %v5617 = vpop.f32.mrb[0].mxu0
        %v5618 = vadd.f32 %v5505, %v5617
        %v5619 = vpop.f32.mrb[0].mxu0
        %v5620 = vadd.f32 %v5507, %v5619
        %5621 = vmatprep.mubr.bf16.mxu0 %v2170
        %5622 = vmatmul.mubr.bf16.gmra.mrb[0].mxu0 %v2169
        %v5623 = vpop.f32.mrb[0].mxu0
        %v5624 = vadd.f32 %v5511, %v5623
        %v5625 = vpop.f32.mrb[0].mxu0
        %v5626 = vadd.f32 %v5513, %v5625
        %v5627 = vpop.f32.mrb[0].mxu0
        %v5628 = vadd.f32 %v5515, %v5627
        %v5629 = vpop.f32.mrb[0].mxu0
        %v5630 = vadd.f32 %v5517, %v5629
        %5631 = vmatprep.mubr.bf16.mxu0 %v2195
        %5632 = vmatmul.mubr.bf16.gmra.mrb[0].mxu0 %v2194
        %v5633 = vpop.f32.mrb[0].mxu0
        %v5634 = vadd.f32 %v5521, %v5633
        %v5635 = vpop.f32.mrb[0].mxu0
        %v5636 = vadd.f32 %v5523, %v5635
        %v5637 = vpop.f32.mrb[0].mxu0
        %v5638 = vadd.f32 %v5525, %v5637
        %v5639 = vpop.f32.mrb[0].mxu0
        %v5640 = vadd.f32 %v5527, %v5639
        %5641 = vdwg.mxu0
        %5642 = vmatprep.subr.bf16.mxu0 %v3952
        %5643 = vmatpush1.bf16.msra.mxu0 %v3951
        %5644 = vmatprep.subr.bf16.mxu0 %v3954
        %5645 = vmatpush1.bf16.msra.mxu0 %v3953
        %5646 = vmatprep.subr.bf16.mxu0 %v3956
        %5647 = vmatpush1.bf16.msra.mxu0 %v3955
        %5648 = vmatprep.subr.bf16.mxu0 %v3958
        %5649 = vmatpush1.bf16.msra.mxu0 %v3957
        %5650 = vmatprep.subr.bf16.mxu0 %v3960
        %5651 = vmatpush1.bf16.msra.mxu0 %v3959
        %5652 = vmatprep.subr.bf16.mxu0 %v3962
        %5653 = vmatpush1.bf16.msra.mxu0 %v3961
        %5654 = vmatprep.subr.bf16.mxu0 %v3964
        %5655 = vmatpush1.bf16.msra.mxu0 %v3963
        %5656 = vmatprep.subr.bf16.mxu0 %v3966
        %5657 = vmatpush1.bf16.msra.mxu0 %v3965
        %5658 = vmatprep.subr.bf16.mxu0 %v3968
        %5659 = vmatpush1.bf16.msra.mxu0 %v3967
        %5660 = vmatprep.subr.bf16.mxu0 %v3970
        %5661 = vmatpush1.bf16.msra.mxu0 %v3969
        %5662 = vmatprep.subr.bf16.mxu0 %v3972
        %5663 = vmatpush1.bf16.msra.mxu0 %v3971
        %5664 = vmatprep.subr.bf16.mxu0 %v3974
        %5665 = vmatpush1.bf16.msra.mxu0 %v3973
        %5666 = vmatprep.subr.bf16.mxu0 %v3976
        %5667 = vmatpush1.bf16.msra.mxu0 %v3975
        %5668 = vmatprep.subr.bf16.mxu0 %v3978
        %5669 = vmatpush1.bf16.msra.mxu0 %v3977
        %5670 = vmatprep.subr.bf16.mxu0 %v3980
        %5671 = vmatpush1.bf16.msra.mxu0 %v3979
        %5672 = vmatprep.subr.bf16.mxu0 %v3982
        %5673 = vmatpush1.bf16.msra.mxu0 %v3981
        %5674 = vmatprep.mubr.bf16.mxu0 %v2022
        %5675 = vmatmul.mubr.bf16.gmra.mrb[0].mxu0 %v2021
        %v5676 = vpop.f32.mrb[0].mxu0
        %v5677 = vadd.f32 %v5564, %v5676
        %v5678 = vpop.f32.mrb[0].mxu0
        %v5679 = vadd.f32 %v5566, %v5678
        %v5680 = vpop.f32.mrb[0].mxu0
        %v5681 = vadd.f32 %v5568, %v5680
        %v5682 = vpop.f32.mrb[0].mxu0
        %v5683 = vadd.f32 %v5570, %v5682
        %5684 = vmatprep.mubr.bf16.mxu0 %v2047
        %5685 = vmatmul.mubr.bf16.gmra.mrb[0].mxu0 %v2046
        %v5686 = vpop.f32.mrb[0].mxu0
        %v5687 = vadd.f32 %v5574, %v5686
        %v5688 = vpop.f32.mrb[0].mxu0
        %v5689 = vadd.f32 %v5576, %v5688
        %v5690 = vpop.f32.mrb[0].mxu0
        %v5691 = vadd.f32 %v5578, %v5690
        %v5692 = vpop.f32.mrb[0].mxu0
        %v5693 = vadd.f32 %v5580, %v5692
        %5694 = vmatprep.mubr.bf16.mxu0 %v2072
        %5695 = vmatmul.mubr.bf16.gmra.mrb[0].mxu0 %v2071
        %v5696 = vpop.f32.mrb[0].mxu0
        %v5697 = vadd.f32 %v5584, %v5696
        %v5698 = vpop.f32.mrb[0].mxu0
        %v5699 = vadd.f32 %v5586, %v5698
        %v5700 = vpop.f32.mrb[0].mxu0
        %v5701 = vadd.f32 %v5588, %v5700
        %v5702 = vpop.f32.mrb[0].mxu0
        %v5703 = vadd.f32 %v5590, %v5702
        %5704 = vmatprep.mubr.bf16.mxu0 %v2097
        %5705 = vmatmul.mubr.bf16.gmra.mrb[0].mxu0 %v2096
        %v5706 = vpop.f32.mrb[0].mxu0
        %v5707 = vadd.f32 %v5594, %v5706
        %v5708 = vpop.f32.mrb[0].mxu0
        %v5709 = vadd.f32 %v5596, %v5708
        %v5710 = vpop.f32.mrb[0].mxu0
        %v5711 = vadd.f32 %v5598, %v5710
        %v5712 = vpop.f32.mrb[0].mxu0
        %v5713 = vadd.f32 %v5600, %v5712
        %5714 = vmatprep.mubr.bf16.mxu0 %v2122
        %5715 = vmatmul.mubr.bf16.gmra.mrb[0].mxu0 %v2121
        %v5716 = vpop.f32.mrb[0].mxu0
        %v5717 = vadd.f32 %v5604, %v5716
        %v5718 = vpop.f32.mrb[0].mxu0
        %v5719 = vadd.f32 %v5606, %v5718
        %v5720 = vpop.f32.mrb[0].mxu0
        %v5721 = vadd.f32 %v5608, %v5720
        %v5722 = vpop.f32.mrb[0].mxu0
        %v5723 = vadd.f32 %v5610, %v5722
        %5724 = vmatprep.mubr.bf16.mxu0 %v2147
        %5725 = vmatmul.mubr.bf16.gmra.mrb[0].mxu0 %v2146
        %v5726 = vpop.f32.mrb[0].mxu0
        %v5727 = vadd.f32 %v5614, %v5726
        %v5728 = vpop.f32.mrb[0].mxu0
        %v5729 = vadd.f32 %v5616, %v5728
        %v5730 = vpop.f32.mrb[0].mxu0
        %v5731 = vadd.f32 %v5618, %v5730
        %v5732 = vpop.f32.mrb[0].mxu0
        %v5733 = vadd.f32 %v5620, %v5732
        %5734 = vmatprep.mubr.bf16.mxu0 %v2172
        %5735 = vmatmul.mubr.bf16.gmra.mrb[0].mxu0 %v2171
        %v5736 = vpop.f32.mrb[0].mxu0
        %v5737 = vadd.f32 %v5624, %v5736
        %v5738 = vpop.f32.mrb[0].mxu0
        %v5739 = vadd.f32 %v5626, %v5738
        %v5740 = vpop.f32.mrb[0].mxu0
        %v5741 = vadd.f32 %v5628, %v5740
        %v5742 = vpop.f32.mrb[0].mxu0
        %v5743 = vadd.f32 %v5630, %v5742
        %5744 = vmatprep.mubr.bf16.mxu0 %v2197
        %5745 = vmatmul.mubr.bf16.gmra.mrb[0].mxu0 %v2196
        %v5746 = vpop.f32.mrb[0].mxu0
        %v5747 = vadd.f32 %v5634, %v5746
        %v5748 = vpop.f32.mrb[0].mxu0
        %v5749 = vadd.f32 %v5636, %v5748
        %v5750 = vpop.f32.mrb[0].mxu0
        %v5751 = vadd.f32 %v5638, %v5750
        %v5752 = vpop.f32.mrb[0].mxu0
        %v5753 = vadd.f32 %v5640, %v5752
        %5754 = vdwg.mxu0
        %5755 = vmatprep.subr.bf16.mxu0 %v3984
        %5756 = vmatpush1.bf16.msra.mxu0 %v3983
        %5757 = vmatprep.subr.bf16.mxu0 %v3986
        %5758 = vmatpush1.bf16.msra.mxu0 %v3985
        %5759 = vmatprep.subr.bf16.mxu0 %v3988
        %5760 = vmatpush1.bf16.msra.mxu0 %v3987
        %5761 = vmatprep.subr.bf16.mxu0 %v3990
        %5762 = vmatpush1.bf16.msra.mxu0 %v3989
        %5763 = vmatprep.subr.bf16.mxu0 %v3992
        %5764 = vmatpush1.bf16.msra.mxu0 %v3991
        %5765 = vmatprep.subr.bf16.mxu0 %v3994
        %5766 = vmatpush1.bf16.msra.mxu0 %v3993
        %5767 = vmatprep.subr.bf16.mxu0 %v3996
        %5768 = vmatpush1.bf16.msra.mxu0 %v3995
        %5769 = vmatprep.subr.bf16.mxu0 %v3998
        %5770 = vmatpush1.bf16.msra.mxu0 %v3997
        %5771 = vmatprep.subr.bf16.mxu0 0
        %5772 = vmatpush1.bf16.msra.mxu0 0
        %5773 = vmatprep.subr.bf16.mxu0 0
        %5774 = vmatpush1.bf16.msra.mxu0 0
        %5775 = vmatprep.subr.bf16.mxu0 0
        %5776 = vmatpush1.bf16.msra.mxu0 0
        %5777 = vmatprep.subr.bf16.mxu0 0
        %5778 = vmatpush1.bf16.msra.mxu0 0
        %5779 = vmatprep.subr.bf16.mxu0 0
        %5780 = vmatpush1.bf16.msra.mxu0 0
        %5781 = vmatprep.subr.bf16.mxu0 0
        %5782 = vmatpush1.bf16.msra.mxu0 0
        %5783 = vmatprep.subr.bf16.mxu0 0
        %5784 = vmatpush1.bf16.msra.mxu0 0
        %5785 = vmatprep.subr.bf16.mxu0 0
        %5786 = vmatpush1.bf16.msra.mxu0 0
        %5787 = vmatprep.mubr.bf16.mxu0 0
        %5788 = vmatmul.mubr.bf16.gmra.mrb[0].mxu0 %v2023
        %v5789 = vpop.f32.mrb[0].mxu0
        %v5790 = vadd.f32 %v5677, %v5789
        %v5791 = vpop.f32.mrb[0].mxu0
        %v5792 = vadd.f32 %v5679, %v5791
        %v5793 = vpop.f32.mrb[0].mxu0
        %v5794 = vadd.f32 %v5681, %v5793
        %v5795 = vpop.f32.mrb[0].mxu0
        %v5796 = vadd.f32 %v5683, %v5795
        %5797 = vmatprep.mubr.bf16.mxu0 0
        %5798 = vmatmul.mubr.bf16.gmra.mrb[0].mxu0 %v2048
        %v5799 = vpop.f32.mrb[0].mxu0
        %v5800 = vadd.f32 %v5687, %v5799
        %v5801 = vpop.f32.mrb[0].mxu0
        %v5802 = vadd.f32 %v5689, %v5801
        %v5803 = vpop.f32.mrb[0].mxu0
        %v5804 = vadd.f32 %v5691, %v5803
        %v5805 = vpop.f32.mrb[0].mxu0
        %v5806 = vadd.f32 %v5693, %v5805
        %5807 = vmatprep.mubr.bf16.mxu0 0
        %5808 = vmatmul.mubr.bf16.gmra.mrb[0].mxu0 %v2073
        %v5809 = vpop.f32.mrb[0].mxu0
        %v5810 = vadd.f32 %v5697, %v5809
        %v5811 = vpop.f32.mrb[0].mxu0
        %v5812 = vadd.f32 %v5699, %v5811
        %v5813 = vpop.f32.mrb[0].mxu0
        %v5814 = vadd.f32 %v5701, %v5813
        %v5815 = vpop.f32.mrb[0].mxu0
        %v5816 = vadd.f32 %v5703, %v5815
        %5817 = vmatprep.mubr.bf16.mxu0 0
        %5818 = vmatmul.mubr.bf16.gmra.mrb[0].mxu0 %v2098
        %v5819 = vpop.f32.mrb[0].mxu0
        %v5820 = vadd.f32 %v5707, %v5819
        %v5821 = vpop.f32.mrb[0].mxu0
        %v5822 = vadd.f32 %v5709, %v5821
        %v5823 = vpop.f32.mrb[0].mxu0
        %v5824 = vadd.f32 %v5711, %v5823
        %v5825 = vpop.f32.mrb[0].mxu0
        %v5826 = vadd.f32 %v5713, %v5825
        %5827 = vmatprep.mubr.bf16.mxu0 0
        %5828 = vmatmul.mubr.bf16.gmra.mrb[0].mxu0 %v2123
        %v5829 = vpop.f32.mrb[0].mxu0
        %v5830 = vadd.f32 %v5717, %v5829
        %v5831 = vpop.f32.mrb[0].mxu0
        %v5832 = vadd.f32 %v5719, %v5831
        %v5833 = vpop.f32.mrb[0].mxu0
        %v5834 = vadd.f32 %v5721, %v5833
        %v5835 = vpop.f32.mrb[0].mxu0
        %v5836 = vadd.f32 %v5723, %v5835
        %5837 = vmatprep.mubr.bf16.mxu0 0
        %5838 = vmatmul.mubr.bf16.gmra.mrb[0].mxu0 %v2148
        %v5839 = vpop.f32.mrb[0].mxu0
        %v5840 = vadd.f32 %v5727, %v5839
        %v5841 = vpop.f32.mrb[0].mxu0
        %v5842 = vadd.f32 %v5729, %v5841
        %v5843 = vpop.f32.mrb[0].mxu0
        %v5844 = vadd.f32 %v5731, %v5843
        %v5845 = vpop.f32.mrb[0].mxu0
        %v5846 = vadd.f32 %v5733, %v5845
        %5847 = vmatprep.mubr.bf16.mxu0 0
        %5848 = vmatmul.mubr.bf16.gmra.mrb[0].mxu0 %v2173
        %v5849 = vpop.f32.mrb[0].mxu0
        %v5850 = vadd.f32 %v5737, %v5849
        %v5851 = vpop.f32.mrb[0].mxu0
        %v5852 = vadd.f32 %v5739, %v5851
        %v5853 = vpop.f32.mrb[0].mxu0
        %v5854 = vadd.f32 %v5741, %v5853
        %v5855 = vpop.f32.mrb[0].mxu0
        %v5856 = vadd.f32 %v5743, %v5855
        %5857 = vmatprep.mubr.bf16.mxu0 0
        %5858 = vmatmul.mubr.bf16.gmra.mrb[0].mxu0 %v2198
        %v5859 = vpop.f32.mrb[0].mxu0
        %v5860 = vadd.f32 %v5747, %v5859
        %v5861 = vpop.f32.mrb[0].mxu0
        %v5862 = vadd.f32 %v5749, %v5861
        %v5863 = vpop.f32.mrb[0].mxu0
        %v5864 = vadd.f32 %v5751, %v5863
        %v5865 = vpop.f32.mrb[0].mxu0
        %v5866 = vadd.f32 %v5753, %v5865
        %5867 = vdwg.mxu0
        %v5868 = vadd.f32 %v751, %v5790
        %v5869 = vadd.f32 %v752, %v5792
        %v5870 = vadd.f32 %v753, %v5794
        %v5871 = vadd.f32 %v754, %v5796
        %v5872 = vadd.f32 %v755, %v5800
        %v5873 = vadd.f32 %v756, %v5802
        %v5874 = vadd.f32 %v757, %v5804
        %v5875 = vadd.f32 %v758, %v5806
        %v5876 = vadd.f32 %v759, %v5810
        %v5877 = vadd.f32 %v760, %v5812
        %v5878 = vadd.f32 %v761, %v5814
        %v5879 = vadd.f32 %v762, %v5816
        %v5880 = vadd.f32 %v763, %v5820
        %v5881 = vadd.f32 %v764, %v5822
        %v5882 = vadd.f32 %v765, %v5824
        %v5883 = vadd.f32 %v766, %v5826
        %v5884 = vadd.f32 %v767, %v5830
        %v5885 = vadd.f32 %v768, %v5832
        %v5886 = vadd.f32 %v769, %v5834
        %v5887 = vadd.f32 %v770, %v5836
        %v5888 = vadd.f32 %v771, %v5840
        %v5889 = vadd.f32 %v772, %v5842
        %v5890 = vadd.f32 %v773, %v5844
        %v5891 = vadd.f32 %v774, %v5846
        %v5892 = vadd.f32 %v775, %v5850
        %v5893 = vadd.f32 %v776, %v5852
        %v5894 = vadd.f32 %v777, %v5854
        %v5895 = vadd.f32 %v778, %v5856
        %v5896 = vadd.f32 %v779, %v5860
        %v5897 = vadd.f32 %v780, %v5862
        %v5898 = vadd.f32 %v781, %v5864
        %v5899 = vadd.f32 %v782, %v5866
        %5900 = vst [vmem:[#allocation2] sm:$0xff] %v5868
        %vm5901 = vcmask 588800
        %5902 = vst.msk [vmem:[#allocation2 + $0x8] sm:$0xff] %vm5901, %v5869
        %5903 = vst [vmem:[#allocation2 + $0x10] sm:$0xff] %v5870
        %5904 = vst.msk [vmem:[#allocation2 + $0x18] sm:$0xff] %vm5901, %v5871
        %5905 = vst [vmem:[#allocation2 + $0x20] sm:$0xff] %v5872
        %5906 = vst.msk [vmem:[#allocation2 + $0x28] sm:$0xff] %vm5901, %v5873
        %5907 = vst [vmem:[#allocation2 + $0x30] sm:$0xff] %v5874
        %5908 = vst.msk [vmem:[#allocation2 + $0x38] sm:$0xff] %vm5901, %v5875
        %5909 = vst [vmem:[#allocation2 + $0x40] sm:$0xff] %v5876
        %5910 = vst.msk [vmem:[#allocation2 + $0x48] sm:$0xff] %vm5901, %v5877
        %5911 = vst [vmem:[#allocation2 + $0x50] sm:$0xff] %v5878
        %5912 = vst.msk [vmem:[#allocation2 + $0x58] sm:$0xff] %vm5901, %v5879
        %5913 = vst [vmem:[#allocation2 + $0x60] sm:$0xff] %v5880
        %5914 = vst.msk [vmem:[#allocation2 + $0x68] sm:$0xff] %vm5901, %v5881
        %5915 = vst [vmem:[#allocation2 + $0x70] sm:$0xff] %v5882
        %5916 = vst.msk [vmem:[#allocation2 + $0x78] sm:$0xff] %vm5901, %v5883
        %5917 = vst [vmem:[#allocation2 + $0x80] sm:$0xff] %v5884
        %5918 = vst.msk [vmem:[#allocation2 + $0x88] sm:$0xff] %vm5901, %v5885
        %5919 = vst [vmem:[#allocation2 + $0x90] sm:$0xff] %v5886
        %5920 = vst.msk [vmem:[#allocation2 + $0x98] sm:$0xff] %vm5901, %v5887
        %5921 = vst [vmem:[#allocation2 + $0xa0] sm:$0xff] %v5888
        %5922 = vst.msk [vmem:[#allocation2 + $0xa8] sm:$0xff] %vm5901, %v5889
        %5923 = vst [vmem:[#allocation2 + $0xb0] sm:$0xff] %v5890
        %5924 = vst.msk [vmem:[#allocation2 + $0xb8] sm:$0xff] %vm5901, %v5891
        %5925 = vst [vmem:[#allocation2 + $0xc0] sm:$0xff] %v5892
        %5926 = vst.msk [vmem:[#allocation2 + $0xc8] sm:$0xff] %vm5901, %v5893
        %5927 = vst [vmem:[#allocation2 + $0xd0] sm:$0xff] %v5894
        %5928 = vst.msk [vmem:[#allocation2 + $0xd8] sm:$0xff] %vm5901, %v5895
        %5929 = vst [vmem:[#allocation2 + $0xe0] sm:$0xff] %v5896
        %5930 = vst.msk [vmem:[#allocation2 + $0xe8] sm:$0xff] %vm5901, %v5897
        %5931 = vst [vmem:[#allocation2 + $0xf0] sm:$0xff] %v5898
        %5932 = vst.msk [vmem:[#allocation2 + $0xf8] sm:$0xff] %vm5901, %v5899
        %p5933 = scmp.eq.s32.totalorder %s21, 1
        // Predicated region
        $region71: #{tpu_custom_call.1} parent=61 // pred_check
          %p5934 = pneg %p5933
        $region72: #{tpu_custom_call.1} parent=61 // pred_check_branch
          %5936 = sbr.rel (%p5934) target = $region74
        $region73: #{tpu_custom_call.1} parent=61 // pred_region
          %v5937 = vld [vmem:[#allocation2] sm:$0xff]
          %v5938 = vld [vmem:[#allocation2 + $0x8] sm:$0xff]
          %v5939 = vld [vmem:[#allocation2 + $0x10] sm:$0xff]
          %v5940 = vld [vmem:[#allocation2 + $0x18] sm:$0xff]
          %v5941 = vld [vmem:[#allocation2 + $0x20] sm:$0xff]
          %v5942 = vld [vmem:[#allocation2 + $0x28] sm:$0xff]
          %v5943 = vld [vmem:[#allocation2 + $0x30] sm:$0xff]
          %v5944 = vld [vmem:[#allocation2 + $0x38] sm:$0xff]
          %v5945 = vld [vmem:[#allocation2 + $0x40] sm:$0xff]
          %v5946 = vld [vmem:[#allocation2 + $0x48] sm:$0xff]
          %v5947 = vld [vmem:[#allocation2 + $0x50] sm:$0xff]
          %v5948 = vld [vmem:[#allocation2 + $0x58] sm:$0xff]
          %v5949 = vld [vmem:[#allocation2 + $0x60] sm:$0xff]
          %v5950 = vld [vmem:[#allocation2 + $0x68] sm:$0xff]
          %v5951 = vld [vmem:[#allocation2 + $0x70] sm:$0xff]
          %v5952 = vld [vmem:[#allocation2 + $0x78] sm:$0xff]
          %v5953 = vld [vmem:[#allocation2 + $0x80] sm:$0xff]
          %v5954 = vld [vmem:[#allocation2 + $0x88] sm:$0xff]
          %v5955 = vld [vmem:[#allocation2 + $0x90] sm:$0xff]
          %v5956 = vld [vmem:[#allocation2 + $0x98] sm:$0xff]
          %v5957 = vld [vmem:[#allocation2 + $0xa0] sm:$0xff]
          %v5958 = vld [vmem:[#allocation2 + $0xa8] sm:$0xff]
          %v5959 = vld [vmem:[#allocation2 + $0xb0] sm:$0xff]
          %v5960 = vld [vmem:[#allocation2 + $0xb8] sm:$0xff]
          %v5961 = vld [vmem:[#allocation2 + $0xc0] sm:$0xff]
          %v5962 = vld [vmem:[#allocation2 + $0xc8] sm:$0xff]
          %v5963 = vld [vmem:[#allocation2 + $0xd0] sm:$0xff]
          %v5964 = vld [vmem:[#allocation2 + $0xd8] sm:$0xff]
          %v5965 = vld [vmem:[#allocation2 + $0xe0] sm:$0xff]
          %v5966 = vld [vmem:[#allocation2 + $0xe8] sm:$0xff]
          %v5967 = vld [vmem:[#allocation2 + $0xf0] sm:$0xff]
          %v5968 = vld [vmem:[#allocation2 + $0xf8] sm:$0xff]
          %v5969 = vld [vmem:[%s2] sm:$0x3]
          %v5971 = vlaneseq
          %v5972 = vshrl.u32 %v5971, 7
          %v5973 = vsub.s32 0, %v5972
          %v5974 = vrot.slane %v5969, %v5973
          %v5975 = vlaneseq
          %v5976 = vshrl.u32 %v5975, 7
          %v5977 = vsub.s32 1, %v5976
          %v5978 = vrot.slane %v5969, %v5977
          %v5981 = vadd.f32 %v5937, %v5974
          %v5982 = vadd.f32 %v5938, %v5978
          %v5983 = vadd.f32 %v5939, %v5974
          %v5984 = vadd.f32 %v5940, %v5978
          %v5985 = vadd.f32 %v5941, %v5974
          %v5986 = vadd.f32 %v5942, %v5978
          %v5987 = vadd.f32 %v5943, %v5974
          %v5988 = vadd.f32 %v5944, %v5978
          %v5989 = vadd.f32 %v5945, %v5974
          %v5990 = vadd.f32 %v5946, %v5978
          %v5991 = vadd.f32 %v5947, %v5974
          %v5992 = vadd.f32 %v5948, %v5978
          %v5993 = vadd.f32 %v5949, %v5974
          %v5994 = vadd.f32 %v5950, %v5978
          %v5995 = vadd.f32 %v5951, %v5974
          %v5996 = vadd.f32 %v5952, %v5978
          %v5997 = vadd.f32 %v5953, %v5974
          %v5998 = vadd.f32 %v5954, %v5978
          %v5999 = vadd.f32 %v5955, %v5974
          %v6000 = vadd.f32 %v5956, %v5978
          %v6001 = vadd.f32 %v5957, %v5974
          %v6002 = vadd.f32 %v5958, %v5978
          %v6003 = vadd.f32 %v5959, %v5974
          %v6004 = vadd.f32 %v5960, %v5978
          %v6005 = vadd.f32 %v5961, %v5974
          %v6006 = vadd.f32 %v5962, %v5978
          %v6007 = vadd.f32 %v5963, %v5974
          %v6008 = vadd.f32 %v5964, %v5978
          %v6009 = vadd.f32 %v5965, %v5974
          %v6010 = vadd.f32 %v5966, %v5978
          %v6011 = vadd.f32 %v5967, %v5974
          %v6012 = vadd.f32 %v5968, %v5978
          %v6013 = vmax.f32 %v5981, 0.0
          %v6014 = vmax.f32 %v5982, 0.0
          %v6015 = vmax.f32 %v5983, 0.0
          %v6016 = vmax.f32 %v5984, 0.0
          %v6017 = vmax.f32 %v5985, 0.0
          %v6018 = vmax.f32 %v5986, 0.0
          %v6019 = vmax.f32 %v5987, 0.0
          %v6020 = vmax.f32 %v5988, 0.0
          %v6021 = vmax.f32 %v5989, 0.0
          %v6022 = vmax.f32 %v5990, 0.0
          %v6023 = vmax.f32 %v5991, 0.0
          %v6024 = vmax.f32 %v5992, 0.0
          %v6025 = vmax.f32 %v5993, 0.0
          %v6026 = vmax.f32 %v5994, 0.0
          %v6027 = vmax.f32 %v5995, 0.0
          %v6028 = vmax.f32 %v5996, 0.0
          %v6029 = vmax.f32 %v5997, 0.0
          %v6030 = vmax.f32 %v5998, 0.0
          %v6031 = vmax.f32 %v5999, 0.0
          %v6032 = vmax.f32 %v6000, 0.0
          %v6033 = vmax.f32 %v6001, 0.0
          %v6034 = vmax.f32 %v6002, 0.0
          %v6035 = vmax.f32 %v6003, 0.0
          %v6036 = vmax.f32 %v6004, 0.0
          %v6037 = vmax.f32 %v6005, 0.0
          %v6038 = vmax.f32 %v6006, 0.0
          %v6039 = vmax.f32 %v6007, 0.0
          %v6040 = vmax.f32 %v6008, 0.0
          %v6041 = vmax.f32 %v6009, 0.0
          %v6042 = vmax.f32 %v6010, 0.0
          %v6043 = vmax.f32 %v6011, 0.0
          %v6044 = vmax.f32 %v6012, 0.0
          %v6045 = vld [vmem:[%s3] sm:$0xff]
          %v6046 = vld [vmem:[%s3 + $0x8] sm:$0xff]
          %v6047 = vld [vmem:[%s3 + $0x10] sm:$0xff]
          %v6048 = vld [vmem:[%s3 + $0x18] sm:$0xff]
          %v6049 = vld [vmem:[%s3 + $0x20] sm:$0xff]
          %v6050 = vld [vmem:[%s3 + $0x28] sm:$0xff]
          %v6051 = vld [vmem:[%s3 + $0x30] sm:$0xff]
          %v6052 = vld [vmem:[%s3 + $0x38] sm:$0xff]
          %v6053 = vld [vmem:[%s3 + $0x40] sm:$0xff]
          %v6054 = vld [vmem:[%s3 + $0x48] sm:$0xff]
          %v6055 = vld [vmem:[%s3 + $0x50] sm:$0xff]
          %v6056 = vld [vmem:[%s3 + $0x58] sm:$0xff]
          %v6057 = vld [vmem:[%s3 + $0x60] sm:$0xff]
          %v6058 = vld [vmem:[%s3 + $0x68] sm:$0xff]
          %v6059 = vld [vmem:[%s3 + $0x70] sm:$0xff]
          %v6060 = vld [vmem:[%s3 + $0x78] sm:$0xff]
          %v6061 = vld [vmem:[%s3 + $0x80] sm:$0xff]
          %v6062 = vld [vmem:[%s3 + $0x88] sm:$0xff]
          %v6063 = vld [vmem:[%s3 + $0x90] sm:$0xff]
          %v6064 = vld [vmem:[%s3 + $0x98] sm:$0xff]
          %v6065 = vld [vmem:[%s3 + $0xa0] sm:$0xff]
          %v6066 = vld [vmem:[%s3 + $0xa8] sm:$0xff]
          %v6067 = vld [vmem:[%s3 + $0xb0] sm:$0xff]
          %v6068 = vld [vmem:[%s3 + $0xb8] sm:$0xff]
          %v6069 = vld [vmem:[%s3 + $0xc0] sm:$0xff]
          %v6070 = vld [vmem:[%s4] sm:$0x1]
          %v6072 = vlaneseq
          %v6073 = vshrl.u32 %v6072, 7
          %v6074 = vsub.s32 0, %v6073
          %v6075 = vrot.slane %v6070, %v6074
          %v6078 = vsel %vm5901, %v6014, 0
          %v6081 = vsel %vm5901, %v6016, 0
          %v6084 = vsel %vm5901, %v6018, 0
          %v6087 = vsel %vm5901, %v6020, 0
          %v6090 = vsel %vm5901, %v6022, 0
          %v6093 = vsel %vm5901, %v6024, 0
          %v6096 = vsel %vm5901, %v6026, 0
          %v6099 = vsel %vm5901, %v6028, 0
          %v6102 = vsel %vm5901, %v6030, 0
          %v6105 = vsel %vm5901, %v6032, 0
          %v6108 = vsel %vm5901, %v6034, 0
          %v6111 = vsel %vm5901, %v6036, 0
          %v6114 = vsel %vm5901, %v6038, 0
          %v6117 = vsel %vm5901, %v6040, 0
          %v6120 = vsel %vm5901, %v6042, 0
          %v6123 = vsel %vm5901, %v6044, 0
          %6125 = vmatprep.subr.mxu0 0.0
          %6126 = vmatpush1.msra.mxu0 %v6045
          %6127 = vmatprep.subr.mxu0 0.0
          %6128 = vmatpush1.msra.mxu0 %v6046
          %6129 = vmatprep.subr.mxu0 0.0
          %6130 = vmatpush1.msra.mxu0 %v6047
          %6131 = vmatprep.subr.mxu0 0.0
          %6132 = vmatpush1.msra.mxu0 %v6048
          %6133 = vmatprep.subr.mxu0 0.0
          %6134 = vmatpush1.msra.mxu0 %v6049
          %6135 = vmatprep.subr.mxu0 0.0
          %6136 = vmatpush1.msra.mxu0 %v6050
          %6137 = vmatprep.subr.mxu0 0.0
          %6138 = vmatpush1.msra.mxu0 %v6051
          %6139 = vmatprep.subr.mxu0 0.0
          %6140 = vmatpush1.msra.mxu0 %v6052
          %6141 = vmatprep.subr.mxu0 0.0
          %6142 = vmatpush1.msra.mxu0 %v6053
          %6143 = vmatprep.subr.mxu0 0.0
          %6144 = vmatpush1.msra.mxu0 %v6054
          %6145 = vmatprep.subr.mxu0 0.0
          %6146 = vmatpush1.msra.mxu0 %v6055
          %6147 = vmatprep.subr.mxu0 0.0
          %6148 = vmatpush1.msra.mxu0 %v6056
          %6149 = vmatprep.subr.mxu0 0.0
          %6150 = vmatpush1.msra.mxu0 %v6057
          %6151 = vmatprep.subr.mxu0 0.0
          %6152 = vmatpush1.msra.mxu0 %v6058
          %6153 = vmatprep.subr.mxu0 0.0
          %6154 = vmatpush1.msra.mxu0 %v6059
          %6155 = vmatprep.subr.mxu0 0.0
          %6156 = vmatpush1.msra.mxu0 %v6060
          %6157 = vmatprep.subr.mxu0 0.0
          %6158 = vmatpush1.msra.mxu0 %v6061
          %6159 = vmatprep.subr.mxu0 0.0
          %6160 = vmatpush1.msra.mxu0 %v6062
          %6161 = vmatprep.subr.mxu0 0.0
          %6162 = vmatpush1.msra.mxu0 %v6063
          %6163 = vmatprep.subr.mxu0 0.0
          %6164 = vmatpush1.msra.mxu0 %v6064
          %6165 = vmatprep.subr.mxu0 0.0
          %6166 = vmatpush1.msra.mxu0 %v6065
          %6167 = vmatprep.subr.mxu0 0.0
          %6168 = vmatpush1.msra.mxu0 %v6066
          %6169 = vmatprep.subr.mxu0 0.0
          %6170 = vmatpush1.msra.mxu0 %v6067
          %6171 = vmatprep.subr.mxu0 0.0
          %6172 = vmatpush1.msra.mxu0 %v6068
          %6173 = vmatprep.subr.mxu0 0.0
          %6174 = vmatpush1.msra.mxu0 %v6069
          %6175 = vmatprep.subr.mxu0 0.0
          %6176 = vmatpush1.msra.mxu0 0.0
          %6177 = vmatprep.subr.mxu0 0.0
          %6178 = vmatpush1.msra.mxu0 0.0
          %6179 = vmatprep.subr.mxu0 0.0
          %6180 = vmatpush1.msra.mxu0 0.0
          %6181 = vmatprep.subr.mxu0 0.0
          %6182 = vmatpush1.msra.mxu0 0.0
          %6183 = vmatprep.subr.mxu0 0.0
          %6184 = vmatpush1.msra.mxu0 0.0
          %6185 = vmatprep.subr.mxu0 0.0
          %6186 = vmatpush1.msra.mxu0 0.0
          %6187 = vmatprep.subr.mxu0 0.0
          %6188 = vmatpush1.msra.mxu0 0.0
          %6189 = vmatprep.mubr.f32.mxu0 %v6078
          %6190 = vmatmul.mubr.f32.gmra.mrb[0].mxu0 %v6013
          %v6191 = vpop.f32.mrb[0].mxu0
          %v6192 = vadd.f32 %v6075, %v6191
          %v6193 = vpop.f32.mrb[0].mxu0
          %6194 = vmatprep.mubr.f32.mxu0 %v6081
          %6195 = vmatmul.mubr.f32.gmra.mrb[0].mxu0 %v6015
          %v6196 = vpop.f32.mrb[0].mxu0
          %v6197 = vadd.f32 %v6075, %v6196
          %v6198 = vpop.f32.mrb[0].mxu0
          %6199 = vmatprep.mubr.f32.mxu0 %v6084
          %6200 = vmatmul.mubr.f32.gmra.mrb[0].mxu0 %v6017
          %v6201 = vpop.f32.mrb[0].mxu0
          %v6202 = vadd.f32 %v6075, %v6201
          %v6203 = vpop.f32.mrb[0].mxu0
          %6204 = vmatprep.mubr.f32.mxu0 %v6087
          %6205 = vmatmul.mubr.f32.gmra.mrb[0].mxu0 %v6019
          %v6206 = vpop.f32.mrb[0].mxu0
          %v6207 = vadd.f32 %v6075, %v6206
          %v6208 = vpop.f32.mrb[0].mxu0
          %6209 = vmatprep.mubr.f32.mxu0 %v6090
          %6210 = vmatmul.mubr.f32.gmra.mrb[0].mxu0 %v6021
          %v6211 = vpop.f32.mrb[0].mxu0
          %v6212 = vadd.f32 %v6075, %v6211
          %v6213 = vpop.f32.mrb[0].mxu0
          %6214 = vmatprep.mubr.f32.mxu0 %v6093
          %6215 = vmatmul.mubr.f32.gmra.mrb[0].mxu0 %v6023
          %v6216 = vpop.f32.mrb[0].mxu0
          %v6217 = vadd.f32 %v6075, %v6216
          %v6218 = vpop.f32.mrb[0].mxu0
          %6219 = vmatprep.mubr.f32.mxu0 %v6096
          %6220 = vmatmul.mubr.f32.gmra.mrb[0].mxu0 %v6025
          %v6221 = vpop.f32.mrb[0].mxu0
          %v6222 = vadd.f32 %v6075, %v6221
          %v6223 = vpop.f32.mrb[0].mxu0
          %6224 = vmatprep.mubr.f32.mxu0 %v6099
          %6225 = vmatmul.mubr.f32.gmra.mrb[0].mxu0 %v6027
          %v6226 = vpop.f32.mrb[0].mxu0
          %v6227 = vadd.f32 %v6075, %v6226
          %v6228 = vpop.f32.mrb[0].mxu0
          %6229 = vmatprep.mubr.f32.mxu0 %v6102
          %6230 = vmatmul.mubr.f32.gmra.mrb[0].mxu0 %v6029
          %v6231 = vpop.f32.mrb[0].mxu0
          %v6232 = vadd.f32 %v6075, %v6231
          %v6233 = vpop.f32.mrb[0].mxu0
          %6234 = vmatprep.mubr.f32.mxu0 %v6105
          %6235 = vmatmul.mubr.f32.gmra.mrb[0].mxu0 %v6031
          %v6236 = vpop.f32.mrb[0].mxu0
          %v6237 = vadd.f32 %v6075, %v6236
          %v6238 = vpop.f32.mrb[0].mxu0
          %6239 = vmatprep.mubr.f32.mxu0 %v6108
          %6240 = vmatmul.mubr.f32.gmra.mrb[0].mxu0 %v6033
          %v6241 = vpop.f32.mrb[0].mxu0
          %v6242 = vadd.f32 %v6075, %v6241
          %v6243 = vpop.f32.mrb[0].mxu0
          %6244 = vmatprep.mubr.f32.mxu0 %v6111
          %6245 = vmatmul.mubr.f32.gmra.mrb[0].mxu0 %v6035
          %v6246 = vpop.f32.mrb[0].mxu0
          %v6247 = vadd.f32 %v6075, %v6246
          %v6248 = vpop.f32.mrb[0].mxu0
          %6249 = vmatprep.mubr.f32.mxu0 %v6114
          %6250 = vmatmul.mubr.f32.gmra.mrb[0].mxu0 %v6037
          %v6251 = vpop.f32.mrb[0].mxu0
          %v6252 = vadd.f32 %v6075, %v6251
          %v6253 = vpop.f32.mrb[0].mxu0
          %6254 = vmatprep.mubr.f32.mxu0 %v6117
          %6255 = vmatmul.mubr.f32.gmra.mrb[0].mxu0 %v6039
          %v6256 = vpop.f32.mrb[0].mxu0
          %v6257 = vadd.f32 %v6075, %v6256
          %v6258 = vpop.f32.mrb[0].mxu0
          %6259 = vmatprep.mubr.f32.mxu0 %v6120
          %6260 = vmatmul.mubr.f32.gmra.mrb[0].mxu0 %v6041
          %v6261 = vpop.f32.mrb[0].mxu0
          %v6262 = vadd.f32 %v6075, %v6261
          %v6263 = vpop.f32.mrb[0].mxu0
          %6264 = vmatprep.mubr.f32.mxu0 %v6123
          %6265 = vmatmul.mubr.f32.gmra.mrb[0].mxu0 %v6043
          %v6266 = vpop.f32.mrb[0].mxu0
          %v6267 = vadd.f32 %v6075, %v6266
          %v6268 = vpop.f32.mrb[0].mxu0
          %6269 = vdwg.mxu0
          %vm6270 = vcmask 23552
          %v6271 = vsel %vm6270, %v6192, -inf
          %6272 = vmax.xlane.f32.xlu0 %v6271
          %v6273 = vpop.xlane.xlu0 %6272
          %v6274 = vsel %vm6270, %v6197, -inf
          %6275 = vmax.xlane.f32.xlu0 %v6274
          %v6276 = vpop.xlane.xlu0 %6275
          %v6277 = vsel %vm6270, %v6202, -inf
          %6278 = vmax.xlane.f32.xlu0 %v6277
          %v6279 = vpop.xlane.xlu0 %6278
          %v6280 = vsel %vm6270, %v6207, -inf
          %6281 = vmax.xlane.f32.xlu0 %v6280
          %v6282 = vpop.xlane.xlu0 %6281
          %v6283 = vsel %vm6270, %v6212, -inf
          %6284 = vmax.xlane.f32.xlu0 %v6283
          %v6285 = vpop.xlane.xlu0 %6284
          %v6286 = vsel %vm6270, %v6217, -inf
          %6287 = vmax.xlane.f32.xlu0 %v6286
          %v6288 = vpop.xlane.xlu0 %6287
          %v6289 = vsel %vm6270, %v6222, -inf
          %6290 = vmax.xlane.f32.xlu0 %v6289
          %v6291 = vpop.xlane.xlu0 %6290
          %v6292 = vsel %vm6270, %v6227, -inf
          %6293 = vmax.xlane.f32.xlu0 %v6292
          %v6294 = vpop.xlane.xlu0 %6293
          %v6295 = vsel %vm6270, %v6232, -inf
          %6296 = vmax.xlane.f32.xlu0 %v6295
          %v6297 = vpop.xlane.xlu0 %6296
          %v6298 = vsel %vm6270, %v6237, -inf
          %6299 = vmax.xlane.f32.xlu0 %v6298
          %v6300 = vpop.xlane.xlu0 %6299
          %v6301 = vsel %vm6270, %v6242, -inf
          %6302 = vmax.xlane.f32.xlu0 %v6301
          %v6303 = vpop.xlane.xlu0 %6302
          %v6304 = vsel %vm6270, %v6247, -inf
          %6305 = vmax.xlane.f32.xlu0 %v6304
          %v6306 = vpop.xlane.xlu0 %6305
          %v6307 = vsel %vm6270, %v6252, -inf
          %6308 = vmax.xlane.f32.xlu0 %v6307
          %v6309 = vpop.xlane.xlu0 %6308
          %v6310 = vsel %vm6270, %v6257, -inf
          %6311 = vmax.xlane.f32.xlu0 %v6310
          %v6312 = vpop.xlane.xlu0 %6311
          %v6313 = vsel %vm6270, %v6262, -inf
          %6314 = vmax.xlane.f32.xlu0 %v6313
          %v6315 = vpop.xlane.xlu0 %6314
          %v6316 = vsel %vm6270, %v6267, -inf
          %6317 = vmax.xlane.f32.xlu0 %v6316
          %v6318 = vpop.xlane.xlu0 %6317
          %v6319 = vsub.f32 %v6192, %v6273
          %v6320 = vsub.f32 %v6197, %v6276
          %v6321 = vsub.f32 %v6202, %v6279
          %v6322 = vsub.f32 %v6207, %v6282
          %v6323 = vsub.f32 %v6212, %v6285
          %v6324 = vsub.f32 %v6217, %v6288
          %v6325 = vsub.f32 %v6222, %v6291
          %v6326 = vsub.f32 %v6227, %v6294
          %v6327 = vsub.f32 %v6232, %v6297
          %v6328 = vsub.f32 %v6237, %v6300
          %v6329 = vsub.f32 %v6242, %v6303
          %v6330 = vsub.f32 %v6247, %v6306
          %v6331 = vsub.f32 %v6252, %v6309
          %v6332 = vsub.f32 %v6257, %v6312
          %v6333 = vsub.f32 %v6262, %v6315
          %v6334 = vsub.f32 %v6267, %v6318
          %v6335 = vmul.f32 %v6319, 1.442695
          %v6336 = vpow.pop %v6335
          %v6337 = vmul.f32 %v6320, 1.442695
          %v6338 = vpow.pop %v6337
          %v6339 = vmul.f32 %v6321, 1.442695
          %v6340 = vpow.pop %v6339
          %v6341 = vmul.f32 %v6322, 1.442695
          %v6342 = vpow.pop %v6341
          %v6343 = vmul.f32 %v6323, 1.442695
          %v6344 = vpow.pop %v6343
          %v6345 = vmul.f32 %v6324, 1.442695
          %v6346 = vpow.pop %v6345
          %v6347 = vmul.f32 %v6325, 1.442695
          %v6348 = vpow.pop %v6347
          %v6349 = vmul.f32 %v6326, 1.442695
          %v6350 = vpow.pop %v6349
          %v6351 = vmul.f32 %v6327, 1.442695
          %v6352 = vpow.pop %v6351
          %v6353 = vmul.f32 %v6328, 1.442695
          %v6354 = vpow.pop %v6353
          %v6355 = vmul.f32 %v6329, 1.442695
          %v6356 = vpow.pop %v6355
          %v6357 = vmul.f32 %v6330, 1.442695
          %v6358 = vpow.pop %v6357
          %v6359 = vmul.f32 %v6331, 1.442695
          %v6360 = vpow.pop %v6359
          %v6361 = vmul.f32 %v6332, 1.442695
          %v6362 = vpow.pop %v6361
          %v6363 = vmul.f32 %v6333, 1.442695
          %v6364 = vpow.pop %v6363
          %v6365 = vmul.f32 %v6334, 1.442695
          %v6366 = vpow.pop %v6365
          %v6367 = vsel %vm6270, %v6336, 0.0
          %6368 = vadd.xlane.f32.xlu0 %v6367
          %v6369 = vpop.xlane.xlu0 %6368
          %v6370 = vsel %vm6270, %v6338, 0.0
          %6371 = vadd.xlane.f32.xlu0 %v6370
          %v6372 = vpop.xlane.xlu0 %6371
          %v6373 = vsel %vm6270, %v6340, 0.0
          %6374 = vadd.xlane.f32.xlu0 %v6373
          %v6375 = vpop.xlane.xlu0 %6374
          %v6376 = vsel %vm6270, %v6342, 0.0
          %6377 = vadd.xlane.f32.xlu0 %v6376
          %v6378 = vpop.xlane.xlu0 %6377
          %v6379 = vsel %vm6270, %v6344, 0.0
          %6380 = vadd.xlane.f32.xlu0 %v6379
          %v6381 = vpop.xlane.xlu0 %6380
          %v6382 = vsel %vm6270, %v6346, 0.0
          %6383 = vadd.xlane.f32.xlu0 %v6382
          %v6384 = vpop.xlane.xlu0 %6383
          %v6385 = vsel %vm6270, %v6348, 0.0
          %6386 = vadd.xlane.f32.xlu0 %v6385
          %v6387 = vpop.xlane.xlu0 %6386
          %v6388 = vsel %vm6270, %v6350, 0.0
          %6389 = vadd.xlane.f32.xlu0 %v6388
          %v6390 = vpop.xlane.xlu0 %6389
          %v6391 = vsel %vm6270, %v6352, 0.0
          %6392 = vadd.xlane.f32.xlu0 %v6391
          %v6393 = vpop.xlane.xlu0 %6392
          %v6394 = vsel %vm6270, %v6354, 0.0
          %6395 = vadd.xlane.f32.xlu0 %v6394
          %v6396 = vpop.xlane.xlu0 %6395
          %v6397 = vsel %vm6270, %v6356, 0.0
          %6398 = vadd.xlane.f32.xlu0 %v6397
          %v6399 = vpop.xlane.xlu0 %6398
          %v6400 = vsel %vm6270, %v6358, 0.0
          %6401 = vadd.xlane.f32.xlu0 %v6400
          %v6402 = vpop.xlane.xlu0 %6401
          %v6403 = vsel %vm6270, %v6360, 0.0
          %6404 = vadd.xlane.f32.xlu0 %v6403
          %v6405 = vpop.xlane.xlu0 %6404
          %v6406 = vsel %vm6270, %v6362, 0.0
          %6407 = vadd.xlane.f32.xlu0 %v6406
          %v6408 = vpop.xlane.xlu0 %6407
          %v6409 = vsel %vm6270, %v6364, 0.0
          %6410 = vadd.xlane.f32.xlu0 %v6409
          %v6411 = vpop.xlane.xlu0 %6410
          %v6412 = vsel %vm6270, %v6366, 0.0
          %6413 = vadd.xlane.f32.xlu0 %v6412
          %v6414 = vpop.xlane.xlu0 %6413
          %v6415 = vrcp.pop %v6369
          %v6416 = vmul.f32 %v6336, %v6415
          %v6417 = vrcp.pop %v6372
          %v6418 = vmul.f32 %v6338, %v6417
          %v6419 = vrcp.pop %v6375
          %v6420 = vmul.f32 %v6340, %v6419
          %v6421 = vrcp.pop %v6378
          %v6422 = vmul.f32 %v6342, %v6421
          %v6423 = vrcp.pop %v6381
          %v6424 = vmul.f32 %v6344, %v6423
          %v6425 = vrcp.pop %v6384
          %v6426 = vmul.f32 %v6346, %v6425
          %v6427 = vrcp.pop %v6387
          %v6428 = vmul.f32 %v6348, %v6427
          %v6429 = vrcp.pop %v6390
          %v6430 = vmul.f32 %v6350, %v6429
          %v6431 = vrcp.pop %v6393
          %v6432 = vmul.f32 %v6352, %v6431
          %v6433 = vrcp.pop %v6396
          %v6434 = vmul.f32 %v6354, %v6433
          %v6435 = vrcp.pop %v6399
          %v6436 = vmul.f32 %v6356, %v6435
          %v6437 = vrcp.pop %v6402
          %v6438 = vmul.f32 %v6358, %v6437
          %v6439 = vrcp.pop %v6405
          %v6440 = vmul.f32 %v6360, %v6439
          %v6441 = vrcp.pop %v6408
          %v6442 = vmul.f32 %v6362, %v6441
          %v6443 = vrcp.pop %v6411
          %v6444 = vmul.f32 %v6364, %v6443
          %v6445 = vrcp.pop %v6414
          %v6446 = vmul.f32 %v6366, %v6445
          %6447 = vst.msk [vmem:[%s711] sm:$0xff] %vm6270, %v6416
          %6448 = vst.msk [vmem:[%s711 + $0x8] sm:$0xff] %vm6270, %v6418
          %6449 = vst.msk [vmem:[%s711 + $0x10] sm:$0xff] %vm6270, %v6420
          %6450 = vst.msk [vmem:[%s711 + $0x18] sm:$0xff] %vm6270, %v6422
          %6451 = vst.msk [vmem:[%s711 + $0x20] sm:$0xff] %vm6270, %v6424
          %6452 = vst.msk [vmem:[%s711 + $0x28] sm:$0xff] %vm6270, %v6426
          %6453 = vst.msk [vmem:[%s711 + $0x30] sm:$0xff] %vm6270, %v6428
          %6454 = vst.msk [vmem:[%s711 + $0x38] sm:$0xff] %vm6270, %v6430
          %6455 = vst.msk [vmem:[%s711 + $0x40] sm:$0xff] %vm6270, %v6432
          %6456 = vst.msk [vmem:[%s711 + $0x48] sm:$0xff] %vm6270, %v6434
          %6457 = vst.msk [vmem:[%s711 + $0x50] sm:$0xff] %vm6270, %v6436
          %6458 = vst.msk [vmem:[%s711 + $0x58] sm:$0xff] %vm6270, %v6438
          %6459 = vst.msk [vmem:[%s711 + $0x60] sm:$0xff] %vm6270, %v6440
          %6460 = vst.msk [vmem:[%s711 + $0x68] sm:$0xff] %vm6270, %v6442
          %6461 = vst.msk [vmem:[%s711 + $0x70] sm:$0xff] %vm6270, %v6444
          %6462 = vst.msk [vmem:[%s711 + $0x78] sm:$0xff] %vm6270, %v6446
        $region74: #{tpu_custom_call.1} parent=61 // pred_fallthru
          _
        %s6463 = smul.u32 16, %s20
        %p6464 = scmp.lt.s32.totalorder %s6463, 31
        %s6465 = scalar_select %p6464, %s6463, 31
        %s6466 = smul.addr %s6465, 8
        %s6467 = scalar_lea.vmem %s5, %s6466
        // Predicated region
        $region75: #{tpu_custom_call.1} parent=61 // pred_check
          %p6468 = pneg %p163
        $region76: #{tpu_custom_call.1} parent=61 // pred_check_branch
          %6470 = sbr.rel (%p6468) target = $region78
        $region77: #{tpu_custom_call.1} parent=61 // pred_region
          %s6471 = smul.u32 16, %s20
        $region78: #{tpu_custom_call.1} parent=61 // pred_fallthru
          _
      $region62: #{tpu_custom_call.1} parent=5 // pred_fallthru
        _
      %p6472 = scmp.le.s32.totalorder 2, %s11
      // Predicated region
      $region79: #{tpu_custom_call.1} parent=5 // pred_check
        %p6473 = pneg %p6472
      $region80: #{tpu_custom_call.1} parent=5 // pred_check_branch
        %6475 = sbr.rel (%p6473) target = $region82
      $region81: #{tpu_custom_call.1} parent=5 // pred_region
        %s6476 = ssub.s32 %s11, 2
        // Predicated region
        $region83: #{tpu_custom_call.1} parent=81 // pred_check
          %p6477 = pneg %p169
        $region84: #{tpu_custom_call.1} parent=81 // pred_check_branch
          %6479 = sbr.rel (%p6477) target = $region86
        $region85: #{tpu_custom_call.1} parent=81 // pred_region
          %s6480 = smul.u32 16, %s22
          %p6481 = scmp.lt.s32.totalorder %s6480, 31
          %s6482 = scalar_select %p6481, %s6480, 31
          %s6483 = smul.addr %s6482, 8
          %s6484 = scalar_lea.vmem %s5, %s6483
        $region86: #{tpu_custom_call.1} parent=81 // pred_fallthru
          _
      $region82: #{tpu_custom_call.1} parent=5 // pred_fallthru
        _
    $region6: #{tpu_custom_call.1} parent=1 // loop_footer
      %s15 = sadd.s32 1, %s11
    $region7: #{tpu_custom_call.1} parent=1 // loop_footer_branch
      %10 = sbr.rel target = $region3
    $region8: #{tpu_custom_call.1} parent=1 // loop_exit
      _

</llo_original>
